<compile_context>
chip_gen: v5e
topology: v5e:2x2
jax: 0.10.0
libtpu: 0.0.40
codegen_flags: <defaults>
</compile_context>

<pallas_src>
import functools
import math

import jax
import jax.numpy as jnp
from jax.experimental import pallas as pl
from jax.experimental.pallas import tpu as pltpu

# ----------------------------- model configuration -----------------------------
IMG_CHANNELS = 4
IMG_DIM = 16
LATENT_DIM = 32
FILTERS = [8, 16]
KERNEL_SIZES = [3, 3]
STRIDES = [2, 2]
BN_EPS = 1e-5
LEAKY_SLOPE = 0.01  # nn.LeakyReLU default


def build_config():
    """Replicates the padding / dim / output-padding arithmetic of VAE.__init__."""
    n_conv = len(FILTERS)
    paddings = []
    dims = [IMG_DIM]
    for i in range(n_conv):
        if (dims[i] - KERNEL_SIZES[i]) % STRIDES[i] == 0:
            paddings.append((KERNEL_SIZES[i] - 1) // 2)
        else:
            paddings.append((KERNEL_SIZES[i] - STRIDES[i] + 1) // 2)
        dims.append((dims[i] + 2 * paddings[i] - KERNEL_SIZES[i]) // STRIDES[i] + 1)
    flat_dim = FILTERS[-1] * dims[-1] ** 2

    filters_dec = list(reversed(FILTERS[: n_conv - 1])) + [IMG_CHANNELS]
    ks_dec = list(reversed(KERNEL_SIZES))
    strides_dec = list(reversed(STRIDES))
    paddings_dec = list(reversed(paddings))
    dims_dec = list(reversed(dims))
    out_paddings = []
    for i in range(n_conv):
        out_dim = (dims_dec[i] - 1) * strides_dec[i] - 2 * paddings_dec[i] + ks_dec[i]
        out_paddings.append(dims_dec[i + 1] - out_dim)

    return dict(
        enc_paddings=paddings, enc_dims=dims, flat_dim=flat_dim,
        filters_dec=filters_dec, ks_dec=ks_dec, strides_dec=strides_dec,
        paddings_dec=paddings_dec, dims_dec=dims_dec, out_paddings=out_paddings,
        dec_in_channels=FILTERS[-1], dec_in_dim=dims_dec[0],
    )


# ----------------------- conv helpers (setup / reference only) ------------------
def conv2d_nchw(x, w, stride, padding, precision=None):
    """PyTorch-style Conv2d (no bias), NCHW / OIHW."""
    return jax.lax.conv_general_dilated(
        x, w, window_strides=(stride, stride),
        padding=[(padding, padding), (padding, padding)],
        dimension_numbers=("NCHW", "OIHW", "NCHW"), precision=precision)


def conv_transpose2d_nchw(x, w, stride, padding, out_padding, precision=None):
    """PyTorch-style ConvTranspose2d (no bias). w: (C_in, C_out, K, K)."""
    K = w.shape[2]
    w_conv = jnp.flip(w, axis=(2, 3)).transpose(1, 0, 2, 3)  # (C_out, C_in, K, K)
    pad = K - 1 - padding
    return jax.lax.conv_general_dilated(
        x, w_conv, window_strides=(1, 1),
        padding=[(pad, pad + out_padding), (pad, pad + out_padding)],
        lhs_dilation=(stride, stride),
        dimension_numbers=("NCHW", "OIHW", "NCHW"), precision=precision)


def linear_operator_matrix(fn, in_shape):
    """Dense matrix D (F_in, F_out) with flatten(fn(x)) == x_flat @ D.

    Built by pushing the identity basis through the linear map `fn`; each entry of
    D is an exact copy of a conv weight (no rounding)."""
    f_in = int(math.prod(in_shape))
    basis = jnp.eye(f_in, dtype=jnp.float32).reshape((f_in,) + tuple(in_shape))
    out = fn(basis)
    return out.reshape(f_in, -1).astype(jnp.float32)


def _bn2d_aux(gamma, beta, hw):
    """Per-channel gamma/beta broadcast to the flat (C*HW) axis + channel
    pooling / broadcast indicator matrices for in-kernel BN2d statistics."""
    c = gamma.shape[0]
    g_full = jnp.repeat(gamma.astype(jnp.float32), hw).reshape(1, c * hw)
    b_full = jnp.repeat(beta.astype(jnp.float32), hw).reshape(1, c * hw)
    pool = jnp.repeat(jnp.eye(c, dtype=jnp.float32), hw, axis=0)  # (C*HW, C)
    bcast = pool.T                                                # (C, C*HW)
    return g_full, b_full, pool, bcast


# --------------------------------- parameter init --------------------------------
def _xavier_normal(key, shape, fan_in, fan_out):
    std = math.sqrt(2.0 / (fan_in + fan_out))
    return std * jax.random.normal(key, shape, dtype=jnp.float32)


def init_params(key, cfg):
    keys = iter(jax.random.split(key, 64))
    nxt = lambda: next(keys)
    params = {}

    # ---- encoder convs ----
    enc_convs = []
    in_ch = IMG_CHANNELS
    for i, out_ch in enumerate(FILTERS):
        K = KERNEL_SIZES[i]
        w = _xavier_normal(nxt(), (out_ch, in_ch, K, K), in_ch * K * K, out_ch * K * K)
        enc_convs.append(dict(
            w=w,
            b=jnp.zeros((out_ch,), jnp.float32),
            gamma=1.0 + 0.02 * jax.random.normal(nxt(), (out_ch,), dtype=jnp.float32),
            beta=jnp.zeros((out_ch,), jnp.float32),
        ))
        in_ch = out_ch
    params["enc_convs"] = enc_convs

    flat_dim = cfg["flat_dim"]
    params["w_mean"] = _xavier_normal(nxt(), (LATENT_DIM, flat_dim), flat_dim, LATENT_DIM)
    params["b_mean"] = jnp.zeros((LATENT_DIM,), jnp.float32)
    params["w_logvar"] = _xavier_normal(nxt(), (LATENT_DIM, flat_dim), flat_dim, LATENT_DIM)
    params["b_logvar"] = jnp.zeros((LATENT_DIM,), jnp.float32)

    # ---- decoder input block ----
    dec_flat = cfg["dec_in_channels"] * cfg["dec_in_dim"] ** 2
    params["w_fc"] = _xavier_normal(nxt(), (dec_flat, LATENT_DIM), LATENT_DIM, dec_flat)
    params["b_fc"] = jnp.zeros((dec_flat,), jnp.float32)
    params["gamma_fc"] = 1.0 + 0.02 * jax.random.normal(nxt(), (dec_flat,), dtype=jnp.float32)
    params["beta_fc"] = jnp.zeros((dec_flat,), jnp.float32)

    # ---- decoder transposed convs ----
    dec_convs = []
    in_ch = cfg["dec_in_channels"]
    for i, out_ch in enumerate(cfg["filters_dec"]):
        K = cfg["ks_dec"][i]
        w = _xavier_normal(nxt(), (in_ch, out_ch, K, K), out_ch * K * K, in_ch * K * K)
        dec_convs.append(dict(
            w=w,
            b=jnp.zeros((out_ch,), jnp.float32),
            gamma=1.0 + 0.02 * jax.random.normal(nxt(), (out_ch,), dtype=jnp.float32),
            beta=jnp.zeros((out_ch,), jnp.float32),
        ))
        in_ch = out_ch
    params["dec_convs"] = dec_convs
    return params


# ------------------------ one-time repack into dense operators --------------------
def prepare_dense(params, cfg):
    """Repack PyTorch-style params into VMEM-friendly dense operators (done once)."""
    P = jax.lax.Precision.HIGHEST
    dims = cfg["enc_dims"]            # e.g. [16, 8, 4]
    dims_dec = cfg["dims_dec"]        # e.g. [4, 8, 16]
    d = {}

    # encoder conv 1 (+ BN2d)   -- conv bias dropped (cancelled by BN)
    w = params["enc_convs"][0]["w"]
    d["w1"] = linear_operator_matrix(
        lambda x: conv2d_nchw(x, w, STRIDES[0], cfg["enc_paddings"][0], precision=P),
        (IMG_CHANNELS, dims[0], dims[0]))
    d["g1"], d["b1"], d["p1"], d["q1"] = _bn2d_aux(
        params["enc_convs"][0]["gamma"], params["enc_convs"][0]["beta"], dims[1] ** 2)

    # encoder conv 2 (+ BN2d)
    w = params["enc_convs"][1]["w"]
    d["w2"] = linear_operator_matrix(
        lambda x: conv2d_nchw(x, w, STRIDES[1], cfg["enc_paddings"][1], precision=P),
        (FILTERS[0], dims[1], dims[1]))
    d["g2"], d["b2"], d["p2"], d["q2"] = _bn2d_aux(
        params["enc_convs"][1]["gamma"], params["enc_convs"][1]["beta"], dims[2] ** 2)

    # latent heads
    d["wm"] = params["w_mean"].T.astype(jnp.float32)
    d["bm"] = params["b_mean"].reshape(1, -1).astype(jnp.float32)
    d["wl"] = params["w_logvar"].T.astype(jnp.float32)
    d["bl"] = params["b_logvar"].reshape(1, -1).astype(jnp.float32)

    # decoder FC (+ BN1d)       -- FC bias dropped (cancelled by BN)
    d["wfc"] = params["w_fc"].T.astype(jnp.float32)
    d["gfc"] = params["gamma_fc"].reshape(1, -1).astype(jnp.float32)
    d["bfc"] = params["beta_fc"].reshape(1, -1).astype(jnp.float32)

    # decoder deconv 1 (+ BN2d) -- bias dropped (cancelled by BN)
    w = params["dec_convs"][0]["w"]
    d["wd1"] = linear_operator_matrix(
        lambda x: conv_transpose2d_nchw(x, w, cfg["strides_dec"][0], cfg["paddings_dec"][0],
                                        cfg["out_paddings"][0], precision=P),
        (cfg["dec_in_channels"], cfg["dec_in_dim"], cfg["dec_in_dim"]))
    d["gd1"], d["bd1"], d["pd1"], d["qd1"] = _bn2d_aux(
        params["dec_convs"][0]["gamma"], params["dec_convs"][0]["beta"], dims_dec[1] ** 2)

    # decoder deconv 2 (+ bias + Tanh)
    w = params["dec_convs"][1]["w"]
    d["wd2"] = linear_operator_matrix(
        lambda x: conv_transpose2d_nchw(x, w, cfg["strides_dec"][1], cfg["paddings_dec"][1],
                                        cfg["out_paddings"][1], precision=P),
        (cfg["filters_dec"][0], dims_dec[1], dims_dec[1]))
    d["bd2"] = jnp.repeat(params["dec_convs"][1]["b"].astype(jnp.float32),
                          dims_dec[2] ** 2).reshape(1, -1)
    return d


DENSE_ORDER = [
    "w1", "g1", "b1", "p1", "q1",
    "w2", "g2", "b2", "p2", "q2",
    "wm", "bm", "wl", "bl",
    "wfc", "gfc", "bfc",
    "wd1", "gd1", "bd1", "pd1", "qd1",
    "wd2", "bd2",
]


# --------------------------------- the Pallas kernel ------------------------------
def _vae_kernel(x_ref, noise_ref,
                w1_ref, g1_ref, b1_ref, p1_ref, q1_ref,
                w2_ref, g2_ref, b2_ref, p2_ref, q2_ref,
                wm_ref, bm_ref, wl_ref, bl_ref,
                wfc_ref, gfc_ref, bfc_ref,
                wd1_ref, gd1_ref, bd1_ref, pd1_ref, qd1_ref,
                wd2_ref, bd2_ref,
                xrec_ref, zmean_ref, zlogvar_ref,
                *, bn_eps, slope, hw1, hw2, hwd1):
    f32 = jnp.float32

    def mm(a, b_ref):
        return jnp.dot(a, b_ref[...], preferred_element_type=f32)

    def leaky(y):
        return jnp.where(y >= 0, y, slope * y)

    def bn2d(y, p_ref, q_ref, g_ref, b_ref, hw):
        # Training-mode BatchNorm2d on a (B, C*HW) slab: per-channel stats over
        # (B, H, W) via tiny channel-indicator matmuls (no in-kernel reshapes).
        n = y.shape[0] * hw
        mu_c = mm(jnp.sum(y, axis=0, keepdims=True), p_ref) * (1.0 / n)   # (1, C)
        mu = mm(mu_c, q_ref)                                              # (1, C*HW)
        d = y - mu
        var_c = mm(jnp.sum(d * d, axis=0, keepdims=True), p_ref) * (1.0 / n)
        var = mm(var_c, q_ref)
        return d * jax.lax.rsqrt(var + bn_eps) * g_ref[...] + b_ref[...]

    def bn1d(y, g_ref, b_ref):
        mu = jnp.mean(y, axis=0, keepdims=True)
        d = y - mu
        var = jnp.mean(d * d, axis=0, keepdims=True)
        return d * jax.lax.rsqrt(var + bn_eps) * g_ref[...] + b_ref[...]

    # ---------------- encoder ----------------
    h = leaky(bn2d(mm(x_ref[...], w1_ref), p1_ref, q1_ref, g1_ref, b1_ref, hw1))
    h = leaky(bn2d(mm(h, w2_ref), p2_ref, q2_ref, g2_ref, b2_ref, hw2))

    # ------- latent heads + reparameterization -------
    zm = mm(h, wm_ref) + bm_ref[...]
    zl = mm(h, wl_ref) + bl_ref[...]
    zmean_ref[...] = zm
    zlogvar_ref[...] = zl
    z = zm + jnp.exp(0.5 * zl) * noise_ref[...]

    # ---------------- decoder ----------------
    h = leaky(bn1d(mm(z, wfc_ref), gfc_ref, bfc_ref))
    h = leaky(bn2d(mm(h, wd1_ref), pd1_ref, qd1_ref, gd1_ref, bd1_ref, hwd1))
    xrec_ref[...] = jnp.tanh(mm(h, wd2_ref) + bd2_ref[...])


# ------------------------------------ forward --------------------------------------
def make_vae_forward(cfg):
    hw1 = cfg["enc_dims"][1] ** 2
    hw2 = cfg["enc_dims"][2] ** 2
    hwd1 = cfg["dims_dec"][1] ** 2
    f_img = IMG_CHANNELS * IMG_DIM * IMG_DIM
    kern = functools.partial(_vae_kernel, bn_eps=BN_EPS, slope=LEAKY_SLOPE,
                             hw1=hw1, hw2=hw2, hwd1=hwd1)

    @jax.jit
    def forward(dense, x_nchw, noise):
        bsz = x_nchw.shape[0]
        # PyTorch flatten order (C, H, W) -- the dense operators are defined in it.
        x_flat = x_nchw.reshape(bsz, f_img).astype(jnp.float32)
        xrec_flat, z_mean, z_logvar = pl.pallas_call(
            kern,
            out_shape=(
                jax.ShapeDtypeStruct((bsz, f_img), jnp.float32),
                jax.ShapeDtypeStruct((bsz, LATENT_DIM), jnp.float32),
                jax.ShapeDtypeStruct((bsz, LATENT_DIM), jnp.float32),
            ),
            compiler_params=pltpu.CompilerParams(
                vmem_limit_bytes=32 * 1024 * 1024),
        )(x_flat, noise.astype(jnp.float32), *[dense[k] for k in DENSE_ORDER])
        xrec = xrec_flat.reshape(bsz, IMG_CHANNELS, IMG_DIM, IMG_DIM)
        return xrec, z_mean, z_logvar

    return forward


# ------------------------- pure-JAX reference (for validation) ---------------------
def vae_reference(params, cfg, x, noise):
    P = jax.lax.Precision.HIGHEST

    def bn(y, gamma, beta, axes):
        mu = jnp.mean(y, axis=axes, keepdims=True)
        var = jnp.mean((y - mu) ** 2, axis=axes, keepdims=True)
        shp = [1] * y.ndim
        shp[1] = -1
        return (y - mu) * jax.lax.rsqrt(var + BN_EPS) * gamma.reshape(shp) + beta.reshape(shp)

    def leaky(y):
        return jnp.where(y >= 0, y, LEAKY_SLOPE * y)

    h = x
    for i, layer in enumerate(params["enc_convs"]):
        h = conv2d_nchw(h, layer["w"], STRIDES[i], cfg["enc_paddings"][i], precision=P)
        h = h + layer["b"].reshape(1, -1, 1, 1)
        h = leaky(bn(h, layer["gamma"], layer["beta"], (0, 2, 3)))
    flat = h.reshape(h.shape[0], -1)
    zm = jnp.dot(flat, params["w_mean"].T, precision=P) + params["b_mean"]
    zl = jnp.dot(flat, params["w_logvar"].T, precision=P) + params["b_logvar"]
    z = zm + jnp.exp(0.5 * zl) * noise
    h = jnp.dot(z, params["w_fc"].T, precision=P) + params["b_fc"]
    h = leaky(bn(h, params["gamma_fc"], params["beta_fc"], (0,)))
    h = h.reshape(-1, cfg["dec_in_channels"], cfg["dec_in_dim"], cfg["dec_in_dim"])
    n_dec = len(params["dec_convs"])
    for i, layer in enumerate(params["dec_convs"]):
        h = conv_transpose2d_nchw(h, layer["w"], cfg["strides_dec"][i],
                                  cfg["paddings_dec"][i], cfg["out_paddings"][i], precision=P)
        h = h + layer["b"].reshape(1, -1, 1, 1)
        if i < n_dec - 1:
            h = leaky(bn(h, layer["gamma"], layer["beta"], (0, 2, 3)))
        else:
            h = jnp.tanh(h)
    return h, zm, zl


# ------------------------------------- main ---------------------------------------
if __name__ == "__main__":
    cfg = build_config()
    key = jax.random.PRNGKey(0)
    k_params, k_x, k_eps = jax.random.split(key, 3)

    params = init_params(k_params, cfg)
    x = jax.random.normal(k_x, (2, IMG_CHANNELS, IMG_DIM, IMG_DIM), dtype=jnp.float32)
    # TODO(synk): torch.randn_like noise is generated host-side with jax.random and
    # passed into the fused kernel (not drawn with the in-kernel PRNG).
    noise = jax.random.normal(k_eps, (2, LATENT_DIM), dtype=jnp.float32)

    dense = prepare_dense(params, cfg)        # one-time param repack (outside jit)
    vae_forward = make_vae_forward(cfg)
    xrec, z_mean, z_logvar = vae_forward(dense, x, noise)
    jax.block_until_ready((xrec, z_mean, z_logvar))

    assert xrec.shape == x.shape, (xrec.shape, x.shape)
    assert z_mean.shape == (2, LATENT_DIM) and z_logvar.shape == (2, LATENT_DIM)
    assert bool(jnp.all(jnp.isfinite(xrec)))

    # numerical check against a pure-JAX re-implementation of the PyTorch forward
    xrec_ref, zm_ref, zl_ref = vae_reference(params, cfg, x, noise)
    for got, ref in ((xrec, xrec_ref), (z_mean, zm_ref), (z_logvar, zl_ref)):
        err = float(jnp.max(jnp.abs(got - ref)))
        assert err < 1e-2, f"mismatch vs reference: max abs err = {err}"

    print("KERNEL_OK")
</pallas_src>

<mosaic_0001>
module attributes {stable_mosaic.version = 11 : i64} {
  func.func @_vae_kernel(%arg0: memref<2x1024xf32, #tpu.memory_space<vmem>>, %arg1: memref<2x32xf32, #tpu.memory_space<vmem>>, %arg2: memref<1024x512xf32, #tpu.memory_space<vmem>>, %arg3: memref<1x512xf32, #tpu.memory_space<vmem>>, %arg4: memref<1x512xf32, #tpu.memory_space<vmem>>, %arg5: memref<512x8xf32, #tpu.memory_space<vmem>>, %arg6: memref<8x512xf32, #tpu.memory_space<vmem>>, %arg7: memref<512x256xf32, #tpu.memory_space<vmem>>, %arg8: memref<1x256xf32, #tpu.memory_space<vmem>>, %arg9: memref<1x256xf32, #tpu.memory_space<vmem>>, %arg10: memref<256x16xf32, #tpu.memory_space<vmem>>, %arg11: memref<16x256xf32, #tpu.memory_space<vmem>>, %arg12: memref<256x32xf32, #tpu.memory_space<vmem>>, %arg13: memref<1x32xf32, #tpu.memory_space<vmem>>, %arg14: memref<256x32xf32, #tpu.memory_space<vmem>>, %arg15: memref<1x32xf32, #tpu.memory_space<vmem>>, %arg16: memref<32x256xf32, #tpu.memory_space<vmem>>, %arg17: memref<1x256xf32, #tpu.memory_space<vmem>>, %arg18: memref<1x256xf32, #tpu.memory_space<vmem>>, %arg19: memref<256x512xf32, #tpu.memory_space<vmem>>, %arg20: memref<1x512xf32, #tpu.memory_space<vmem>>, %arg21: memref<1x512xf32, #tpu.memory_space<vmem>>, %arg22: memref<512x8xf32, #tpu.memory_space<vmem>>, %arg23: memref<8x512xf32, #tpu.memory_space<vmem>>, %arg24: memref<512x1024xf32, #tpu.memory_space<vmem>>, %arg25: memref<1x1024xf32, #tpu.memory_space<vmem>>, %arg26: memref<2x1024xf32, #tpu.memory_space<vmem>>, %arg27: memref<2x32xf32, #tpu.memory_space<vmem>>, %arg28: memref<2x32xf32, #tpu.memory_space<vmem>>) attributes {dimension_semantics = [], scalar_prefetch = 0 : i64, scratch_operands = 0 : i64, tpu.core_type = #tpu.core_type<tc>} {
    %c0 = arith.constant 0 : index
    %c0_0 = arith.constant 0 : index
    %0 = vector.load %arg0[%c0, %c0_0] : memref<2x1024xf32, #tpu.memory_space<vmem>>, vector<2x1024xf32>
    %c0_1 = arith.constant 0 : index
    %c0_2 = arith.constant 0 : index
    %1 = vector.load %arg2[%c0_1, %c0_2] : memref<1024x512xf32, #tpu.memory_space<vmem>>, vector<1024x512xf32>
    %cst = arith.constant dense<0.000000e+00> : vector<2x512xf32>
    %2 = tpu.matmul %0, %1, %cst {dimension_numbers = #tpu.dot_dimension_numbers<[1], [0], [0], [1], [0, 0, 1, 1], [], []>} : vector<2x1024xf32>, vector<1024x512xf32>, vector<2x512xf32> -> vector<2x512xf32>
    %cst_3 = arith.constant dense<0.000000e+00> : vector<512xf32>
    %3 = vector.multi_reduction <add>, %2, %cst_3 [0] : vector<2x512xf32> to vector<512xf32>
    %4 = vector.shape_cast %3 : vector<512xf32> to vector<1x512xf32>
    %c0_4 = arith.constant 0 : index
    %c0_5 = arith.constant 0 : index
    %5 = vector.load %arg5[%c0_4, %c0_5] : memref<512x8xf32, #tpu.memory_space<vmem>>, vector<512x8xf32>
    %cst_6 = arith.constant dense<0.000000e+00> : vector<1x8xf32>
    %6 = tpu.matmul %4, %5, %cst_6 {dimension_numbers = #tpu.dot_dimension_numbers<[1], [0], [0], [1], [0, 0, 1, 1], [], []>} : vector<1x512xf32>, vector<512x8xf32>, vector<1x8xf32> -> vector<1x8xf32>
    %cst_7 = arith.constant 7.812500e-03 : f32
    %7 = vector.broadcast %cst_7 : f32 to vector<1x8xf32>
    %8 = arith.mulf %6, %7 : vector<1x8xf32>
    %c0_8 = arith.constant 0 : index
    %c0_9 = arith.constant 0 : index
    %9 = vector.load %arg6[%c0_8, %c0_9] : memref<8x512xf32, #tpu.memory_space<vmem>>, vector<8x512xf32>
    %cst_10 = arith.constant dense<0.000000e+00> : vector<1x512xf32>
    %10 = tpu.matmul %8, %9, %cst_10 {dimension_numbers = #tpu.dot_dimension_numbers<[1], [0], [0], [1], [0, 0, 1, 1], [], []>} : vector<1x8xf32>, vector<8x512xf32>, vector<1x512xf32> -> vector<1x512xf32>
    %11 = vector.broadcast %10 : vector<1x512xf32> to vector<2x512xf32>
    %12 = arith.subf %2, %11 : vector<2x512xf32>
    %13 = arith.mulf %12, %12 : vector<2x512xf32>
    %cst_11 = arith.constant dense<0.000000e+00> : vector<512xf32>
    %14 = vector.multi_reduction <add>, %13, %cst_11 [0] : vector<2x512xf32> to vector<512xf32>
    %15 = vector.shape_cast %14 : vector<512xf32> to vector<1x512xf32>
    %c0_12 = arith.constant 0 : index
    %c0_13 = arith.constant 0 : index
    %16 = vector.load %arg5[%c0_12, %c0_13] : memref<512x8xf32, #tpu.memory_space<vmem>>, vector<512x8xf32>
    %cst_14 = arith.constant dense<0.000000e+00> : vector<1x8xf32>
    %17 = tpu.matmul %15, %16, %cst_14 {dimension_numbers = #tpu.dot_dimension_numbers<[1], [0], [0], [1], [0, 0, 1, 1], [], []>} : vector<1x512xf32>, vector<512x8xf32>, vector<1x8xf32> -> vector<1x8xf32>
    %cst_15 = arith.constant 7.812500e-03 : f32
    %18 = vector.broadcast %cst_15 : f32 to vector<1x8xf32>
    %19 = arith.mulf %17, %18 : vector<1x8xf32>
    %c0_16 = arith.constant 0 : index
    %c0_17 = arith.constant 0 : index
    %20 = vector.load %arg6[%c0_16, %c0_17] : memref<8x512xf32, #tpu.memory_space<vmem>>, vector<8x512xf32>
    %cst_18 = arith.constant dense<0.000000e+00> : vector<1x512xf32>
    %21 = tpu.matmul %19, %20, %cst_18 {dimension_numbers = #tpu.dot_dimension_numbers<[1], [0], [0], [1], [0, 0, 1, 1], [], []>} : vector<1x8xf32>, vector<8x512xf32>, vector<1x512xf32> -> vector<1x512xf32>
    %cst_19 = arith.constant 9.99999974E-6 : f32
    %22 = vector.broadcast %cst_19 : f32 to vector<1x512xf32>
    %23 = arith.addf %21, %22 : vector<1x512xf32>
    %24 = math.rsqrt %23 : vector<1x512xf32>
    %25 = vector.broadcast %24 : vector<1x512xf32> to vector<2x512xf32>
    %26 = arith.mulf %12, %25 : vector<2x512xf32>
    %c0_20 = arith.constant 0 : index
    %c0_21 = arith.constant 0 : index
    %27 = vector.load %arg3[%c0_20, %c0_21] : memref<1x512xf32, #tpu.memory_space<vmem>>, vector<1x512xf32>
    %28 = vector.broadcast %27 : vector<1x512xf32> to vector<2x512xf32>
    %29 = arith.mulf %26, %28 : vector<2x512xf32>
    %c0_22 = arith.constant 0 : index
    %c0_23 = arith.constant 0 : index
    %30 = vector.load %arg4[%c0_22, %c0_23] : memref<1x512xf32, #tpu.memory_space<vmem>>, vector<1x512xf32>
    %31 = vector.broadcast %30 : vector<1x512xf32> to vector<2x512xf32>
    %32 = arith.addf %29, %31 : vector<2x512xf32>
    %cst_24 = arith.constant 0.000000e+00 : f32
    %33 = vector.broadcast %cst_24 : f32 to vector<2x512xf32>
    %34 = arith.cmpf oge, %32, %33 : vector<2x512xf32>
    %cst_25 = arith.constant 0.00999999977 : f32
    %35 = vector.broadcast %cst_25 : f32 to vector<2x512xf32>
    %36 = arith.mulf %35, %32 : vector<2x512xf32>
    %37 = arith.select %34, %32, %36 : vector<2x512xi1>, vector<2x512xf32>
    %c0_26 = arith.constant 0 : index
    %c0_27 = arith.constant 0 : index
    %38 = vector.load %arg7[%c0_26, %c0_27] : memref<512x256xf32, #tpu.memory_space<vmem>>, vector<512x256xf32>
    %cst_28 = arith.constant dense<0.000000e+00> : vector<2x256xf32>
    %39 = tpu.matmul %37, %38, %cst_28 {dimension_numbers = #tpu.dot_dimension_numbers<[1], [0], [0], [1], [0, 0, 1, 1], [], []>} : vector<2x512xf32>, vector<512x256xf32>, vector<2x256xf32> -> vector<2x256xf32>
    %cst_29 = arith.constant dense<0.000000e+00> : vector<256xf32>
    %40 = vector.multi_reduction <add>, %39, %cst_29 [0] : vector<2x256xf32> to vector<256xf32>
    %41 = vector.shape_cast %40 : vector<256xf32> to vector<1x256xf32>
    %c0_30 = arith.constant 0 : index
    %c0_31 = arith.constant 0 : index
    %42 = vector.load %arg10[%c0_30, %c0_31] : memref<256x16xf32, #tpu.memory_space<vmem>>, vector<256x16xf32>
    %cst_32 = arith.constant dense<0.000000e+00> : vector<1x16xf32>
    %43 = tpu.matmul %41, %42, %cst_32 {dimension_numbers = #tpu.dot_dimension_numbers<[1], [0], [0], [1], [0, 0, 1, 1], [], []>} : vector<1x256xf32>, vector<256x16xf32>, vector<1x16xf32> -> vector<1x16xf32>
    %cst_33 = arith.constant 3.125000e-02 : f32
    %44 = vector.broadcast %cst_33 : f32 to vector<1x16xf32>
    %45 = arith.mulf %43, %44 : vector<1x16xf32>
    %c0_34 = arith.constant 0 : index
    %c0_35 = arith.constant 0 : index
    %46 = vector.load %arg11[%c0_34, %c0_35] : memref<16x256xf32, #tpu.memory_space<vmem>>, vector<16x256xf32>
    %cst_36 = arith.constant dense<0.000000e+00> : vector<1x256xf32>
    %47 = tpu.matmul %45, %46, %cst_36 {dimension_numbers = #tpu.dot_dimension_numbers<[1], [0], [0], [1], [0, 0, 1, 1], [], []>} : vector<1x16xf32>, vector<16x256xf32>, vector<1x256xf32> -> vector<1x256xf32>
    %48 = vector.broadcast %47 : vector<1x256xf32> to vector<2x256xf32>
    %49 = arith.subf %39, %48 : vector<2x256xf32>
    %50 = arith.mulf %49, %49 : vector<2x256xf32>
    %cst_37 = arith.constant dense<0.000000e+00> : vector<256xf32>
    %51 = vector.multi_reduction <add>, %50, %cst_37 [0] : vector<2x256xf32> to vector<256xf32>
    %52 = vector.shape_cast %51 : vector<256xf32> to vector<1x256xf32>
    %c0_38 = arith.constant 0 : index
    %c0_39 = arith.constant 0 : index
    %53 = vector.load %arg10[%c0_38, %c0_39] : memref<256x16xf32, #tpu.memory_space<vmem>>, vector<256x16xf32>
    %cst_40 = arith.constant dense<0.000000e+00> : vector<1x16xf32>
    %54 = tpu.matmul %52, %53, %cst_40 {dimension_numbers = #tpu.dot_dimension_numbers<[1], [0], [0], [1], [0, 0, 1, 1], [], []>} : vector<1x256xf32>, vector<256x16xf32>, vector<1x16xf32> -> vector<1x16xf32>
    %cst_41 = arith.constant 3.125000e-02 : f32
    %55 = vector.broadcast %cst_41 : f32 to vector<1x16xf32>
    %56 = arith.mulf %54, %55 : vector<1x16xf32>
    %c0_42 = arith.constant 0 : index
    %c0_43 = arith.constant 0 : index
    %57 = vector.load %arg11[%c0_42, %c0_43] : memref<16x256xf32, #tpu.memory_space<vmem>>, vector<16x256xf32>
    %cst_44 = arith.constant dense<0.000000e+00> : vector<1x256xf32>
    %58 = tpu.matmul %56, %57, %cst_44 {dimension_numbers = #tpu.dot_dimension_numbers<[1], [0], [0], [1], [0, 0, 1, 1], [], []>} : vector<1x16xf32>, vector<16x256xf32>, vector<1x256xf32> -> vector<1x256xf32>
    %cst_45 = arith.constant 9.99999974E-6 : f32
    %59 = vector.broadcast %cst_45 : f32 to vector<1x256xf32>
    %60 = arith.addf %58, %59 : vector<1x256xf32>
    %61 = math.rsqrt %60 : vector<1x256xf32>
    %62 = vector.broadcast %61 : vector<1x256xf32> to vector<2x256xf32>
    %63 = arith.mulf %49, %62 : vector<2x256xf32>
    %c0_46 = arith.constant 0 : index
    %c0_47 = arith.constant 0 : index
    %64 = vector.load %arg8[%c0_46, %c0_47] : memref<1x256xf32, #tpu.memory_space<vmem>>, vector<1x256xf32>
    %65 = vector.broadcast %64 : vector<1x256xf32> to vector<2x256xf32>
    %66 = arith.mulf %63, %65 : vector<2x256xf32>
    %c0_48 = arith.constant 0 : index
    %c0_49 = arith.constant 0 : index
    %67 = vector.load %arg9[%c0_48, %c0_49] : memref<1x256xf32, #tpu.memory_space<vmem>>, vector<1x256xf32>
    %68 = vector.broadcast %67 : vector<1x256xf32> to vector<2x256xf32>
    %69 = arith.addf %66, %68 : vector<2x256xf32>
    %cst_50 = arith.constant 0.000000e+00 : f32
    %70 = vector.broadcast %cst_50 : f32 to vector<2x256xf32>
    %71 = arith.cmpf oge, %69, %70 : vector<2x256xf32>
    %cst_51 = arith.constant 0.00999999977 : f32
    %72 = vector.broadcast %cst_51 : f32 to vector<2x256xf32>
    %73 = arith.mulf %72, %69 : vector<2x256xf32>
    %74 = arith.select %71, %69, %73 : vector<2x256xi1>, vector<2x256xf32>
    %c0_52 = arith.constant 0 : index
    %c0_53 = arith.constant 0 : index
    %75 = vector.load %arg12[%c0_52, %c0_53] : memref<256x32xf32, #tpu.memory_space<vmem>>, vector<256x32xf32>
    %cst_54 = arith.constant dense<0.000000e+00> : vector<2x32xf32>
    %76 = tpu.matmul %74, %75, %cst_54 {dimension_numbers = #tpu.dot_dimension_numbers<[1], [0], [0], [1], [0, 0, 1, 1], [], []>} : vector<2x256xf32>, vector<256x32xf32>, vector<2x32xf32> -> vector<2x32xf32>
    %c0_55 = arith.constant 0 : index
    %c0_56 = arith.constant 0 : index
    %77 = vector.load %arg13[%c0_55, %c0_56] : memref<1x32xf32, #tpu.memory_space<vmem>>, vector<1x32xf32>
    %78 = vector.broadcast %77 : vector<1x32xf32> to vector<2x32xf32>
    %79 = arith.addf %76, %78 : vector<2x32xf32>
    %c0_57 = arith.constant 0 : index
    %c0_58 = arith.constant 0 : index
    %80 = vector.load %arg14[%c0_57, %c0_58] : memref<256x32xf32, #tpu.memory_space<vmem>>, vector<256x32xf32>
    %cst_59 = arith.constant dense<0.000000e+00> : vector<2x32xf32>
    %81 = tpu.matmul %74, %80, %cst_59 {dimension_numbers = #tpu.dot_dimension_numbers<[1], [0], [0], [1], [0, 0, 1, 1], [], []>} : vector<2x256xf32>, vector<256x32xf32>, vector<2x32xf32> -> vector<2x32xf32>
    %c0_60 = arith.constant 0 : index
    %c0_61 = arith.constant 0 : index
    %82 = vector.load %arg15[%c0_60, %c0_61] : memref<1x32xf32, #tpu.memory_space<vmem>>, vector<1x32xf32>
    %83 = vector.broadcast %82 : vector<1x32xf32> to vector<2x32xf32>
    %84 = arith.addf %81, %83 : vector<2x32xf32>
    %c0_62 = arith.constant 0 : index
    %c0_63 = arith.constant 0 : index
    %85 = vector.load %arg27[%c0_62, %c0_63] : memref<2x32xf32, #tpu.memory_space<vmem>>, vector<2x32xf32>
    tpu.vector_store %arg27[%c0_62, %c0_63], %79 {strides = array<i32>} : memref<2x32xf32, #tpu.memory_space<vmem>>, vector<2x32xf32>,
    %c0_64 = arith.constant 0 : index
    %c0_65 = arith.constant 0 : index
    %86 = vector.load %arg28[%c0_64, %c0_65] : memref<2x32xf32, #tpu.memory_space<vmem>>, vector<2x32xf32>
    tpu.vector_store %arg28[%c0_64, %c0_65], %84 {strides = array<i32>} : memref<2x32xf32, #tpu.memory_space<vmem>>, vector<2x32xf32>,
    %cst_66 = arith.constant 5.000000e-01 : f32
    %87 = vector.broadcast %cst_66 : f32 to vector<2x32xf32>
    %88 = arith.mulf %87, %84 : vector<2x32xf32>
    %89 = math.exp %88 : vector<2x32xf32>
    %c0_67 = arith.constant 0 : index
    %c0_68 = arith.constant 0 : index
    %90 = vector.load %arg1[%c0_67, %c0_68] : memref<2x32xf32, #tpu.memory_space<vmem>>, vector<2x32xf32>
    %91 = arith.mulf %89, %90 : vector<2x32xf32>
    %92 = arith.addf %79, %91 : vector<2x32xf32>
    %c0_69 = arith.constant 0 : index
    %c0_70 = arith.constant 0 : index
    %93 = vector.load %arg16[%c0_69, %c0_70] : memref<32x256xf32, #tpu.memory_space<vmem>>, vector<32x256xf32>
    %cst_71 = arith.constant dense<0.000000e+00> : vector<2x256xf32>
    %94 = tpu.matmul %92, %93, %cst_71 {dimension_numbers = #tpu.dot_dimension_numbers<[1], [0], [0], [1], [0, 0, 1, 1], [], []>} : vector<2x32xf32>, vector<32x256xf32>, vector<2x256xf32> -> vector<2x256xf32>
    %cst_72 = arith.constant dense<0.000000e+00> : vector<256xf32>
    %95 = vector.multi_reduction <add>, %94, %cst_72 [0] : vector<2x256xf32> to vector<256xf32>
    %96 = vector.shape_cast %95 : vector<256xf32> to vector<1x256xf32>
    %cst_73 = arith.constant 2.000000e+00 : f32
    %97 = vector.broadcast %cst_73 : f32 to vector<1x256xf32>
    %98 = arith.divf %96, %97 : vector<1x256xf32>
    %99 = vector.broadcast %98 : vector<1x256xf32> to vector<2x256xf32>
    %100 = arith.subf %94, %99 : vector<2x256xf32>
    %101 = arith.mulf %100, %100 : vector<2x256xf32>
    %cst_74 = arith.constant dense<0.000000e+00> : vector<256xf32>
    %102 = vector.multi_reduction <add>, %101, %cst_74 [0] : vector<2x256xf32> to vector<256xf32>
    %103 = vector.shape_cast %102 : vector<256xf32> to vector<1x256xf32>
    %cst_75 = arith.constant 2.000000e+00 : f32
    %104 = vector.broadcast %cst_75 : f32 to vector<1x256xf32>
    %105 = arith.divf %103, %104 : vector<1x256xf32>
    %cst_76 = arith.constant 9.99999974E-6 : f32
    %106 = vector.broadcast %cst_76 : f32 to vector<1x256xf32>
    %107 = arith.addf %105, %106 : vector<1x256xf32>
    %108 = math.rsqrt %107 : vector<1x256xf32>
    %109 = vector.broadcast %108 : vector<1x256xf32> to vector<2x256xf32>
    %110 = arith.mulf %100, %109 : vector<2x256xf32>
    %c0_77 = arith.constant 0 : index
    %c0_78 = arith.constant 0 : index
    %111 = vector.load %arg17[%c0_77, %c0_78] : memref<1x256xf32, #tpu.memory_space<vmem>>, vector<1x256xf32>
    %112 = vector.broadcast %111 : vector<1x256xf32> to vector<2x256xf32>
    %113 = arith.mulf %110, %112 : vector<2x256xf32>
    %c0_79 = arith.constant 0 : index
    %c0_80 = arith.constant 0 : index
    %114 = vector.load %arg18[%c0_79, %c0_80] : memref<1x256xf32, #tpu.memory_space<vmem>>, vector<1x256xf32>
    %115 = vector.broadcast %114 : vector<1x256xf32> to vector<2x256xf32>
    %116 = arith.addf %113, %115 : vector<2x256xf32>
    %cst_81 = arith.constant 0.000000e+00 : f32
    %117 = vector.broadcast %cst_81 : f32 to vector<2x256xf32>
    %118 = arith.cmpf oge, %116, %117 : vector<2x256xf32>
    %cst_82 = arith.constant 0.00999999977 : f32
    %119 = vector.broadcast %cst_82 : f32 to vector<2x256xf32>
    %120 = arith.mulf %119, %116 : vector<2x256xf32>
    %121 = arith.select %118, %116, %120 : vector<2x256xi1>, vector<2x256xf32>
    %c0_83 = arith.constant 0 : index
    %c0_84 = arith.constant 0 : index
    %122 = vector.load %arg19[%c0_83, %c0_84] : memref<256x512xf32, #tpu.memory_space<vmem>>, vector<256x512xf32>
    %cst_85 = arith.constant dense<0.000000e+00> : vector<2x512xf32>
    %123 = tpu.matmul %121, %122, %cst_85 {dimension_numbers = #tpu.dot_dimension_numbers<[1], [0], [0], [1], [0, 0, 1, 1], [], []>} : vector<2x256xf32>, vector<256x512xf32>, vector<2x512xf32> -> vector<2x512xf32>
    %cst_86 = arith.constant dense<0.000000e+00> : vector<512xf32>
    %124 = vector.multi_reduction <add>, %123, %cst_86 [0] : vector<2x512xf32> to vector<512xf32>
    %125 = vector.shape_cast %124 : vector<512xf32> to vector<1x512xf32>
    %c0_87 = arith.constant 0 : index
    %c0_88 = arith.constant 0 : index
    %126 = vector.load %arg22[%c0_87, %c0_88] : memref<512x8xf32, #tpu.memory_space<vmem>>, vector<512x8xf32>
    %cst_89 = arith.constant dense<0.000000e+00> : vector<1x8xf32>
    %127 = tpu.matmul %125, %126, %cst_89 {dimension_numbers = #tpu.dot_dimension_numbers<[1], [0], [0], [1], [0, 0, 1, 1], [], []>} : vector<1x512xf32>, vector<512x8xf32>, vector<1x8xf32> -> vector<1x8xf32>
    %cst_90 = arith.constant 7.812500e-03 : f32
    %128 = vector.broadcast %cst_90 : f32 to vector<1x8xf32>
    %129 = arith.mulf %127, %128 : vector<1x8xf32>
    %c0_91 = arith.constant 0 : index
    %c0_92 = arith.constant 0 : index
    %130 = vector.load %arg23[%c0_91, %c0_92] : memref<8x512xf32, #tpu.memory_space<vmem>>, vector<8x512xf32>
    %cst_93 = arith.constant dense<0.000000e+00> : vector<1x512xf32>
    %131 = tpu.matmul %129, %130, %cst_93 {dimension_numbers = #tpu.dot_dimension_numbers<[1], [0], [0], [1], [0, 0, 1, 1], [], []>} : vector<1x8xf32>, vector<8x512xf32>, vector<1x512xf32> -> vector<1x512xf32>
    %132 = vector.broadcast %131 : vector<1x512xf32> to vector<2x512xf32>
    %133 = arith.subf %123, %132 : vector<2x512xf32>
    %134 = arith.mulf %133, %133 : vector<2x512xf32>
    %cst_94 = arith.constant dense<0.000000e+00> : vector<512xf32>
    %135 = vector.multi_reduction <add>, %134, %cst_94 [0] : vector<2x512xf32> to vector<512xf32>
    %136 = vector.shape_cast %135 : vector<512xf32> to vector<1x512xf32>
    %c0_95 = arith.constant 0 : index
    %c0_96 = arith.constant 0 : index
    %137 = vector.load %arg22[%c0_95, %c0_96] : memref<512x8xf32, #tpu.memory_space<vmem>>, vector<512x8xf32>
    %cst_97 = arith.constant dense<0.000000e+00> : vector<1x8xf32>
    %138 = tpu.matmul %136, %137, %cst_97 {dimension_numbers = #tpu.dot_dimension_numbers<[1], [0], [0], [1], [0, 0, 1, 1], [], []>} : vector<1x512xf32>, vector<512x8xf32>, vector<1x8xf32> -> vector<1x8xf32>
    %cst_98 = arith.constant 7.812500e-03 : f32
    %139 = vector.broadcast %cst_98 : f32 to vector<1x8xf32>
    %140 = arith.mulf %138, %139 : vector<1x8xf32>
    %c0_99 = arith.constant 0 : index
    %c0_100 = arith.constant 0 : index
    %141 = vector.load %arg23[%c0_99, %c0_100] : memref<8x512xf32, #tpu.memory_space<vmem>>, vector<8x512xf32>
    %cst_101 = arith.constant dense<0.000000e+00> : vector<1x512xf32>
    %142 = tpu.matmul %140, %141, %cst_101 {dimension_numbers = #tpu.dot_dimension_numbers<[1], [0], [0], [1], [0, 0, 1, 1], [], []>} : vector<1x8xf32>, vector<8x512xf32>, vector<1x512xf32> -> vector<1x512xf32>
    %cst_102 = arith.constant 9.99999974E-6 : f32
    %143 = vector.broadcast %cst_102 : f32 to vector<1x512xf32>
    %144 = arith.addf %142, %143 : vector<1x512xf32>
    %145 = math.rsqrt %144 : vector<1x512xf32>
    %146 = vector.broadcast %145 : vector<1x512xf32> to vector<2x512xf32>
    %147 = arith.mulf %133, %146 : vector<2x512xf32>
    %c0_103 = arith.constant 0 : index
    %c0_104 = arith.constant 0 : index
    %148 = vector.load %arg20[%c0_103, %c0_104] : memref<1x512xf32, #tpu.memory_space<vmem>>, vector<1x512xf32>
    %149 = vector.broadcast %148 : vector<1x512xf32> to vector<2x512xf32>
    %150 = arith.mulf %147, %149 : vector<2x512xf32>
    %c0_105 = arith.constant 0 : index
    %c0_106 = arith.constant 0 : index
    %151 = vector.load %arg21[%c0_105, %c0_106] : memref<1x512xf32, #tpu.memory_space<vmem>>, vector<1x512xf32>
    %152 = vector.broadcast %151 : vector<1x512xf32> to vector<2x512xf32>
    %153 = arith.addf %150, %152 : vector<2x512xf32>
    %cst_107 = arith.constant 0.000000e+00 : f32
    %154 = vector.broadcast %cst_107 : f32 to vector<2x512xf32>
    %155 = arith.cmpf oge, %153, %154 : vector<2x512xf32>
    %cst_108 = arith.constant 0.00999999977 : f32
    %156 = vector.broadcast %cst_108 : f32 to vector<2x512xf32>
    %157 = arith.mulf %156, %153 : vector<2x512xf32>
    %158 = arith.select %155, %153, %157 : vector<2x512xi1>, vector<2x512xf32>
    %c0_109 = arith.constant 0 : index
    %c0_110 = arith.constant 0 : index
    %159 = vector.load %arg24[%c0_109, %c0_110] : memref<512x1024xf32, #tpu.memory_space<vmem>>, vector<512x1024xf32>
    %cst_111 = arith.constant dense<0.000000e+00> : vector<2x1024xf32>
    %160 = tpu.matmul %158, %159, %cst_111 {dimension_numbers = #tpu.dot_dimension_numbers<[1], [0], [0], [1], [0, 0, 1, 1], [], []>} : vector<2x512xf32>, vector<512x1024xf32>, vector<2x1024xf32> -> vector<2x1024xf32>
    %c0_112 = arith.constant 0 : index
    %c0_113 = arith.constant 0 : index
    %161 = vector.load %arg25[%c0_112, %c0_113] : memref<1x1024xf32, #tpu.memory_space<vmem>>, vector<1x1024xf32>
    %162 = vector.broadcast %161 : vector<1x1024xf32> to vector<2x1024xf32>
    %163 = arith.addf %160, %162 : vector<2x1024xf32>
    %164 = math.tanh %163 : vector<2x1024xf32>
    %c0_114 = arith.constant 0 : index
    %c0_115 = arith.constant 0 : index
    %165 = vector.load %arg26[%c0_114, %c0_115] : memref<2x1024xf32, #tpu.memory_space<vmem>>, vector<2x1024xf32>
    tpu.vector_store %arg26[%c0_114, %c0_115], %164 {strides = array<i32>} : memref<2x1024xf32, #tpu.memory_space<vmem>>, vector<2x1024xf32>,
    return
  }
}

</mosaic_0001>

<llo_original>
// kernel: forward.1
$region0: #{forward.1}
  #allocation0 [shape = 'u32[]', space=smem, size = 0x4, offset = 0x4, fixed_abs, tag = 'smem constant byte address 0x4 - core index']
  #allocation1 [shape = 'u32[72,128]{1,0:T(1,128)}', space=vmem, size = 0x9000, scoped, tag = 'internal scratch']
  %s0 = inlined_call_operand.vmem [shape: f32[2,1024], index: 0, kind: input, shape index: {}]
  %s1 = inlined_call_operand.hbm [shape: f32[2,32], index: 1, kind: input, shape index: {}]
  %s2 = inlined_call_operand.hbm [shape: f32[1024,512], index: 2, kind: input, shape index: {}]
  %s3 = inlined_call_operand.hbm [shape: f32[1,512], index: 3, kind: input, shape index: {}]
  %s4 = inlined_call_operand.hbm [shape: f32[1,512], index: 4, kind: input, shape index: {}]
  %s5 = inlined_call_operand.vmem [shape: f32[512,8], index: 5, kind: input, shape index: {}]
  %s6 = inlined_call_operand.hbm [shape: f32[8,512], index: 6, kind: input, shape index: {}]
  %s7 = inlined_call_operand.hbm [shape: f32[512,256], index: 7, kind: input, shape index: {}]
  %s8 = inlined_call_operand.hbm [shape: f32[1,256], index: 8, kind: input, shape index: {}]
  %s9 = inlined_call_operand.hbm [shape: f32[1,256], index: 9, kind: input, shape index: {}]
  %s10 = inlined_call_operand.vmem [shape: f32[256,16], index: 10, kind: input, shape index: {}]
  %s11 = inlined_call_operand.hbm [shape: f32[16,256], index: 11, kind: input, shape index: {}]
  %s12 = inlined_call_operand.vmem [shape: f32[256,32], index: 12, kind: input, shape index: {}]
  %s13 = inlined_call_operand.hbm [shape: f32[1,32], index: 13, kind: input, shape index: {}]
  %s14 = inlined_call_operand.vmem [shape: f32[256,32], index: 14, kind: input, shape index: {}]
  %s15 = inlined_call_operand.hbm [shape: f32[1,32], index: 15, kind: input, shape index: {}]
  %s16 = inlined_call_operand.hbm [shape: f32[32,256], index: 16, kind: input, shape index: {}]
  %s17 = inlined_call_operand.hbm [shape: f32[1,256], index: 17, kind: input, shape index: {}]
  %s18 = inlined_call_operand.hbm [shape: f32[1,256], index: 18, kind: input, shape index: {}]
  %s19 = inlined_call_operand.hbm [shape: f32[256,512], index: 19, kind: input, shape index: {}]
  %s20 = inlined_call_operand.hbm [shape: f32[1,512], index: 20, kind: input, shape index: {}]
  %s21 = inlined_call_operand.hbm [shape: f32[1,512], index: 21, kind: input, shape index: {}]
  %s22 = inlined_call_operand.vmem [shape: f32[512,8], index: 22, kind: input, shape index: {}]
  %s23 = inlined_call_operand.hbm [shape: f32[8,512], index: 23, kind: input, shape index: {}]
  %s24 = inlined_call_operand.hbm [shape: f32[512,1024], index: 24, kind: input, shape index: {}]
  %s25 = inlined_call_operand.hbm [shape: f32[1,1024], index: 25, kind: input, shape index: {}]
  %s26 = inlined_call_operand.vmem [shape: f32[2,1024], index: 26, kind: output, shape index: {0}]
  %s27 = inlined_call_operand.hbm [shape: f32[2,32], index: 27, kind: output, shape index: {1}]
  %s28 = inlined_call_operand.hbm [shape: f32[2,32], index: 28, kind: output, shape index: {2}]
  %29 = xla_tuple %s26, %s27, %s28
  %s30 = sld [smem:[#allocation0]]
  $region210: #{forward.1} parent=0
    _
  %s32 = ssub.s32 1, %s30
  %s33 = scalar_select 0, %s32, %s30
  $region1: #{forward.1} parent=0
    #allocation2 [shape = 'u8[1024]{0}', space=vmem, size = 0x400, scoped, tag = 'input window, operand 1, single buffered']
    #allocation3 [shape = 's32[1]{0}', space=sflag, size = 0x4, scoped, tag = 'scoped memory for forward.1']
    #allocation4 [shape = 's32[1]{0}', space=sflag, size = 0x4, scoped, tag = 'scoped memory for forward.1']
    #allocation5 [shape = 'u8[2097152]{0}', space=vmem, size = 0x200000, scoped, tag = 'input window, operand 2, single buffered']
    #allocation6 [shape = 's32[1]{0}', space=sflag, size = 0x4, scoped, tag = 'scoped memory for forward.1']
    #allocation7 [shape = 'u8[2048]{0}', space=vmem, size = 0x800, scoped, tag = 'input window, operand 3, single buffered']
    #allocation8 [shape = 'u8[2048]{0}', space=vmem, size = 0x800, scoped, tag = 'input window, operand 4, single buffered']
    #allocation9 [shape = 's32[1]{0}', space=sflag, size = 0x4, scoped, tag = 'scoped memory for forward.1']
    #allocation10 [shape = 'u8[16384]{0}', space=vmem, size = 0x4000, scoped, tag = 'input window, operand 6, single buffered']
    #allocation11 [shape = 'u8[524288]{0}', space=vmem, size = 0x80000, scoped, tag = 'input window, operand 7, single buffered']
    #allocation12 [shape = 's32[1]{0}', space=sflag, size = 0x4, scoped, tag = 'scoped memory for forward.1']
    #allocation13 [shape = 'u8[1024]{0}', space=vmem, size = 0x400, scoped, tag = 'input window, operand 8, single buffered']
    #allocation14 [shape = 'u8[1024]{0}', space=vmem, size = 0x400, scoped, tag = 'input window, operand 9, single buffered']
    #allocation15 [shape = 's32[1]{0}', space=sflag, size = 0x4, scoped, tag = 'scoped memory for forward.1']
    #allocation16 [shape = 'u8[16384]{0}', space=vmem, size = 0x4000, scoped, tag = 'input window, operand 11, single buffered']
    #allocation17 [shape = 'u8[512]{0}', space=vmem, size = 0x400, scoped, tag = 'input window, operand 13, single buffered']
    #allocation18 [shape = 's32[1]{0}', space=sflag, size = 0x4, scoped, tag = 'scoped memory for forward.1']
    #allocation19 [shape = 'u8[512]{0}', space=vmem, size = 0x400, scoped, tag = 'input window, operand 15, single buffered']
    #allocation20 [shape = 'u8[32768]{0}', space=vmem, size = 0x8000, scoped, tag = 'input window, operand 16, single buffered']
    #allocation21 [shape = 's32[1]{0}', space=sflag, size = 0x4, scoped, tag = 'scoped memory for forward.1']
    #allocation22 [shape = 'u8[1024]{0}', space=vmem, size = 0x400, scoped, tag = 'input window, operand 17, single buffered']
    #allocation23 [shape = 'u8[1024]{0}', space=vmem, size = 0x400, scoped, tag = 'input window, operand 18, single buffered']
    #allocation24 [shape = 's32[1]{0}', space=sflag, size = 0x4, scoped, tag = 'scoped memory for forward.1']
    #allocation25 [shape = 'u8[524288]{0}', space=vmem, size = 0x80000, scoped, tag = 'input window, operand 19, single buffered']
    #allocation26 [shape = 'u8[2048]{0}', space=vmem, size = 0x800, scoped, tag = 'input window, operand 20, single buffered']
    #allocation27 [shape = 's32[1]{0}', space=sflag, size = 0x4, scoped, tag = 'scoped memory for forward.1']
    #allocation28 [shape = 'u8[2048]{0}', space=vmem, size = 0x800, scoped, tag = 'input window, operand 21, single buffered']
    #allocation29 [shape = 'u8[16384]{0}', space=vmem, size = 0x4000, scoped, tag = 'input window, operand 23, single buffered']
    #allocation30 [shape = 's32[1]{0}', space=sflag, size = 0x4, scoped, tag = 'scoped memory for forward.1']
    #allocation31 [shape = 'u8[2097152]{0}', space=vmem, size = 0x200000, scoped, tag = 'input window, operand 24, single buffered']
    #allocation32 [shape = 'u8[4096]{0}', space=vmem, size = 0x1000, scoped, tag = 'input window, operand 25, single buffered']
    #allocation33 [shape = 's32[1]{0}', space=sflag, size = 0x4, scoped, tag = 'scoped memory for forward.1']
    #allocation34 [shape = 'u8[1024]{0}', space=vmem, size = 0x400, scoped, tag = 'output window, operand 1, single buffered']
    #allocation35 [shape = 'u8[1024]{0}', space=vmem, size = 0x400, scoped, tag = 'output window, operand 2, single buffered']
    #allocation36 [shape = 's32[1]{0}', space=sflag, size = 0x4, scoped, tag = 'scoped memory for forward.1']
    %34 = vsyncpa [#allocation3], 0
    %35 = vsyncpa [#allocation6], 0
    %36 = vsyncpa [#allocation9], 0
    %37 = vsyncpa [#allocation12], 0
    %38 = vsyncpa [#allocation15], 0
    %39 = vsyncpa [#allocation18], 0
    %40 = vsyncpa [#allocation21], 0
    %41 = vsyncpa [#allocation24], 0
    %42 = vsyncpa [#allocation27], 0
    %43 = vsyncpa [#allocation30], 0
    %44 = vsyncpa [#allocation33], 0
    %45 = vsyncpa [#allocation4], 0
    %46 = vsyncpa [#allocation36], 0
    // Predicated region
    $region2: #{forward.1} parent=1 // pred_check
      _
    $region3: #{forward.1} parent=1 // pred_check_branch
      %48 = sbr.rel (0) target = $region5
    $region4: #{forward.1} parent=1 // pred_region
      _
    $region5: #{forward.1} parent=1 // pred_fallthru
      _
    // Predicated region
    $region6: #{forward.1} parent=1 // pred_check
      _
    $region7: #{forward.1} parent=1 // pred_check_branch
      %50 = sbr.rel (0) target = $region9
    $region8: #{forward.1} parent=1 // pred_region
      %52 = vsyncadd [#allocation3], 0
      %s54 = sshll.u32 %s1, 4
      %s55 = int_to_ptr.hbm [resolvable:$true] %s54
      %s56 = sshll.u32 [#allocation2], 4
      %s57 = int_to_ptr.vmem [resolvable:$true] %s56
      %59 = dma.hbm_to_vmem [thread:$0]  %s55, 32, %s57, [#allocation3]
    $region9: #{forward.1} parent=1 // pred_fallthru
      _
    // Predicated region
    $region10: #{forward.1} parent=1 // pred_check
      _
    $region11: #{forward.1} parent=1 // pred_check_branch
      %61 = sbr.rel (0) target = $region13
    $region12: #{forward.1} parent=1 // pred_region
      %63 = vsyncadd [#allocation6], 0
      %s64 = sshll.u32 %s2, 4
      %s65 = int_to_ptr.hbm [resolvable:$true] %s64
      %s66 = sshll.u32 [#allocation5], 4
      %s67 = int_to_ptr.vmem [resolvable:$true] %s66
      %72 = dma.hbm_to_vmem [thread:$0]  %s65, 65536, %s67, [#allocation6], 512, 512, 32
    $region13: #{forward.1} parent=1 // pred_fallthru
      _
    // Predicated region
    $region14: #{forward.1} parent=1 // pred_check
      _
    $region15: #{forward.1} parent=1 // pred_check_branch
      %74 = sbr.rel (0) target = $region17
    $region16: #{forward.1} parent=1 // pred_region
      %76 = vsyncadd [#allocation6], 0
      %s78 = sshll.u32 %s3, 4
      %s79 = int_to_ptr.hbm [resolvable:$true] %s78
      %s80 = sshll.u32 [#allocation7], 4
      %s81 = int_to_ptr.vmem [resolvable:$true] %s80
      %83 = dma.hbm_to_vmem [thread:$0]  %s79, 64, %s81, [#allocation6]
    $region17: #{forward.1} parent=1 // pred_fallthru
      _
    // Predicated region
    $region18: #{forward.1} parent=1 // pred_check
      _
    $region19: #{forward.1} parent=1 // pred_check_branch
      %85 = sbr.rel (0) target = $region21
    $region20: #{forward.1} parent=1 // pred_region
      %87 = vsyncadd [#allocation9], 0
      %s89 = sshll.u32 %s4, 4
      %s90 = int_to_ptr.hbm [resolvable:$true] %s89
      %s91 = sshll.u32 [#allocation8], 4
      %s92 = int_to_ptr.vmem [resolvable:$true] %s91
      %94 = dma.hbm_to_vmem [thread:$0]  %s90, 64, %s92, [#allocation9]
    $region21: #{forward.1} parent=1 // pred_fallthru
      _
    // Predicated region
    $region22: #{forward.1} parent=1 // pred_check
      _
    $region23: #{forward.1} parent=1 // pred_check_branch
      %96 = sbr.rel (0) target = $region25
    $region24: #{forward.1} parent=1 // pred_region
      _
    $region25: #{forward.1} parent=1 // pred_fallthru
      _
    // Predicated region
    $region26: #{forward.1} parent=1 // pred_check
      _
    $region27: #{forward.1} parent=1 // pred_check_branch
      %98 = sbr.rel (0) target = $region29
    $region28: #{forward.1} parent=1 // pred_region
      %100 = vsyncadd [#allocation9], 0
      %s102 = sshll.u32 %s6, 4
      %s103 = int_to_ptr.hbm [resolvable:$true] %s102
      %s104 = sshll.u32 [#allocation10], 4
      %s105 = int_to_ptr.vmem [resolvable:$true] %s104
      %107 = dma.hbm_to_vmem [thread:$0]  %s103, 512, %s105, [#allocation9]
    $region29: #{forward.1} parent=1 // pred_fallthru
      _
    // Predicated region
    $region30: #{forward.1} parent=1 // pred_check
      _
    $region31: #{forward.1} parent=1 // pred_check_branch
      %109 = sbr.rel (0) target = $region33
    $region32: #{forward.1} parent=1 // pred_region
      %111 = vsyncadd [#allocation12], 0
      %s112 = sshll.u32 %s7, 4
      %s113 = int_to_ptr.hbm [resolvable:$true] %s112
      %s114 = sshll.u32 [#allocation11], 4
      %s115 = int_to_ptr.vmem [resolvable:$true] %s114
      %120 = dma.hbm_to_vmem [thread:$0]  %s113, 16384, %s115, [#allocation12], 256, 256, 16
    $region33: #{forward.1} parent=1 // pred_fallthru
      _
    // Predicated region
    $region34: #{forward.1} parent=1 // pred_check
      _
    $region35: #{forward.1} parent=1 // pred_check_branch
      %122 = sbr.rel (0) target = $region37
    $region36: #{forward.1} parent=1 // pred_region
      %124 = vsyncadd [#allocation12], 0
      %s126 = sshll.u32 %s8, 4
      %s127 = int_to_ptr.hbm [resolvable:$true] %s126
      %s128 = sshll.u32 [#allocation13], 4
      %s129 = int_to_ptr.vmem [resolvable:$true] %s128
      %131 = dma.hbm_to_vmem [thread:$0]  %s127, 32, %s129, [#allocation12]
    $region37: #{forward.1} parent=1 // pred_fallthru
      _
    // Predicated region
    $region38: #{forward.1} parent=1 // pred_check
      _
    $region39: #{forward.1} parent=1 // pred_check_branch
      %133 = sbr.rel (0) target = $region41
    $region40: #{forward.1} parent=1 // pred_region
      %135 = vsyncadd [#allocation15], 0
      %s137 = sshll.u32 %s9, 4
      %s138 = int_to_ptr.hbm [resolvable:$true] %s137
      %s139 = sshll.u32 [#allocation14], 4
      %s140 = int_to_ptr.vmem [resolvable:$true] %s139
      %142 = dma.hbm_to_vmem [thread:$0]  %s138, 32, %s140, [#allocation15]
    $region41: #{forward.1} parent=1 // pred_fallthru
      _
    // Predicated region
    $region42: #{forward.1} parent=1 // pred_check
      _
    $region43: #{forward.1} parent=1 // pred_check_branch
      %144 = sbr.rel (0) target = $region45
    $region44: #{forward.1} parent=1 // pred_region
      _
    $region45: #{forward.1} parent=1 // pred_fallthru
      _
    // Predicated region
    $region46: #{forward.1} parent=1 // pred_check
      _
    $region47: #{forward.1} parent=1 // pred_check_branch
      %146 = sbr.rel (0) target = $region49
    $region48: #{forward.1} parent=1 // pred_region
      %148 = vsyncadd [#allocation15], 0
      %s149 = sshll.u32 %s11, 4
      %s150 = int_to_ptr.hbm [resolvable:$true] %s149
      %s151 = sshll.u32 [#allocation16], 4
      %s152 = int_to_ptr.vmem [resolvable:$true] %s151
      %157 = dma.hbm_to_vmem [thread:$0]  %s150, 512, %s152, [#allocation15], 256, 256, 16
    $region49: #{forward.1} parent=1 // pred_fallthru
      _
    // Predicated region
    $region50: #{forward.1} parent=1 // pred_check
      _
    $region51: #{forward.1} parent=1 // pred_check_branch
      %159 = sbr.rel (0) target = $region53
    $region52: #{forward.1} parent=1 // pred_region
      _
    $region53: #{forward.1} parent=1 // pred_fallthru
      _
    // Predicated region
    $region54: #{forward.1} parent=1 // pred_check
      _
    $region55: #{forward.1} parent=1 // pred_check_branch
      %161 = sbr.rel (0) target = $region57
    $region56: #{forward.1} parent=1 // pred_region
      %163 = vsyncadd [#allocation18], 0
      %s165 = sshll.u32 %s13, 4
      %s166 = int_to_ptr.hbm [resolvable:$true] %s165
      %s167 = sshll.u32 [#allocation17], 4
      %s168 = int_to_ptr.vmem [resolvable:$true] %s167
      %170 = dma.hbm_to_vmem [thread:$0]  %s166, 16, %s168, [#allocation18]
    $region57: #{forward.1} parent=1 // pred_fallthru
      _
    // Predicated region
    $region58: #{forward.1} parent=1 // pred_check
      _
    $region59: #{forward.1} parent=1 // pred_check_branch
      %172 = sbr.rel (0) target = $region61
    $region60: #{forward.1} parent=1 // pred_region
      _
    $region61: #{forward.1} parent=1 // pred_fallthru
      _
    // Predicated region
    $region62: #{forward.1} parent=1 // pred_check
      _
    $region63: #{forward.1} parent=1 // pred_check_branch
      %174 = sbr.rel (0) target = $region65
    $region64: #{forward.1} parent=1 // pred_region
      %176 = vsyncadd [#allocation18], 0
      %s178 = sshll.u32 %s15, 4
      %s179 = int_to_ptr.hbm [resolvable:$true] %s178
      %s180 = sshll.u32 [#allocation19], 4
      %s181 = int_to_ptr.vmem [resolvable:$true] %s180
      %183 = dma.hbm_to_vmem [thread:$0]  %s179, 16, %s181, [#allocation18]
    $region65: #{forward.1} parent=1 // pred_fallthru
      _
    // Predicated region
    $region66: #{forward.1} parent=1 // pred_check
      _
    $region67: #{forward.1} parent=1 // pred_check_branch
      %185 = sbr.rel (0) target = $region69
    $region68: #{forward.1} parent=1 // pred_region
      %187 = vsyncadd [#allocation21], 0
      %s188 = sshll.u32 %s16, 4
      %s189 = int_to_ptr.hbm [resolvable:$true] %s188
      %s190 = sshll.u32 [#allocation20], 4
      %s191 = int_to_ptr.vmem [resolvable:$true] %s190
      %196 = dma.hbm_to_vmem [thread:$0]  %s189, 1024, %s191, [#allocation21], 256, 256, 16
    $region69: #{forward.1} parent=1 // pred_fallthru
      _
    // Predicated region
    $region70: #{forward.1} parent=1 // pred_check
      _
    $region71: #{forward.1} parent=1 // pred_check_branch
      %198 = sbr.rel (0) target = $region73
    $region72: #{forward.1} parent=1 // pred_region
      %200 = vsyncadd [#allocation21], 0
      %s202 = sshll.u32 %s17, 4
      %s203 = int_to_ptr.hbm [resolvable:$true] %s202
      %s204 = sshll.u32 [#allocation22], 4
      %s205 = int_to_ptr.vmem [resolvable:$true] %s204
      %207 = dma.hbm_to_vmem [thread:$0]  %s203, 32, %s205, [#allocation21]
    $region73: #{forward.1} parent=1 // pred_fallthru
      _
    // Predicated region
    $region74: #{forward.1} parent=1 // pred_check
      _
    $region75: #{forward.1} parent=1 // pred_check_branch
      %209 = sbr.rel (0) target = $region77
    $region76: #{forward.1} parent=1 // pred_region
      %211 = vsyncadd [#allocation24], 0
      %s213 = sshll.u32 %s18, 4
      %s214 = int_to_ptr.hbm [resolvable:$true] %s213
      %s215 = sshll.u32 [#allocation23], 4
      %s216 = int_to_ptr.vmem [resolvable:$true] %s215
      %218 = dma.hbm_to_vmem [thread:$0]  %s214, 32, %s216, [#allocation24]
    $region77: #{forward.1} parent=1 // pred_fallthru
      _
    // Predicated region
    $region78: #{forward.1} parent=1 // pred_check
      _
    $region79: #{forward.1} parent=1 // pred_check_branch
      %220 = sbr.rel (0) target = $region81
    $region80: #{forward.1} parent=1 // pred_region
      %222 = vsyncadd [#allocation24], 0
      %s223 = sshll.u32 %s19, 4
      %s224 = int_to_ptr.hbm [resolvable:$true] %s223
      %s225 = sshll.u32 [#allocation25], 4
      %s226 = int_to_ptr.vmem [resolvable:$true] %s225
      %231 = dma.hbm_to_vmem [thread:$0]  %s224, 16384, %s226, [#allocation24], 512, 512, 32
    $region81: #{forward.1} parent=1 // pred_fallthru
      _
    // Predicated region
    $region82: #{forward.1} parent=1 // pred_check
      _
    $region83: #{forward.1} parent=1 // pred_check_branch
      %233 = sbr.rel (0) target = $region85
    $region84: #{forward.1} parent=1 // pred_region
      %235 = vsyncadd [#allocation27], 0
      %s237 = sshll.u32 %s20, 4
      %s238 = int_to_ptr.hbm [resolvable:$true] %s237
      %s239 = sshll.u32 [#allocation26], 4
      %s240 = int_to_ptr.vmem [resolvable:$true] %s239
      %242 = dma.hbm_to_vmem [thread:$0]  %s238, 64, %s240, [#allocation27]
    $region85: #{forward.1} parent=1 // pred_fallthru
      _
    // Predicated region
    $region86: #{forward.1} parent=1 // pred_check
      _
    $region87: #{forward.1} parent=1 // pred_check_branch
      %244 = sbr.rel (0) target = $region89
    $region88: #{forward.1} parent=1 // pred_region
      %246 = vsyncadd [#allocation27], 0
      %s248 = sshll.u32 %s21, 4
      %s249 = int_to_ptr.hbm [resolvable:$true] %s248
      %s250 = sshll.u32 [#allocation28], 4
      %s251 = int_to_ptr.vmem [resolvable:$true] %s250
      %253 = dma.hbm_to_vmem [thread:$0]  %s249, 64, %s251, [#allocation27]
    $region89: #{forward.1} parent=1 // pred_fallthru
      _
    // Predicated region
    $region90: #{forward.1} parent=1 // pred_check
      _
    $region91: #{forward.1} parent=1 // pred_check_branch
      %255 = sbr.rel (0) target = $region93
    $region92: #{forward.1} parent=1 // pred_region
      _
    $region93: #{forward.1} parent=1 // pred_fallthru
      _
    // Predicated region
    $region94: #{forward.1} parent=1 // pred_check
      _
    $region95: #{forward.1} parent=1 // pred_check_branch
      %257 = sbr.rel (0) target = $region97
    $region96: #{forward.1} parent=1 // pred_region
      %259 = vsyncadd [#allocation30], 0
      %s261 = sshll.u32 %s23, 4
      %s262 = int_to_ptr.hbm [resolvable:$true] %s261
      %s263 = sshll.u32 [#allocation29], 4
      %s264 = int_to_ptr.vmem [resolvable:$true] %s263
      %266 = dma.hbm_to_vmem [thread:$0]  %s262, 512, %s264, [#allocation30]
    $region97: #{forward.1} parent=1 // pred_fallthru
      _
    // Predicated region
    $region98: #{forward.1} parent=1 // pred_check
      _
    $region99: #{forward.1} parent=1 // pred_check_branch
      %268 = sbr.rel (0) target = $region101
    $region100: #{forward.1} parent=1 // pred_region
      %270 = vsyncadd [#allocation30], 0
      %s271 = sshll.u32 %s24, 4
      %s272 = int_to_ptr.hbm [resolvable:$true] %s271
      %s273 = sshll.u32 [#allocation31], 4
      %s274 = int_to_ptr.vmem [resolvable:$true] %s273
      %279 = dma.hbm_to_vmem [thread:$0]  %s272, 65536, %s274, [#allocation30], 1024, 1024, 64
    $region101: #{forward.1} parent=1 // pred_fallthru
      _
    // Predicated region
    $region102: #{forward.1} parent=1 // pred_check
      _
    $region103: #{forward.1} parent=1 // pred_check_branch
      %281 = sbr.rel (0) target = $region105
    $region104: #{forward.1} parent=1 // pred_region
      %283 = vsyncadd [#allocation33], 0
      %s285 = sshll.u32 %s25, 4
      %s286 = int_to_ptr.hbm [resolvable:$true] %s285
      %s287 = sshll.u32 [#allocation32], 4
      %s288 = int_to_ptr.vmem [resolvable:$true] %s287
      %290 = dma.hbm_to_vmem [thread:$0]  %s286, 128, %s288, [#allocation33]
    $region105: #{forward.1} parent=1 // pred_fallthru
      _
    // Predicated region
    $region106: #{forward.1} parent=1 // pred_check
      _
    $region107: #{forward.1} parent=1 // pred_check_branch
      %292 = sbr.rel (0) target = $region109
    $region108: #{forward.1} parent=1 // pred_region
      %294 = dma.done [#allocation3], 32
    $region109: #{forward.1} parent=1 // pred_fallthru
      _
    // Predicated region
    $region110: #{forward.1} parent=1 // pred_check
      _
    $region111: #{forward.1} parent=1 // pred_check_branch
      %296 = sbr.rel (0) target = $region113
    $region112: #{forward.1} parent=1 // pred_region
      %298 = dma.done [#allocation6], 65536
    $region113: #{forward.1} parent=1 // pred_fallthru
      _
    // Predicated region
    $region114: #{forward.1} parent=1 // pred_check
      _
    $region115: #{forward.1} parent=1 // pred_check_branch
      %300 = sbr.rel (0) target = $region117
    $region116: #{forward.1} parent=1 // pred_region
      %302 = dma.done [#allocation6], 64
    $region117: #{forward.1} parent=1 // pred_fallthru
      _
    // Predicated region
    $region118: #{forward.1} parent=1 // pred_check
      _
    $region119: #{forward.1} parent=1 // pred_check_branch
      %304 = sbr.rel (0) target = $region121
    $region120: #{forward.1} parent=1 // pred_region
      %306 = dma.done [#allocation9], 64
    $region121: #{forward.1} parent=1 // pred_fallthru
      _
    // Predicated region
    $region122: #{forward.1} parent=1 // pred_check
      _
    $region123: #{forward.1} parent=1 // pred_check_branch
      %308 = sbr.rel (0) target = $region125
    $region124: #{forward.1} parent=1 // pred_region
      %310 = dma.done [#allocation9], 512
    $region125: #{forward.1} parent=1 // pred_fallthru
      _
    // Predicated region
    $region126: #{forward.1} parent=1 // pred_check
      _
    $region127: #{forward.1} parent=1 // pred_check_branch
      %312 = sbr.rel (0) target = $region129
    $region128: #{forward.1} parent=1 // pred_region
      %314 = dma.done [#allocation12], 16384
    $region129: #{forward.1} parent=1 // pred_fallthru
      _
    // Predicated region
    $region130: #{forward.1} parent=1 // pred_check
      _
    $region131: #{forward.1} parent=1 // pred_check_branch
      %316 = sbr.rel (0) target = $region133
    $region132: #{forward.1} parent=1 // pred_region
      %318 = dma.done [#allocation12], 32
    $region133: #{forward.1} parent=1 // pred_fallthru
      _
    // Predicated region
    $region134: #{forward.1} parent=1 // pred_check
      _
    $region135: #{forward.1} parent=1 // pred_check_branch
      %320 = sbr.rel (0) target = $region137
    $region136: #{forward.1} parent=1 // pred_region
      %322 = dma.done [#allocation15], 32
    $region137: #{forward.1} parent=1 // pred_fallthru
      _
    // Predicated region
    $region138: #{forward.1} parent=1 // pred_check
      _
    $region139: #{forward.1} parent=1 // pred_check_branch
      %324 = sbr.rel (0) target = $region141
    $region140: #{forward.1} parent=1 // pred_region
      %326 = dma.done [#allocation15], 512
    $region141: #{forward.1} parent=1 // pred_fallthru
      _
    // Predicated region
    $region142: #{forward.1} parent=1 // pred_check
      _
    $region143: #{forward.1} parent=1 // pred_check_branch
      %328 = sbr.rel (0) target = $region145
    $region144: #{forward.1} parent=1 // pred_region
      %330 = dma.done [#allocation18], 16
    $region145: #{forward.1} parent=1 // pred_fallthru
      _
    // Predicated region
    $region146: #{forward.1} parent=1 // pred_check
      _
    $region147: #{forward.1} parent=1 // pred_check_branch
      %332 = sbr.rel (0) target = $region149
    $region148: #{forward.1} parent=1 // pred_region
      %334 = dma.done [#allocation18], 16
    $region149: #{forward.1} parent=1 // pred_fallthru
      _
    // Predicated region
    $region150: #{forward.1} parent=1 // pred_check
      _
    $region151: #{forward.1} parent=1 // pred_check_branch
      %336 = sbr.rel (0) target = $region153
    $region152: #{forward.1} parent=1 // pred_region
      %338 = dma.done [#allocation21], 1024
    $region153: #{forward.1} parent=1 // pred_fallthru
      _
    // Predicated region
    $region154: #{forward.1} parent=1 // pred_check
      _
    $region155: #{forward.1} parent=1 // pred_check_branch
      %340 = sbr.rel (0) target = $region157
    $region156: #{forward.1} parent=1 // pred_region
      %342 = dma.done [#allocation21], 32
    $region157: #{forward.1} parent=1 // pred_fallthru
      _
    // Predicated region
    $region158: #{forward.1} parent=1 // pred_check
      _
    $region159: #{forward.1} parent=1 // pred_check_branch
      %344 = sbr.rel (0) target = $region161
    $region160: #{forward.1} parent=1 // pred_region
      %346 = dma.done [#allocation24], 32
    $region161: #{forward.1} parent=1 // pred_fallthru
      _
    // Predicated region
    $region162: #{forward.1} parent=1 // pred_check
      _
    $region163: #{forward.1} parent=1 // pred_check_branch
      %348 = sbr.rel (0) target = $region165
    $region164: #{forward.1} parent=1 // pred_region
      %350 = dma.done [#allocation24], 16384
    $region165: #{forward.1} parent=1 // pred_fallthru
      _
    // Predicated region
    $region166: #{forward.1} parent=1 // pred_check
      _
    $region167: #{forward.1} parent=1 // pred_check_branch
      %352 = sbr.rel (0) target = $region169
    $region168: #{forward.1} parent=1 // pred_region
      %354 = dma.done [#allocation27], 64
    $region169: #{forward.1} parent=1 // pred_fallthru
      _
    // Predicated region
    $region170: #{forward.1} parent=1 // pred_check
      _
    $region171: #{forward.1} parent=1 // pred_check_branch
      %356 = sbr.rel (0) target = $region173
    $region172: #{forward.1} parent=1 // pred_region
      %358 = dma.done [#allocation27], 64
    $region173: #{forward.1} parent=1 // pred_fallthru
      _
    // Predicated region
    $region174: #{forward.1} parent=1 // pred_check
      _
    $region175: #{forward.1} parent=1 // pred_check_branch
      %360 = sbr.rel (0) target = $region177
    $region176: #{forward.1} parent=1 // pred_region
      %362 = dma.done [#allocation30], 512
    $region177: #{forward.1} parent=1 // pred_fallthru
      _
    // Predicated region
    $region178: #{forward.1} parent=1 // pred_check
      _
    $region179: #{forward.1} parent=1 // pred_check_branch
      %364 = sbr.rel (0) target = $region181
    $region180: #{forward.1} parent=1 // pred_region
      %366 = dma.done [#allocation30], 65536
    $region181: #{forward.1} parent=1 // pred_fallthru
      _
    // Predicated region
    $region182: #{forward.1} parent=1 // pred_check
      _
    $region183: #{forward.1} parent=1 // pred_check_branch
      %368 = sbr.rel (0) target = $region185
    $region184: #{forward.1} parent=1 // pred_region
      %370 = dma.done [#allocation33], 128
    $region185: #{forward.1} parent=1 // pred_fallthru
      _
    %v371 = vld [vmem:[%s0] sm:$0xff]
    %v372 = vld [vmem:[%s0 + $0x8] sm:$0xff]
    %v373 = vld [vmem:[#allocation5] sm:$0xff]
    %v374 = vld [vmem:[#allocation5 + $0x8] sm:$0xff]
    %v375 = vld [vmem:[#allocation5 + $0x10] sm:$0xff]
    %v376 = vld [vmem:[#allocation5 + $0x18] sm:$0xff]
    %v377 = vld [vmem:[#allocation5 + $0x20] sm:$0xff]
    %v378 = vld [vmem:[#allocation5 + $0x28] sm:$0xff]
    %v379 = vld [vmem:[#allocation5 + $0x30] sm:$0xff]
    %v380 = vld [vmem:[#allocation5 + $0x38] sm:$0xff]
    %v381 = vld [vmem:[#allocation5 + $0x40] sm:$0xff]
    %v382 = vld [vmem:[#allocation5 + $0x48] sm:$0xff]
    %v383 = vld [vmem:[#allocation5 + $0x50] sm:$0xff]
    %v384 = vld [vmem:[#allocation5 + $0x58] sm:$0xff]
    %v385 = vld [vmem:[#allocation5 + $0x60] sm:$0xff]
    %v386 = vld [vmem:[#allocation5 + $0x68] sm:$0xff]
    %v387 = vld [vmem:[#allocation5 + $0x70] sm:$0xff]
    %v388 = vld [vmem:[#allocation5 + $0x78] sm:$0xff]
    %v389 = vld [vmem:[#allocation5 + $0x80] sm:$0xff]
    %v390 = vld [vmem:[#allocation5 + $0x88] sm:$0xff]
    %v391 = vld [vmem:[#allocation5 + $0x90] sm:$0xff]
    %v392 = vld [vmem:[#allocation5 + $0x98] sm:$0xff]
    %v393 = vld [vmem:[#allocation5 + $0xa0] sm:$0xff]
    %v394 = vld [vmem:[#allocation5 + $0xa8] sm:$0xff]
    %v395 = vld [vmem:[#allocation5 + $0xb0] sm:$0xff]
    %v396 = vld [vmem:[#allocation5 + $0xb8] sm:$0xff]
    %v397 = vld [vmem:[#allocation5 + $0xc0] sm:$0xff]
    %v398 = vld [vmem:[#allocation5 + $0xc8] sm:$0xff]
    %v399 = vld [vmem:[#allocation5 + $0xd0] sm:$0xff]
    %v400 = vld [vmem:[#allocation5 + $0xd8] sm:$0xff]
    %v401 = vld [vmem:[#allocation5 + $0xe0] sm:$0xff]
    %v402 = vld [vmem:[#allocation5 + $0xe8] sm:$0xff]
    %v403 = vld [vmem:[#allocation5 + $0xf0] sm:$0xff]
    %v404 = vld [vmem:[#allocation5 + $0xf8] sm:$0xff]
    %v405 = vld [vmem:[#allocation5 + $0x100] sm:$0xff]
    %v406 = vld [vmem:[#allocation5 + $0x108] sm:$0xff]
    %v407 = vld [vmem:[#allocation5 + $0x110] sm:$0xff]
    %v408 = vld [vmem:[#allocation5 + $0x118] sm:$0xff]
    %v409 = vld [vmem:[#allocation5 + $0x120] sm:$0xff]
    %v410 = vld [vmem:[#allocation5 + $0x128] sm:$0xff]
    %v411 = vld [vmem:[#allocation5 + $0x130] sm:$0xff]
    %v412 = vld [vmem:[#allocation5 + $0x138] sm:$0xff]
    %v413 = vld [vmem:[#allocation5 + $0x140] sm:$0xff]
    %v414 = vld [vmem:[#allocation5 + $0x148] sm:$0xff]
    %v415 = vld [vmem:[#allocation5 + $0x150] sm:$0xff]
    %v416 = vld [vmem:[#allocation5 + $0x158] sm:$0xff]
    %v417 = vld [vmem:[#allocation5 + $0x160] sm:$0xff]
    %v418 = vld [vmem:[#allocation5 + $0x168] sm:$0xff]
    %v419 = vld [vmem:[#allocation5 + $0x170] sm:$0xff]
    %v420 = vld [vmem:[#allocation5 + $0x178] sm:$0xff]
    %v421 = vld [vmem:[#allocation5 + $0x180] sm:$0xff]
    %v422 = vld [vmem:[#allocation5 + $0x188] sm:$0xff]
    %v423 = vld [vmem:[#allocation5 + $0x190] sm:$0xff]
    %v424 = vld [vmem:[#allocation5 + $0x198] sm:$0xff]
    %v425 = vld [vmem:[#allocation5 + $0x1a0] sm:$0xff]
    %v426 = vld [vmem:[#allocation5 + $0x1a8] sm:$0xff]
    %v427 = vld [vmem:[#allocation5 + $0x1b0] sm:$0xff]
    %v428 = vld [vmem:[#allocation5 + $0x1b8] sm:$0xff]
    %v429 = vld [vmem:[#allocation5 + $0x1c0] sm:$0xff]
    %v430 = vld [vmem:[#allocation5 + $0x1c8] sm:$0xff]
    %v431 = vld [vmem:[#allocation5 + $0x1d0] sm:$0xff]
    %v432 = vld [vmem:[#allocation5 + $0x1d8] sm:$0xff]
    %v433 = vld [vmem:[#allocation5 + $0x1e0] sm:$0xff]
    %v434 = vld [vmem:[#allocation5 + $0x1e8] sm:$0xff]
    %v435 = vld [vmem:[#allocation5 + $0x1f0] sm:$0xff]
    %v436 = vld [vmem:[#allocation5 + $0x1f8] sm:$0xff]
    %v437 = vld [vmem:[#allocation5 + $0x200] sm:$0xff]
    %v438 = vld [vmem:[#allocation5 + $0x208] sm:$0xff]
    %v439 = vld [vmem:[#allocation5 + $0x210] sm:$0xff]
    %v440 = vld [vmem:[#allocation5 + $0x218] sm:$0xff]
    %v441 = vld [vmem:[#allocation5 + $0x220] sm:$0xff]
    %v442 = vld [vmem:[#allocation5 + $0x228] sm:$0xff]
    %v443 = vld [vmem:[#allocation5 + $0x230] sm:$0xff]
    %v444 = vld [vmem:[#allocation5 + $0x238] sm:$0xff]
    %v445 = vld [vmem:[#allocation5 + $0x240] sm:$0xff]
    %v446 = vld [vmem:[#allocation5 + $0x248] sm:$0xff]
    %v447 = vld [vmem:[#allocation5 + $0x250] sm:$0xff]
    %v448 = vld [vmem:[#allocation5 + $0x258] sm:$0xff]
    %v449 = vld [vmem:[#allocation5 + $0x260] sm:$0xff]
    %v450 = vld [vmem:[#allocation5 + $0x268] sm:$0xff]
    %v451 = vld [vmem:[#allocation5 + $0x270] sm:$0xff]
    %v452 = vld [vmem:[#allocation5 + $0x278] sm:$0xff]
    %v453 = vld [vmem:[#allocation5 + $0x280] sm:$0xff]
    %v454 = vld [vmem:[#allocation5 + $0x288] sm:$0xff]
    %v455 = vld [vmem:[#allocation5 + $0x290] sm:$0xff]
    %v456 = vld [vmem:[#allocation5 + $0x298] sm:$0xff]
    %v457 = vld [vmem:[#allocation5 + $0x2a0] sm:$0xff]
    %v458 = vld [vmem:[#allocation5 + $0x2a8] sm:$0xff]
    %v459 = vld [vmem:[#allocation5 + $0x2b0] sm:$0xff]
    %v460 = vld [vmem:[#allocation5 + $0x2b8] sm:$0xff]
    %v461 = vld [vmem:[#allocation5 + $0x2c0] sm:$0xff]
    %v462 = vld [vmem:[#allocation5 + $0x2c8] sm:$0xff]
    %v463 = vld [vmem:[#allocation5 + $0x2d0] sm:$0xff]
    %v464 = vld [vmem:[#allocation5 + $0x2d8] sm:$0xff]
    %v465 = vld [vmem:[#allocation5 + $0x2e0] sm:$0xff]
    %v466 = vld [vmem:[#allocation5 + $0x2e8] sm:$0xff]
    %v467 = vld [vmem:[#allocation5 + $0x2f0] sm:$0xff]
    %v468 = vld [vmem:[#allocation5 + $0x2f8] sm:$0xff]
    %v469 = vld [vmem:[#allocation5 + $0x300] sm:$0xff]
    %v470 = vld [vmem:[#allocation5 + $0x308] sm:$0xff]
    %v471 = vld [vmem:[#allocation5 + $0x310] sm:$0xff]
    %v472 = vld [vmem:[#allocation5 + $0x318] sm:$0xff]
    %v473 = vld [vmem:[#allocation5 + $0x320] sm:$0xff]
    %v474 = vld [vmem:[#allocation5 + $0x328] sm:$0xff]
    %v475 = vld [vmem:[#allocation5 + $0x330] sm:$0xff]
    %v476 = vld [vmem:[#allocation5 + $0x338] sm:$0xff]
    %v477 = vld [vmem:[#allocation5 + $0x340] sm:$0xff]
    %v478 = vld [vmem:[#allocation5 + $0x348] sm:$0xff]
    %v479 = vld [vmem:[#allocation5 + $0x350] sm:$0xff]
    %v480 = vld [vmem:[#allocation5 + $0x358] sm:$0xff]
    %v481 = vld [vmem:[#allocation5 + $0x360] sm:$0xff]
    %v482 = vld [vmem:[#allocation5 + $0x368] sm:$0xff]
    %v483 = vld [vmem:[#allocation5 + $0x370] sm:$0xff]
    %v484 = vld [vmem:[#allocation5 + $0x378] sm:$0xff]
    %v485 = vld [vmem:[#allocation5 + $0x380] sm:$0xff]
    %v486 = vld [vmem:[#allocation5 + $0x388] sm:$0xff]
    %v487 = vld [vmem:[#allocation5 + $0x390] sm:$0xff]
    %v488 = vld [vmem:[#allocation5 + $0x398] sm:$0xff]
    %v489 = vld [vmem:[#allocation5 + $0x3a0] sm:$0xff]
    %v490 = vld [vmem:[#allocation5 + $0x3a8] sm:$0xff]
    %v491 = vld [vmem:[#allocation5 + $0x3b0] sm:$0xff]
    %v492 = vld [vmem:[#allocation5 + $0x3b8] sm:$0xff]
    %v493 = vld [vmem:[#allocation5 + $0x3c0] sm:$0xff]
    %v494 = vld [vmem:[#allocation5 + $0x3c8] sm:$0xff]
    %v495 = vld [vmem:[#allocation5 + $0x3d0] sm:$0xff]
    %v496 = vld [vmem:[#allocation5 + $0x3d8] sm:$0xff]
    %v497 = vld [vmem:[#allocation5 + $0x3e0] sm:$0xff]
    %v498 = vld [vmem:[#allocation5 + $0x3e8] sm:$0xff]
    %v499 = vld [vmem:[#allocation5 + $0x3f0] sm:$0xff]
    %v500 = vld [vmem:[#allocation5 + $0x3f8] sm:$0xff]
    %v501 = vld [vmem:[#allocation5 + $0x400] sm:$0xff]
    %v502 = vld [vmem:[#allocation5 + $0x408] sm:$0xff]
    %v503 = vld [vmem:[#allocation5 + $0x410] sm:$0xff]
    %v504 = vld [vmem:[#allocation5 + $0x418] sm:$0xff]
    %v505 = vld [vmem:[#allocation5 + $0x420] sm:$0xff]
    %v506 = vld [vmem:[#allocation5 + $0x428] sm:$0xff]
    %v507 = vld [vmem:[#allocation5 + $0x430] sm:$0xff]
    %v508 = vld [vmem:[#allocation5 + $0x438] sm:$0xff]
    %v509 = vld [vmem:[#allocation5 + $0x440] sm:$0xff]
    %v510 = vld [vmem:[#allocation5 + $0x448] sm:$0xff]
    %v511 = vld [vmem:[#allocation5 + $0x450] sm:$0xff]
    %v512 = vld [vmem:[#allocation5 + $0x458] sm:$0xff]
    %v513 = vld [vmem:[#allocation5 + $0x460] sm:$0xff]
    %v514 = vld [vmem:[#allocation5 + $0x468] sm:$0xff]
    %v515 = vld [vmem:[#allocation5 + $0x470] sm:$0xff]
    %v516 = vld [vmem:[#allocation5 + $0x478] sm:$0xff]
    %v517 = vld [vmem:[#allocation5 + $0x480] sm:$0xff]
    %v518 = vld [vmem:[#allocation5 + $0x488] sm:$0xff]
    %v519 = vld [vmem:[#allocation5 + $0x490] sm:$0xff]
    %v520 = vld [vmem:[#allocation5 + $0x498] sm:$0xff]
    %v521 = vld [vmem:[#allocation5 + $0x4a0] sm:$0xff]
    %v522 = vld [vmem:[#allocation5 + $0x4a8] sm:$0xff]
    %v523 = vld [vmem:[#allocation5 + $0x4b0] sm:$0xff]
    %v524 = vld [vmem:[#allocation5 + $0x4b8] sm:$0xff]
    %v525 = vld [vmem:[#allocation5 + $0x4c0] sm:$0xff]
    %v526 = vld [vmem:[#allocation5 + $0x4c8] sm:$0xff]
    %v527 = vld [vmem:[#allocation5 + $0x4d0] sm:$0xff]
    %v528 = vld [vmem:[#allocation5 + $0x4d8] sm:$0xff]
    %v529 = vld [vmem:[#allocation5 + $0x4e0] sm:$0xff]
    %v530 = vld [vmem:[#allocation5 + $0x4e8] sm:$0xff]
    %v531 = vld [vmem:[#allocation5 + $0x4f0] sm:$0xff]
    %v532 = vld [vmem:[#allocation5 + $0x4f8] sm:$0xff]
    %v533 = vld [vmem:[#allocation5 + $0x500] sm:$0xff]
    %v534 = vld [vmem:[#allocation5 + $0x508] sm:$0xff]
    %v535 = vld [vmem:[#allocation5 + $0x510] sm:$0xff]
    %v536 = vld [vmem:[#allocation5 + $0x518] sm:$0xff]
    %v537 = vld [vmem:[#allocation5 + $0x520] sm:$0xff]
    %v538 = vld [vmem:[#allocation5 + $0x528] sm:$0xff]
    %v539 = vld [vmem:[#allocation5 + $0x530] sm:$0xff]
    %v540 = vld [vmem:[#allocation5 + $0x538] sm:$0xff]
    %v541 = vld [vmem:[#allocation5 + $0x540] sm:$0xff]
    %v542 = vld [vmem:[#allocation5 + $0x548] sm:$0xff]
    %v543 = vld [vmem:[#allocation5 + $0x550] sm:$0xff]
    %v544 = vld [vmem:[#allocation5 + $0x558] sm:$0xff]
    %v545 = vld [vmem:[#allocation5 + $0x560] sm:$0xff]
    %v546 = vld [vmem:[#allocation5 + $0x568] sm:$0xff]
    %v547 = vld [vmem:[#allocation5 + $0x570] sm:$0xff]
    %v548 = vld [vmem:[#allocation5 + $0x578] sm:$0xff]
    %v549 = vld [vmem:[#allocation5 + $0x580] sm:$0xff]
    %v550 = vld [vmem:[#allocation5 + $0x588] sm:$0xff]
    %v551 = vld [vmem:[#allocation5 + $0x590] sm:$0xff]
    %v552 = vld [vmem:[#allocation5 + $0x598] sm:$0xff]
    %v553 = vld [vmem:[#allocation5 + $0x5a0] sm:$0xff]
    %v554 = vld [vmem:[#allocation5 + $0x5a8] sm:$0xff]
    %v555 = vld [vmem:[#allocation5 + $0x5b0] sm:$0xff]
    %v556 = vld [vmem:[#allocation5 + $0x5b8] sm:$0xff]
    %v557 = vld [vmem:[#allocation5 + $0x5c0] sm:$0xff]
    %v558 = vld [vmem:[#allocation5 + $0x5c8] sm:$0xff]
    %v559 = vld [vmem:[#allocation5 + $0x5d0] sm:$0xff]
    %v560 = vld [vmem:[#allocation5 + $0x5d8] sm:$0xff]
    %v561 = vld [vmem:[#allocation5 + $0x5e0] sm:$0xff]
    %v562 = vld [vmem:[#allocation5 + $0x5e8] sm:$0xff]
    %v563 = vld [vmem:[#allocation5 + $0x5f0] sm:$0xff]
    %v564 = vld [vmem:[#allocation5 + $0x5f8] sm:$0xff]
    %v565 = vld [vmem:[#allocation5 + $0x600] sm:$0xff]
    %v566 = vld [vmem:[#allocation5 + $0x608] sm:$0xff]
    %v567 = vld [vmem:[#allocation5 + $0x610] sm:$0xff]
    %v568 = vld [vmem:[#allocation5 + $0x618] sm:$0xff]
    %v569 = vld [vmem:[#allocation5 + $0x620] sm:$0xff]
    %v570 = vld [vmem:[#allocation5 + $0x628] sm:$0xff]
    %v571 = vld [vmem:[#allocation5 + $0x630] sm:$0xff]
    %v572 = vld [vmem:[#allocation5 + $0x638] sm:$0xff]
    %v573 = vld [vmem:[#allocation5 + $0x640] sm:$0xff]
    %v574 = vld [vmem:[#allocation5 + $0x648] sm:$0xff]
    %v575 = vld [vmem:[#allocation5 + $0x650] sm:$0xff]
    %v576 = vld [vmem:[#allocation5 + $0x658] sm:$0xff]
    %v577 = vld [vmem:[#allocation5 + $0x660] sm:$0xff]
    %v578 = vld [vmem:[#allocation5 + $0x668] sm:$0xff]
    %v579 = vld [vmem:[#allocation5 + $0x670] sm:$0xff]
    %v580 = vld [vmem:[#allocation5 + $0x678] sm:$0xff]
    %v581 = vld [vmem:[#allocation5 + $0x680] sm:$0xff]
    %v582 = vld [vmem:[#allocation5 + $0x688] sm:$0xff]
    %v583 = vld [vmem:[#allocation5 + $0x690] sm:$0xff]
    %v584 = vld [vmem:[#allocation5 + $0x698] sm:$0xff]
    %v585 = vld [vmem:[#allocation5 + $0x6a0] sm:$0xff]
    %v586 = vld [vmem:[#allocation5 + $0x6a8] sm:$0xff]
    %v587 = vld [vmem:[#allocation5 + $0x6b0] sm:$0xff]
    %v588 = vld [vmem:[#allocation5 + $0x6b8] sm:$0xff]
    %v589 = vld [vmem:[#allocation5 + $0x6c0] sm:$0xff]
    %v590 = vld [vmem:[#allocation5 + $0x6c8] sm:$0xff]
    %v591 = vld [vmem:[#allocation5 + $0x6d0] sm:$0xff]
    %v592 = vld [vmem:[#allocation5 + $0x6d8] sm:$0xff]
    %v593 = vld [vmem:[#allocation5 + $0x6e0] sm:$0xff]
    %v594 = vld [vmem:[#allocation5 + $0x6e8] sm:$0xff]
    %v595 = vld [vmem:[#allocation5 + $0x6f0] sm:$0xff]
    %v596 = vld [vmem:[#allocation5 + $0x6f8] sm:$0xff]
    %v597 = vld [vmem:[#allocation5 + $0x700] sm:$0xff]
    %v598 = vld [vmem:[#allocation5 + $0x708] sm:$0xff]
    %v599 = vld [vmem:[#allocation5 + $0x710] sm:$0xff]
    %v600 = vld [vmem:[#allocation5 + $0x718] sm:$0xff]
    %v601 = vld [vmem:[#allocation5 + $0x720] sm:$0xff]
    %v602 = vld [vmem:[#allocation5 + $0x728] sm:$0xff]
    %v603 = vld [vmem:[#allocation5 + $0x730] sm:$0xff]
    %v604 = vld [vmem:[#allocation5 + $0x738] sm:$0xff]
    %v605 = vld [vmem:[#allocation5 + $0x740] sm:$0xff]
    %v606 = vld [vmem:[#allocation5 + $0x748] sm:$0xff]
    %v607 = vld [vmem:[#allocation5 + $0x750] sm:$0xff]
    %v608 = vld [vmem:[#allocation5 + $0x758] sm:$0xff]
    %v609 = vld [vmem:[#allocation5 + $0x760] sm:$0xff]
    %v610 = vld [vmem:[#allocation5 + $0x768] sm:$0xff]
    %v611 = vld [vmem:[#allocation5 + $0x770] sm:$0xff]
    %v612 = vld [vmem:[#allocation5 + $0x778] sm:$0xff]
    %v613 = vld [vmem:[#allocation5 + $0x780] sm:$0xff]
    %v614 = vld [vmem:[#allocation5 + $0x788] sm:$0xff]
    %v615 = vld [vmem:[#allocation5 + $0x790] sm:$0xff]
    %v616 = vld [vmem:[#allocation5 + $0x798] sm:$0xff]
    %v617 = vld [vmem:[#allocation5 + $0x7a0] sm:$0xff]
    %v618 = vld [vmem:[#allocation5 + $0x7a8] sm:$0xff]
    %v619 = vld [vmem:[#allocation5 + $0x7b0] sm:$0xff]
    %v620 = vld [vmem:[#allocation5 + $0x7b8] sm:$0xff]
    %v621 = vld [vmem:[#allocation5 + $0x7c0] sm:$0xff]
    %v622 = vld [vmem:[#allocation5 + $0x7c8] sm:$0xff]
    %v623 = vld [vmem:[#allocation5 + $0x7d0] sm:$0xff]
    %v624 = vld [vmem:[#allocation5 + $0x7d8] sm:$0xff]
    %v625 = vld [vmem:[#allocation5 + $0x7e0] sm:$0xff]
    %v626 = vld [vmem:[#allocation5 + $0x7e8] sm:$0xff]
    %v627 = vld [vmem:[#allocation5 + $0x7f0] sm:$0xff]
    %v628 = vld [vmem:[#allocation5 + $0x7f8] sm:$0xff]
    %v629 = vld [vmem:[#allocation5 + $0x800] sm:$0xff]
    %v630 = vld [vmem:[#allocation5 + $0x808] sm:$0xff]
    %v631 = vld [vmem:[#allocation5 + $0x810] sm:$0xff]
    %v632 = vld [vmem:[#allocation5 + $0x818] sm:$0xff]
    %v633 = vld [vmem:[#allocation5 + $0x820] sm:$0xff]
    %v634 = vld [vmem:[#allocation5 + $0x828] sm:$0xff]
    %v635 = vld [vmem:[#allocation5 + $0x830] sm:$0xff]
    %v636 = vld [vmem:[#allocation5 + $0x838] sm:$0xff]
    %v637 = vld [vmem:[#allocation5 + $0x840] sm:$0xff]
    %v638 = vld [vmem:[#allocation5 + $0x848] sm:$0xff]
    %v639 = vld [vmem:[#allocation5 + $0x850] sm:$0xff]
    %v640 = vld [vmem:[#allocation5 + $0x858] sm:$0xff]
    %v641 = vld [vmem:[#allocation5 + $0x860] sm:$0xff]
    %v642 = vld [vmem:[#allocation5 + $0x868] sm:$0xff]
    %v643 = vld [vmem:[#allocation5 + $0x870] sm:$0xff]
    %v644 = vld [vmem:[#allocation5 + $0x878] sm:$0xff]
    %v645 = vld [vmem:[#allocation5 + $0x880] sm:$0xff]
    %v646 = vld [vmem:[#allocation5 + $0x888] sm:$0xff]
    %v647 = vld [vmem:[#allocation5 + $0x890] sm:$0xff]
    %v648 = vld [vmem:[#allocation5 + $0x898] sm:$0xff]
    %v649 = vld [vmem:[#allocation5 + $0x8a0] sm:$0xff]
    %v650 = vld [vmem:[#allocation5 + $0x8a8] sm:$0xff]
    %v651 = vld [vmem:[#allocation5 + $0x8b0] sm:$0xff]
    %v652 = vld [vmem:[#allocation5 + $0x8b8] sm:$0xff]
    %v653 = vld [vmem:[#allocation5 + $0x8c0] sm:$0xff]
    %v654 = vld [vmem:[#allocation5 + $0x8c8] sm:$0xff]
    %v655 = vld [vmem:[#allocation5 + $0x8d0] sm:$0xff]
    %v656 = vld [vmem:[#allocation5 + $0x8d8] sm:$0xff]
    %v657 = vld [vmem:[#allocation5 + $0x8e0] sm:$0xff]
    %v658 = vld [vmem:[#allocation5 + $0x8e8] sm:$0xff]
    %v659 = vld [vmem:[#allocation5 + $0x8f0] sm:$0xff]
    %v660 = vld [vmem:[#allocation5 + $0x8f8] sm:$0xff]
    %v661 = vld [vmem:[#allocation5 + $0x900] sm:$0xff]
    %v662 = vld [vmem:[#allocation5 + $0x908] sm:$0xff]
    %v663 = vld [vmem:[#allocation5 + $0x910] sm:$0xff]
    %v664 = vld [vmem:[#allocation5 + $0x918] sm:$0xff]
    %v665 = vld [vmem:[#allocation5 + $0x920] sm:$0xff]
    %v666 = vld [vmem:[#allocation5 + $0x928] sm:$0xff]
    %v667 = vld [vmem:[#allocation5 + $0x930] sm:$0xff]
    %v668 = vld [vmem:[#allocation5 + $0x938] sm:$0xff]
    %v669 = vld [vmem:[#allocation5 + $0x940] sm:$0xff]
    %v670 = vld [vmem:[#allocation5 + $0x948] sm:$0xff]
    %v671 = vld [vmem:[#allocation5 + $0x950] sm:$0xff]
    %v672 = vld [vmem:[#allocation5 + $0x958] sm:$0xff]
    %v673 = vld [vmem:[#allocation5 + $0x960] sm:$0xff]
    %v674 = vld [vmem:[#allocation5 + $0x968] sm:$0xff]
    %v675 = vld [vmem:[#allocation5 + $0x970] sm:$0xff]
    %v676 = vld [vmem:[#allocation5 + $0x978] sm:$0xff]
    %v677 = vld [vmem:[#allocation5 + $0x980] sm:$0xff]
    %v678 = vld [vmem:[#allocation5 + $0x988] sm:$0xff]
    %v679 = vld [vmem:[#allocation5 + $0x990] sm:$0xff]
    %v680 = vld [vmem:[#allocation5 + $0x998] sm:$0xff]
    %v681 = vld [vmem:[#allocation5 + $0x9a0] sm:$0xff]
    %v682 = vld [vmem:[#allocation5 + $0x9a8] sm:$0xff]
    %v683 = vld [vmem:[#allocation5 + $0x9b0] sm:$0xff]
    %v684 = vld [vmem:[#allocation5 + $0x9b8] sm:$0xff]
    %v685 = vld [vmem:[#allocation5 + $0x9c0] sm:$0xff]
    %v686 = vld [vmem:[#allocation5 + $0x9c8] sm:$0xff]
    %v687 = vld [vmem:[#allocation5 + $0x9d0] sm:$0xff]
    %v688 = vld [vmem:[#allocation5 + $0x9d8] sm:$0xff]
    %v689 = vld [vmem:[#allocation5 + $0x9e0] sm:$0xff]
    %v690 = vld [vmem:[#allocation5 + $0x9e8] sm:$0xff]
    %v691 = vld [vmem:[#allocation5 + $0x9f0] sm:$0xff]
    %v692 = vld [vmem:[#allocation5 + $0x9f8] sm:$0xff]
    %v693 = vld [vmem:[#allocation5 + $0xa00] sm:$0xff]
    %v694 = vld [vmem:[#allocation5 + $0xa08] sm:$0xff]
    %v695 = vld [vmem:[#allocation5 + $0xa10] sm:$0xff]
    %v696 = vld [vmem:[#allocation5 + $0xa18] sm:$0xff]
    %v697 = vld [vmem:[#allocation5 + $0xa20] sm:$0xff]
    %v698 = vld [vmem:[#allocation5 + $0xa28] sm:$0xff]
    %v699 = vld [vmem:[#allocation5 + $0xa30] sm:$0xff]
    %v700 = vld [vmem:[#allocation5 + $0xa38] sm:$0xff]
    %v701 = vld [vmem:[#allocation5 + $0xa40] sm:$0xff]
    %v702 = vld [vmem:[#allocation5 + $0xa48] sm:$0xff]
    %v703 = vld [vmem:[#allocation5 + $0xa50] sm:$0xff]
    %v704 = vld [vmem:[#allocation5 + $0xa58] sm:$0xff]
    %v705 = vld [vmem:[#allocation5 + $0xa60] sm:$0xff]
    %v706 = vld [vmem:[#allocation5 + $0xa68] sm:$0xff]
    %v707 = vld [vmem:[#allocation5 + $0xa70] sm:$0xff]
    %v708 = vld [vmem:[#allocation5 + $0xa78] sm:$0xff]
    %v709 = vld [vmem:[#allocation5 + $0xa80] sm:$0xff]
    %v710 = vld [vmem:[#allocation5 + $0xa88] sm:$0xff]
    %v711 = vld [vmem:[#allocation5 + $0xa90] sm:$0xff]
    %v712 = vld [vmem:[#allocation5 + $0xa98] sm:$0xff]
    %v713 = vld [vmem:[#allocation5 + $0xaa0] sm:$0xff]
    %v714 = vld [vmem:[#allocation5 + $0xaa8] sm:$0xff]
    %v715 = vld [vmem:[#allocation5 + $0xab0] sm:$0xff]
    %v716 = vld [vmem:[#allocation5 + $0xab8] sm:$0xff]
    %v717 = vld [vmem:[#allocation5 + $0xac0] sm:$0xff]
    %v718 = vld [vmem:[#allocation5 + $0xac8] sm:$0xff]
    %v719 = vld [vmem:[#allocation5 + $0xad0] sm:$0xff]
    %v720 = vld [vmem:[#allocation5 + $0xad8] sm:$0xff]
    %v721 = vld [vmem:[#allocation5 + $0xae0] sm:$0xff]
    %v722 = vld [vmem:[#allocation5 + $0xae8] sm:$0xff]
    %v723 = vld [vmem:[#allocation5 + $0xaf0] sm:$0xff]
    %v724 = vld [vmem:[#allocation5 + $0xaf8] sm:$0xff]
    %v725 = vld [vmem:[#allocation5 + $0xb00] sm:$0xff]
    %v726 = vld [vmem:[#allocation5 + $0xb08] sm:$0xff]
    %v727 = vld [vmem:[#allocation5 + $0xb10] sm:$0xff]
    %v728 = vld [vmem:[#allocation5 + $0xb18] sm:$0xff]
    %v729 = vld [vmem:[#allocation5 + $0xb20] sm:$0xff]
    %v730 = vld [vmem:[#allocation5 + $0xb28] sm:$0xff]
    %v731 = vld [vmem:[#allocation5 + $0xb30] sm:$0xff]
    %v732 = vld [vmem:[#allocation5 + $0xb38] sm:$0xff]
    %v733 = vld [vmem:[#allocation5 + $0xb40] sm:$0xff]
    %v734 = vld [vmem:[#allocation5 + $0xb48] sm:$0xff]
    %v735 = vld [vmem:[#allocation5 + $0xb50] sm:$0xff]
    %v736 = vld [vmem:[#allocation5 + $0xb58] sm:$0xff]
    %v737 = vld [vmem:[#allocation5 + $0xb60] sm:$0xff]
    %v738 = vld [vmem:[#allocation5 + $0xb68] sm:$0xff]
    %v739 = vld [vmem:[#allocation5 + $0xb70] sm:$0xff]
    %v740 = vld [vmem:[#allocation5 + $0xb78] sm:$0xff]
    %v741 = vld [vmem:[#allocation5 + $0xb80] sm:$0xff]
    %v742 = vld [vmem:[#allocation5 + $0xb88] sm:$0xff]
    %v743 = vld [vmem:[#allocation5 + $0xb90] sm:$0xff]
    %v744 = vld [vmem:[#allocation5 + $0xb98] sm:$0xff]
    %v745 = vld [vmem:[#allocation5 + $0xba0] sm:$0xff]
    %v746 = vld [vmem:[#allocation5 + $0xba8] sm:$0xff]
    %v747 = vld [vmem:[#allocation5 + $0xbb0] sm:$0xff]
    %v748 = vld [vmem:[#allocation5 + $0xbb8] sm:$0xff]
    %v749 = vld [vmem:[#allocation5 + $0xbc0] sm:$0xff]
    %v750 = vld [vmem:[#allocation5 + $0xbc8] sm:$0xff]
    %v751 = vld [vmem:[#allocation5 + $0xbd0] sm:$0xff]
    %v752 = vld [vmem:[#allocation5 + $0xbd8] sm:$0xff]
    %v753 = vld [vmem:[#allocation5 + $0xbe0] sm:$0xff]
    %v754 = vld [vmem:[#allocation5 + $0xbe8] sm:$0xff]
    %v755 = vld [vmem:[#allocation5 + $0xbf0] sm:$0xff]
    %v756 = vld [vmem:[#allocation5 + $0xbf8] sm:$0xff]
    %v757 = vld [vmem:[#allocation5 + $0xc00] sm:$0xff]
    %v758 = vld [vmem:[#allocation5 + $0xc08] sm:$0xff]
    %v759 = vld [vmem:[#allocation5 + $0xc10] sm:$0xff]
    %v760 = vld [vmem:[#allocation5 + $0xc18] sm:$0xff]
    %v761 = vld [vmem:[#allocation5 + $0xc20] sm:$0xff]
    %v762 = vld [vmem:[#allocation5 + $0xc28] sm:$0xff]
    %v763 = vld [vmem:[#allocation5 + $0xc30] sm:$0xff]
    %v764 = vld [vmem:[#allocation5 + $0xc38] sm:$0xff]
    %v765 = vld [vmem:[#allocation5 + $0xc40] sm:$0xff]
    %v766 = vld [vmem:[#allocation5 + $0xc48] sm:$0xff]
    %v767 = vld [vmem:[#allocation5 + $0xc50] sm:$0xff]
    %v768 = vld [vmem:[#allocation5 + $0xc58] sm:$0xff]
    %v769 = vld [vmem:[#allocation5 + $0xc60] sm:$0xff]
    %v770 = vld [vmem:[#allocation5 + $0xc68] sm:$0xff]
    %v771 = vld [vmem:[#allocation5 + $0xc70] sm:$0xff]
    %v772 = vld [vmem:[#allocation5 + $0xc78] sm:$0xff]
    %v773 = vld [vmem:[#allocation5 + $0xc80] sm:$0xff]
    %v774 = vld [vmem:[#allocation5 + $0xc88] sm:$0xff]
    %v775 = vld [vmem:[#allocation5 + $0xc90] sm:$0xff]
    %v776 = vld [vmem:[#allocation5 + $0xc98] sm:$0xff]
    %v777 = vld [vmem:[#allocation5 + $0xca0] sm:$0xff]
    %v778 = vld [vmem:[#allocation5 + $0xca8] sm:$0xff]
    %v779 = vld [vmem:[#allocation5 + $0xcb0] sm:$0xff]
    %v780 = vld [vmem:[#allocation5 + $0xcb8] sm:$0xff]
    %v781 = vld [vmem:[#allocation5 + $0xcc0] sm:$0xff]
    %v782 = vld [vmem:[#allocation5 + $0xcc8] sm:$0xff]
    %v783 = vld [vmem:[#allocation5 + $0xcd0] sm:$0xff]
    %v784 = vld [vmem:[#allocation5 + $0xcd8] sm:$0xff]
    %v785 = vld [vmem:[#allocation5 + $0xce0] sm:$0xff]
    %v786 = vld [vmem:[#allocation5 + $0xce8] sm:$0xff]
    %v787 = vld [vmem:[#allocation5 + $0xcf0] sm:$0xff]
    %v788 = vld [vmem:[#allocation5 + $0xcf8] sm:$0xff]
    %v789 = vld [vmem:[#allocation5 + $0xd00] sm:$0xff]
    %v790 = vld [vmem:[#allocation5 + $0xd08] sm:$0xff]
    %v791 = vld [vmem:[#allocation5 + $0xd10] sm:$0xff]
    %v792 = vld [vmem:[#allocation5 + $0xd18] sm:$0xff]
    %v793 = vld [vmem:[#allocation5 + $0xd20] sm:$0xff]
    %v794 = vld [vmem:[#allocation5 + $0xd28] sm:$0xff]
    %v795 = vld [vmem:[#allocation5 + $0xd30] sm:$0xff]
    %v796 = vld [vmem:[#allocation5 + $0xd38] sm:$0xff]
    %v797 = vld [vmem:[#allocation5 + $0xd40] sm:$0xff]
    %v798 = vld [vmem:[#allocation5 + $0xd48] sm:$0xff]
    %v799 = vld [vmem:[#allocation5 + $0xd50] sm:$0xff]
    %v800 = vld [vmem:[#allocation5 + $0xd58] sm:$0xff]
    %v801 = vld [vmem:[#allocation5 + $0xd60] sm:$0xff]
    %v802 = vld [vmem:[#allocation5 + $0xd68] sm:$0xff]
    %v803 = vld [vmem:[#allocation5 + $0xd70] sm:$0xff]
    %v804 = vld [vmem:[#allocation5 + $0xd78] sm:$0xff]
    %v805 = vld [vmem:[#allocation5 + $0xd80] sm:$0xff]
    %v806 = vld [vmem:[#allocation5 + $0xd88] sm:$0xff]
    %v807 = vld [vmem:[#allocation5 + $0xd90] sm:$0xff]
    %v808 = vld [vmem:[#allocation5 + $0xd98] sm:$0xff]
    %v809 = vld [vmem:[#allocation5 + $0xda0] sm:$0xff]
    %v810 = vld [vmem:[#allocation5 + $0xda8] sm:$0xff]
    %v811 = vld [vmem:[#allocation5 + $0xdb0] sm:$0xff]
    %v812 = vld [vmem:[#allocation5 + $0xdb8] sm:$0xff]
    %v813 = vld [vmem:[#allocation5 + $0xdc0] sm:$0xff]
    %v814 = vld [vmem:[#allocation5 + $0xdc8] sm:$0xff]
    %v815 = vld [vmem:[#allocation5 + $0xdd0] sm:$0xff]
    %v816 = vld [vmem:[#allocation5 + $0xdd8] sm:$0xff]
    %v817 = vld [vmem:[#allocation5 + $0xde0] sm:$0xff]
    %v818 = vld [vmem:[#allocation5 + $0xde8] sm:$0xff]
    %v819 = vld [vmem:[#allocation5 + $0xdf0] sm:$0xff]
    %v820 = vld [vmem:[#allocation5 + $0xdf8] sm:$0xff]
    %v821 = vld [vmem:[#allocation5 + $0xe00] sm:$0xff]
    %v822 = vld [vmem:[#allocation5 + $0xe08] sm:$0xff]
    %v823 = vld [vmem:[#allocation5 + $0xe10] sm:$0xff]
    %v824 = vld [vmem:[#allocation5 + $0xe18] sm:$0xff]
    %v825 = vld [vmem:[#allocation5 + $0xe20] sm:$0xff]
    %v826 = vld [vmem:[#allocation5 + $0xe28] sm:$0xff]
    %v827 = vld [vmem:[#allocation5 + $0xe30] sm:$0xff]
    %v828 = vld [vmem:[#allocation5 + $0xe38] sm:$0xff]
    %v829 = vld [vmem:[#allocation5 + $0xe40] sm:$0xff]
    %v830 = vld [vmem:[#allocation5 + $0xe48] sm:$0xff]
    %v831 = vld [vmem:[#allocation5 + $0xe50] sm:$0xff]
    %v832 = vld [vmem:[#allocation5 + $0xe58] sm:$0xff]
    %v833 = vld [vmem:[#allocation5 + $0xe60] sm:$0xff]
    %v834 = vld [vmem:[#allocation5 + $0xe68] sm:$0xff]
    %v835 = vld [vmem:[#allocation5 + $0xe70] sm:$0xff]
    %v836 = vld [vmem:[#allocation5 + $0xe78] sm:$0xff]
    %v837 = vld [vmem:[#allocation5 + $0xe80] sm:$0xff]
    %v838 = vld [vmem:[#allocation5 + $0xe88] sm:$0xff]
    %v839 = vld [vmem:[#allocation5 + $0xe90] sm:$0xff]
    %v840 = vld [vmem:[#allocation5 + $0xe98] sm:$0xff]
    %v841 = vld [vmem:[#allocation5 + $0xea0] sm:$0xff]
    %v842 = vld [vmem:[#allocation5 + $0xea8] sm:$0xff]
    %v843 = vld [vmem:[#allocation5 + $0xeb0] sm:$0xff]
    %v844 = vld [vmem:[#allocation5 + $0xeb8] sm:$0xff]
    %v845 = vld [vmem:[#allocation5 + $0xec0] sm:$0xff]
    %v846 = vld [vmem:[#allocation5 + $0xec8] sm:$0xff]
    %v847 = vld [vmem:[#allocation5 + $0xed0] sm:$0xff]
    %v848 = vld [vmem:[#allocation5 + $0xed8] sm:$0xff]
    %v849 = vld [vmem:[#allocation5 + $0xee0] sm:$0xff]
    %v850 = vld [vmem:[#allocation5 + $0xee8] sm:$0xff]
    %v851 = vld [vmem:[#allocation5 + $0xef0] sm:$0xff]
    %v852 = vld [vmem:[#allocation5 + $0xef8] sm:$0xff]
    %v853 = vld [vmem:[#allocation5 + $0xf00] sm:$0xff]
    %v854 = vld [vmem:[#allocation5 + $0xf08] sm:$0xff]
    %v855 = vld [vmem:[#allocation5 + $0xf10] sm:$0xff]
    %v856 = vld [vmem:[#allocation5 + $0xf18] sm:$0xff]
    %v857 = vld [vmem:[#allocation5 + $0xf20] sm:$0xff]
    %v858 = vld [vmem:[#allocation5 + $0xf28] sm:$0xff]
    %v859 = vld [vmem:[#allocation5 + $0xf30] sm:$0xff]
    %v860 = vld [vmem:[#allocation5 + $0xf38] sm:$0xff]
    %v861 = vld [vmem:[#allocation5 + $0xf40] sm:$0xff]
    %v862 = vld [vmem:[#allocation5 + $0xf48] sm:$0xff]
    %v863 = vld [vmem:[#allocation5 + $0xf50] sm:$0xff]
    %v864 = vld [vmem:[#allocation5 + $0xf58] sm:$0xff]
    %v865 = vld [vmem:[#allocation5 + $0xf60] sm:$0xff]
    %v866 = vld [vmem:[#allocation5 + $0xf68] sm:$0xff]
    %v867 = vld [vmem:[#allocation5 + $0xf70] sm:$0xff]
    %v868 = vld [vmem:[#allocation5 + $0xf78] sm:$0xff]
    %v869 = vld [vmem:[#allocation5 + $0xf80] sm:$0xff]
    %v870 = vld [vmem:[#allocation5 + $0xf88] sm:$0xff]
    %v871 = vld [vmem:[#allocation5 + $0xf90] sm:$0xff]
    %v872 = vld [vmem:[#allocation5 + $0xf98] sm:$0xff]
    %v873 = vld [vmem:[#allocation5 + $0xfa0] sm:$0xff]
    %v874 = vld [vmem:[#allocation5 + $0xfa8] sm:$0xff]
    %v875 = vld [vmem:[#allocation5 + $0xfb0] sm:$0xff]
    %v876 = vld [vmem:[#allocation5 + $0xfb8] sm:$0xff]
    %v877 = vld [vmem:[#allocation5 + $0xfc0] sm:$0xff]
    %v878 = vld [vmem:[#allocation5 + $0xfc8] sm:$0xff]
    %v879 = vld [vmem:[#allocation5 + $0xfd0] sm:$0xff]
    %v880 = vld [vmem:[#allocation5 + $0xfd8] sm:$0xff]
    %v881 = vld [vmem:[#allocation5 + $0xfe0] sm:$0xff]
    %v882 = vld [vmem:[#allocation5 + $0xfe8] sm:$0xff]
    %v883 = vld [vmem:[#allocation5 + $0xff0] sm:$0xff]
    %v884 = vld [vmem:[#allocation5 + $0xff8] sm:$0xff]
    %887 = vst [vmem:[#allocation1] ss:$4 sm:$0xff] %v371
    %s888 = scalar_lea.vmem [#allocation1], 32
    %889 = vst [vmem:[%s888] ss:$4 sm:$0xff] %v372
    %v890 = vld.sshfl [vmem:[#allocation1] sm:$0xff pattern:$0x73625140]
    %v891 = vld.sshfl [vmem:[#allocation1 + $0x8] sm:$0xff pattern:$0x73625140]
    %v892 = vld.sshfl [vmem:[#allocation1 + $0x10] sm:$0xff pattern:$0x73625140]
    %v893 = vld.sshfl [vmem:[#allocation1 + $0x18] sm:$0xff pattern:$0x73625140]
    %v894 = vld.sshfl [vmem:[#allocation1 + $0x20] sm:$0xff pattern:$0x73625140]
    %v895 = vld.sshfl [vmem:[#allocation1 + $0x28] sm:$0xff pattern:$0x73625140]
    %v896 = vld.sshfl [vmem:[#allocation1 + $0x30] sm:$0xff pattern:$0x73625140]
    %v897 = vld.sshfl [vmem:[#allocation1 + $0x38] sm:$0xff pattern:$0x73625140]
    %906 = vmatpush.msra.mxu0 %v433
    %907 = vmatpush.msra.mxu0 %v429
    %908 = vmatpush.msra.mxu0 %v425
    %909 = vmatpush.msra.mxu0 %v421
    %910 = vmatpush.msra.mxu0 %v417
    %911 = vmatpush.msra.mxu0 %v413
    %912 = vmatpush.msra.mxu0 %v409
    %913 = vmatpush.msra.mxu0 %v405
    %914 = vmatpush.msra.mxu0 %v401
    %915 = vmatpush.msra.mxu0 %v397
    %916 = vmatpush.msra.mxu0 %v393
    %917 = vmatpush.msra.mxu0 %v389
    %918 = vmatpush.msra.mxu0 %v385
    %919 = vmatpush.msra.mxu0 %v381
    %920 = vmatpush.msra.mxu0 %v377
    %921 = vmatpush.msra.mxu0 %v373
    %922 = vmatmul.f32.gmra.mxu0 %v890
    %v923 = vpop.f32.mrf.mxu0
    %v924 = vadd.f32 0.0, %v923
    %925 = vdwg.mxu0
    %926 = vmatpush.msra.mxu0 %v497
    %927 = vmatpush.msra.mxu0 %v493
    %928 = vmatpush.msra.mxu0 %v489
    %929 = vmatpush.msra.mxu0 %v485
    %930 = vmatpush.msra.mxu0 %v481
    %931 = vmatpush.msra.mxu0 %v477
    %932 = vmatpush.msra.mxu0 %v473
    %933 = vmatpush.msra.mxu0 %v469
    %934 = vmatpush.msra.mxu0 %v465
    %935 = vmatpush.msra.mxu0 %v461
    %936 = vmatpush.msra.mxu0 %v457
    %937 = vmatpush.msra.mxu0 %v453
    %938 = vmatpush.msra.mxu0 %v449
    %939 = vmatpush.msra.mxu0 %v445
    %940 = vmatpush.msra.mxu0 %v441
    %941 = vmatpush.msra.mxu0 %v437
    %942 = vmatmul.f32.gmra.mxu0 %v891
    %v943 = vpop.f32.mrf.mxu0
    %v944 = vadd.f32 %v924, %v943
    %945 = vdwg.mxu0
    %946 = vmatpush.msra.mxu0 %v561
    %947 = vmatpush.msra.mxu0 %v557
    %948 = vmatpush.msra.mxu0 %v553
    %949 = vmatpush.msra.mxu0 %v549
    %950 = vmatpush.msra.mxu0 %v545
    %951 = vmatpush.msra.mxu0 %v541
    %952 = vmatpush.msra.mxu0 %v537
    %953 = vmatpush.msra.mxu0 %v533
    %954 = vmatpush.msra.mxu0 %v529
    %955 = vmatpush.msra.mxu0 %v525
    %956 = vmatpush.msra.mxu0 %v521
    %957 = vmatpush.msra.mxu0 %v517
    %958 = vmatpush.msra.mxu0 %v513
    %959 = vmatpush.msra.mxu0 %v509
    %960 = vmatpush.msra.mxu0 %v505
    %961 = vmatpush.msra.mxu0 %v501
    %962 = vmatmul.f32.gmra.mxu0 %v892
    %v963 = vpop.f32.mrf.mxu0
    %v964 = vadd.f32 %v944, %v963
    %965 = vdwg.mxu0
    %966 = vmatpush.msra.mxu0 %v625
    %967 = vmatpush.msra.mxu0 %v621
    %968 = vmatpush.msra.mxu0 %v617
    %969 = vmatpush.msra.mxu0 %v613
    %970 = vmatpush.msra.mxu0 %v609
    %971 = vmatpush.msra.mxu0 %v605
    %972 = vmatpush.msra.mxu0 %v601
    %973 = vmatpush.msra.mxu0 %v597
    %974 = vmatpush.msra.mxu0 %v593
    %975 = vmatpush.msra.mxu0 %v589
    %976 = vmatpush.msra.mxu0 %v585
    %977 = vmatpush.msra.mxu0 %v581
    %978 = vmatpush.msra.mxu0 %v577
    %979 = vmatpush.msra.mxu0 %v573
    %980 = vmatpush.msra.mxu0 %v569
    %981 = vmatpush.msra.mxu0 %v565
    %982 = vmatmul.f32.gmra.mxu0 %v893
    %v983 = vpop.f32.mrf.mxu0
    %v984 = vadd.f32 %v964, %v983
    %985 = vdwg.mxu0
    %986 = vmatpush.msra.mxu0 %v689
    %987 = vmatpush.msra.mxu0 %v685
    %988 = vmatpush.msra.mxu0 %v681
    %989 = vmatpush.msra.mxu0 %v677
    %990 = vmatpush.msra.mxu0 %v673
    %991 = vmatpush.msra.mxu0 %v669
    %992 = vmatpush.msra.mxu0 %v665
    %993 = vmatpush.msra.mxu0 %v661
    %994 = vmatpush.msra.mxu0 %v657
    %995 = vmatpush.msra.mxu0 %v653
    %996 = vmatpush.msra.mxu0 %v649
    %997 = vmatpush.msra.mxu0 %v645
    %998 = vmatpush.msra.mxu0 %v641
    %999 = vmatpush.msra.mxu0 %v637
    %1000 = vmatpush.msra.mxu0 %v633
    %1001 = vmatpush.msra.mxu0 %v629
    %1002 = vmatmul.f32.gmra.mxu0 %v894
    %v1003 = vpop.f32.mrf.mxu0
    %v1004 = vadd.f32 %v984, %v1003
    %1005 = vdwg.mxu0
    %1006 = vmatpush.msra.mxu0 %v753
    %1007 = vmatpush.msra.mxu0 %v749
    %1008 = vmatpush.msra.mxu0 %v745
    %1009 = vmatpush.msra.mxu0 %v741
    %1010 = vmatpush.msra.mxu0 %v737
    %1011 = vmatpush.msra.mxu0 %v733
    %1012 = vmatpush.msra.mxu0 %v729
    %1013 = vmatpush.msra.mxu0 %v725
    %1014 = vmatpush.msra.mxu0 %v721
    %1015 = vmatpush.msra.mxu0 %v717
    %1016 = vmatpush.msra.mxu0 %v713
    %1017 = vmatpush.msra.mxu0 %v709
    %1018 = vmatpush.msra.mxu0 %v705
    %1019 = vmatpush.msra.mxu0 %v701
    %1020 = vmatpush.msra.mxu0 %v697
    %1021 = vmatpush.msra.mxu0 %v693
    %1022 = vmatmul.f32.gmra.mxu0 %v895
    %v1023 = vpop.f32.mrf.mxu0
    %v1024 = vadd.f32 %v1004, %v1023
    %1025 = vdwg.mxu0
    %1026 = vmatpush.msra.mxu0 %v817
    %1027 = vmatpush.msra.mxu0 %v813
    %1028 = vmatpush.msra.mxu0 %v809
    %1029 = vmatpush.msra.mxu0 %v805
    %1030 = vmatpush.msra.mxu0 %v801
    %1031 = vmatpush.msra.mxu0 %v797
    %1032 = vmatpush.msra.mxu0 %v793
    %1033 = vmatpush.msra.mxu0 %v789
    %1034 = vmatpush.msra.mxu0 %v785
    %1035 = vmatpush.msra.mxu0 %v781
    %1036 = vmatpush.msra.mxu0 %v777
    %1037 = vmatpush.msra.mxu0 %v773
    %1038 = vmatpush.msra.mxu0 %v769
    %1039 = vmatpush.msra.mxu0 %v765
    %1040 = vmatpush.msra.mxu0 %v761
    %1041 = vmatpush.msra.mxu0 %v757
    %1042 = vmatmul.f32.gmra.mxu0 %v896
    %v1043 = vpop.f32.mrf.mxu0
    %v1044 = vadd.f32 %v1024, %v1043
    %1045 = vdwg.mxu0
    %1046 = vmatpush.msra.mxu0 %v881
    %1047 = vmatpush.msra.mxu0 %v877
    %1048 = vmatpush.msra.mxu0 %v873
    %1049 = vmatpush.msra.mxu0 %v869
    %1050 = vmatpush.msra.mxu0 %v865
    %1051 = vmatpush.msra.mxu0 %v861
    %1052 = vmatpush.msra.mxu0 %v857
    %1053 = vmatpush.msra.mxu0 %v853
    %1054 = vmatpush.msra.mxu0 %v849
    %1055 = vmatpush.msra.mxu0 %v845
    %1056 = vmatpush.msra.mxu0 %v841
    %1057 = vmatpush.msra.mxu0 %v837
    %1058 = vmatpush.msra.mxu0 %v833
    %1059 = vmatpush.msra.mxu0 %v829
    %1060 = vmatpush.msra.mxu0 %v825
    %1061 = vmatpush.msra.mxu0 %v821
    %1062 = vmatmul.f32.gmra.mxu0 %v897
    %v1063 = vpop.f32.mrf.mxu0
    %v1064 = vadd.f32 %v1044, %v1063
    %1065 = vdwg.mxu0
    %1066 = vmatpush.msra.mxu0 %v434
    %1067 = vmatpush.msra.mxu0 %v430
    %1068 = vmatpush.msra.mxu0 %v426
    %1069 = vmatpush.msra.mxu0 %v422
    %1070 = vmatpush.msra.mxu0 %v418
    %1071 = vmatpush.msra.mxu0 %v414
    %1072 = vmatpush.msra.mxu0 %v410
    %1073 = vmatpush.msra.mxu0 %v406
    %1074 = vmatpush.msra.mxu0 %v402
    %1075 = vmatpush.msra.mxu0 %v398
    %1076 = vmatpush.msra.mxu0 %v394
    %1077 = vmatpush.msra.mxu0 %v390
    %1078 = vmatpush.msra.mxu0 %v386
    %1079 = vmatpush.msra.mxu0 %v382
    %1080 = vmatpush.msra.mxu0 %v378
    %1081 = vmatpush.msra.mxu0 %v374
    %1082 = vmatmul.f32.gmra.mxu0 %v890
    %v1083 = vpop.f32.mrf.mxu0
    %v1084 = vadd.f32 0.0, %v1083
    %1085 = vdwg.mxu0
    %1086 = vmatpush.msra.mxu0 %v498
    %1087 = vmatpush.msra.mxu0 %v494
    %1088 = vmatpush.msra.mxu0 %v490
    %1089 = vmatpush.msra.mxu0 %v486
    %1090 = vmatpush.msra.mxu0 %v482
    %1091 = vmatpush.msra.mxu0 %v478
    %1092 = vmatpush.msra.mxu0 %v474
    %1093 = vmatpush.msra.mxu0 %v470
    %1094 = vmatpush.msra.mxu0 %v466
    %1095 = vmatpush.msra.mxu0 %v462
    %1096 = vmatpush.msra.mxu0 %v458
    %1097 = vmatpush.msra.mxu0 %v454
    %1098 = vmatpush.msra.mxu0 %v450
    %1099 = vmatpush.msra.mxu0 %v446
    %1100 = vmatpush.msra.mxu0 %v442
    %1101 = vmatpush.msra.mxu0 %v438
    %1102 = vmatmul.f32.gmra.mxu0 %v891
    %v1103 = vpop.f32.mrf.mxu0
    %v1104 = vadd.f32 %v1084, %v1103
    %1105 = vdwg.mxu0
    %1106 = vmatpush.msra.mxu0 %v562
    %1107 = vmatpush.msra.mxu0 %v558
    %1108 = vmatpush.msra.mxu0 %v554
    %1109 = vmatpush.msra.mxu0 %v550
    %1110 = vmatpush.msra.mxu0 %v546
    %1111 = vmatpush.msra.mxu0 %v542
    %1112 = vmatpush.msra.mxu0 %v538
    %1113 = vmatpush.msra.mxu0 %v534
    %1114 = vmatpush.msra.mxu0 %v530
    %1115 = vmatpush.msra.mxu0 %v526
    %1116 = vmatpush.msra.mxu0 %v522
    %1117 = vmatpush.msra.mxu0 %v518
    %1118 = vmatpush.msra.mxu0 %v514
    %1119 = vmatpush.msra.mxu0 %v510
    %1120 = vmatpush.msra.mxu0 %v506
    %1121 = vmatpush.msra.mxu0 %v502
    %1122 = vmatmul.f32.gmra.mxu0 %v892
    %v1123 = vpop.f32.mrf.mxu0
    %v1124 = vadd.f32 %v1104, %v1123
    %1125 = vdwg.mxu0
    %1126 = vmatpush.msra.mxu0 %v626
    %1127 = vmatpush.msra.mxu0 %v622
    %1128 = vmatpush.msra.mxu0 %v618
    %1129 = vmatpush.msra.mxu0 %v614
    %1130 = vmatpush.msra.mxu0 %v610
    %1131 = vmatpush.msra.mxu0 %v606
    %1132 = vmatpush.msra.mxu0 %v602
    %1133 = vmatpush.msra.mxu0 %v598
    %1134 = vmatpush.msra.mxu0 %v594
    %1135 = vmatpush.msra.mxu0 %v590
    %1136 = vmatpush.msra.mxu0 %v586
    %1137 = vmatpush.msra.mxu0 %v582
    %1138 = vmatpush.msra.mxu0 %v578
    %1139 = vmatpush.msra.mxu0 %v574
    %1140 = vmatpush.msra.mxu0 %v570
    %1141 = vmatpush.msra.mxu0 %v566
    %1142 = vmatmul.f32.gmra.mxu0 %v893
    %v1143 = vpop.f32.mrf.mxu0
    %v1144 = vadd.f32 %v1124, %v1143
    %1145 = vdwg.mxu0
    %1146 = vmatpush.msra.mxu0 %v690
    %1147 = vmatpush.msra.mxu0 %v686
    %1148 = vmatpush.msra.mxu0 %v682
    %1149 = vmatpush.msra.mxu0 %v678
    %1150 = vmatpush.msra.mxu0 %v674
    %1151 = vmatpush.msra.mxu0 %v670
    %1152 = vmatpush.msra.mxu0 %v666
    %1153 = vmatpush.msra.mxu0 %v662
    %1154 = vmatpush.msra.mxu0 %v658
    %1155 = vmatpush.msra.mxu0 %v654
    %1156 = vmatpush.msra.mxu0 %v650
    %1157 = vmatpush.msra.mxu0 %v646
    %1158 = vmatpush.msra.mxu0 %v642
    %1159 = vmatpush.msra.mxu0 %v638
    %1160 = vmatpush.msra.mxu0 %v634
    %1161 = vmatpush.msra.mxu0 %v630
    %1162 = vmatmul.f32.gmra.mxu0 %v894
    %v1163 = vpop.f32.mrf.mxu0
    %v1164 = vadd.f32 %v1144, %v1163
    %1165 = vdwg.mxu0
    %1166 = vmatpush.msra.mxu0 %v754
    %1167 = vmatpush.msra.mxu0 %v750
    %1168 = vmatpush.msra.mxu0 %v746
    %1169 = vmatpush.msra.mxu0 %v742
    %1170 = vmatpush.msra.mxu0 %v738
    %1171 = vmatpush.msra.mxu0 %v734
    %1172 = vmatpush.msra.mxu0 %v730
    %1173 = vmatpush.msra.mxu0 %v726
    %1174 = vmatpush.msra.mxu0 %v722
    %1175 = vmatpush.msra.mxu0 %v718
    %1176 = vmatpush.msra.mxu0 %v714
    %1177 = vmatpush.msra.mxu0 %v710
    %1178 = vmatpush.msra.mxu0 %v706
    %1179 = vmatpush.msra.mxu0 %v702
    %1180 = vmatpush.msra.mxu0 %v698
    %1181 = vmatpush.msra.mxu0 %v694
    %1182 = vmatmul.f32.gmra.mxu0 %v895
    %v1183 = vpop.f32.mrf.mxu0
    %v1184 = vadd.f32 %v1164, %v1183
    %1185 = vdwg.mxu0
    %1186 = vmatpush.msra.mxu0 %v818
    %1187 = vmatpush.msra.mxu0 %v814
    %1188 = vmatpush.msra.mxu0 %v810
    %1189 = vmatpush.msra.mxu0 %v806
    %1190 = vmatpush.msra.mxu0 %v802
    %1191 = vmatpush.msra.mxu0 %v798
    %1192 = vmatpush.msra.mxu0 %v794
    %1193 = vmatpush.msra.mxu0 %v790
    %1194 = vmatpush.msra.mxu0 %v786
    %1195 = vmatpush.msra.mxu0 %v782
    %1196 = vmatpush.msra.mxu0 %v778
    %1197 = vmatpush.msra.mxu0 %v774
    %1198 = vmatpush.msra.mxu0 %v770
    %1199 = vmatpush.msra.mxu0 %v766
    %1200 = vmatpush.msra.mxu0 %v762
    %1201 = vmatpush.msra.mxu0 %v758
    %1202 = vmatmul.f32.gmra.mxu0 %v896
    %v1203 = vpop.f32.mrf.mxu0
    %v1204 = vadd.f32 %v1184, %v1203
    %1205 = vdwg.mxu0
    %1206 = vmatpush.msra.mxu0 %v882
    %1207 = vmatpush.msra.mxu0 %v878
    %1208 = vmatpush.msra.mxu0 %v874
    %1209 = vmatpush.msra.mxu0 %v870
    %1210 = vmatpush.msra.mxu0 %v866
    %1211 = vmatpush.msra.mxu0 %v862
    %1212 = vmatpush.msra.mxu0 %v858
    %1213 = vmatpush.msra.mxu0 %v854
    %1214 = vmatpush.msra.mxu0 %v850
    %1215 = vmatpush.msra.mxu0 %v846
    %1216 = vmatpush.msra.mxu0 %v842
    %1217 = vmatpush.msra.mxu0 %v838
    %1218 = vmatpush.msra.mxu0 %v834
    %1219 = vmatpush.msra.mxu0 %v830
    %1220 = vmatpush.msra.mxu0 %v826
    %1221 = vmatpush.msra.mxu0 %v822
    %1222 = vmatmul.f32.gmra.mxu0 %v897
    %v1223 = vpop.f32.mrf.mxu0
    %v1224 = vadd.f32 %v1204, %v1223
    %1225 = vdwg.mxu0
    %1226 = vmatpush.msra.mxu0 %v435
    %1227 = vmatpush.msra.mxu0 %v431
    %1228 = vmatpush.msra.mxu0 %v427
    %1229 = vmatpush.msra.mxu0 %v423
    %1230 = vmatpush.msra.mxu0 %v419
    %1231 = vmatpush.msra.mxu0 %v415
    %1232 = vmatpush.msra.mxu0 %v411
    %1233 = vmatpush.msra.mxu0 %v407
    %1234 = vmatpush.msra.mxu0 %v403
    %1235 = vmatpush.msra.mxu0 %v399
    %1236 = vmatpush.msra.mxu0 %v395
    %1237 = vmatpush.msra.mxu0 %v391
    %1238 = vmatpush.msra.mxu0 %v387
    %1239 = vmatpush.msra.mxu0 %v383
    %1240 = vmatpush.msra.mxu0 %v379
    %1241 = vmatpush.msra.mxu0 %v375
    %1242 = vmatmul.f32.gmra.mxu0 %v890
    %v1243 = vpop.f32.mrf.mxu0
    %v1244 = vadd.f32 0.0, %v1243
    %1245 = vdwg.mxu0
    %1246 = vmatpush.msra.mxu0 %v499
    %1247 = vmatpush.msra.mxu0 %v495
    %1248 = vmatpush.msra.mxu0 %v491
    %1249 = vmatpush.msra.mxu0 %v487
    %1250 = vmatpush.msra.mxu0 %v483
    %1251 = vmatpush.msra.mxu0 %v479
    %1252 = vmatpush.msra.mxu0 %v475
    %1253 = vmatpush.msra.mxu0 %v471
    %1254 = vmatpush.msra.mxu0 %v467
    %1255 = vmatpush.msra.mxu0 %v463
    %1256 = vmatpush.msra.mxu0 %v459
    %1257 = vmatpush.msra.mxu0 %v455
    %1258 = vmatpush.msra.mxu0 %v451
    %1259 = vmatpush.msra.mxu0 %v447
    %1260 = vmatpush.msra.mxu0 %v443
    %1261 = vmatpush.msra.mxu0 %v439
    %1262 = vmatmul.f32.gmra.mxu0 %v891
    %v1263 = vpop.f32.mrf.mxu0
    %v1264 = vadd.f32 %v1244, %v1263
    %1265 = vdwg.mxu0
    %1266 = vmatpush.msra.mxu0 %v563
    %1267 = vmatpush.msra.mxu0 %v559
    %1268 = vmatpush.msra.mxu0 %v555
    %1269 = vmatpush.msra.mxu0 %v551
    %1270 = vmatpush.msra.mxu0 %v547
    %1271 = vmatpush.msra.mxu0 %v543
    %1272 = vmatpush.msra.mxu0 %v539
    %1273 = vmatpush.msra.mxu0 %v535
    %1274 = vmatpush.msra.mxu0 %v531
    %1275 = vmatpush.msra.mxu0 %v527
    %1276 = vmatpush.msra.mxu0 %v523
    %1277 = vmatpush.msra.mxu0 %v519
    %1278 = vmatpush.msra.mxu0 %v515
    %1279 = vmatpush.msra.mxu0 %v511
    %1280 = vmatpush.msra.mxu0 %v507
    %1281 = vmatpush.msra.mxu0 %v503
    %1282 = vmatmul.f32.gmra.mxu0 %v892
    %v1283 = vpop.f32.mrf.mxu0
    %v1284 = vadd.f32 %v1264, %v1283
    %1285 = vdwg.mxu0
    %1286 = vmatpush.msra.mxu0 %v627
    %1287 = vmatpush.msra.mxu0 %v623
    %1288 = vmatpush.msra.mxu0 %v619
    %1289 = vmatpush.msra.mxu0 %v615
    %1290 = vmatpush.msra.mxu0 %v611
    %1291 = vmatpush.msra.mxu0 %v607
    %1292 = vmatpush.msra.mxu0 %v603
    %1293 = vmatpush.msra.mxu0 %v599
    %1294 = vmatpush.msra.mxu0 %v595
    %1295 = vmatpush.msra.mxu0 %v591
    %1296 = vmatpush.msra.mxu0 %v587
    %1297 = vmatpush.msra.mxu0 %v583
    %1298 = vmatpush.msra.mxu0 %v579
    %1299 = vmatpush.msra.mxu0 %v575
    %1300 = vmatpush.msra.mxu0 %v571
    %1301 = vmatpush.msra.mxu0 %v567
    %1302 = vmatmul.f32.gmra.mxu0 %v893
    %v1303 = vpop.f32.mrf.mxu0
    %v1304 = vadd.f32 %v1284, %v1303
    %1305 = vdwg.mxu0
    %1306 = vmatpush.msra.mxu0 %v691
    %1307 = vmatpush.msra.mxu0 %v687
    %1308 = vmatpush.msra.mxu0 %v683
    %1309 = vmatpush.msra.mxu0 %v679
    %1310 = vmatpush.msra.mxu0 %v675
    %1311 = vmatpush.msra.mxu0 %v671
    %1312 = vmatpush.msra.mxu0 %v667
    %1313 = vmatpush.msra.mxu0 %v663
    %1314 = vmatpush.msra.mxu0 %v659
    %1315 = vmatpush.msra.mxu0 %v655
    %1316 = vmatpush.msra.mxu0 %v651
    %1317 = vmatpush.msra.mxu0 %v647
    %1318 = vmatpush.msra.mxu0 %v643
    %1319 = vmatpush.msra.mxu0 %v639
    %1320 = vmatpush.msra.mxu0 %v635
    %1321 = vmatpush.msra.mxu0 %v631
    %1322 = vmatmul.f32.gmra.mxu0 %v894
    %v1323 = vpop.f32.mrf.mxu0
    %v1324 = vadd.f32 %v1304, %v1323
    %1325 = vdwg.mxu0
    %1326 = vmatpush.msra.mxu0 %v755
    %1327 = vmatpush.msra.mxu0 %v751
    %1328 = vmatpush.msra.mxu0 %v747
    %1329 = vmatpush.msra.mxu0 %v743
    %1330 = vmatpush.msra.mxu0 %v739
    %1331 = vmatpush.msra.mxu0 %v735
    %1332 = vmatpush.msra.mxu0 %v731
    %1333 = vmatpush.msra.mxu0 %v727
    %1334 = vmatpush.msra.mxu0 %v723
    %1335 = vmatpush.msra.mxu0 %v719
    %1336 = vmatpush.msra.mxu0 %v715
    %1337 = vmatpush.msra.mxu0 %v711
    %1338 = vmatpush.msra.mxu0 %v707
    %1339 = vmatpush.msra.mxu0 %v703
    %1340 = vmatpush.msra.mxu0 %v699
    %1341 = vmatpush.msra.mxu0 %v695
    %1342 = vmatmul.f32.gmra.mxu0 %v895
    %v1343 = vpop.f32.mrf.mxu0
    %v1344 = vadd.f32 %v1324, %v1343
    %1345 = vdwg.mxu0
    %1346 = vmatpush.msra.mxu0 %v819
    %1347 = vmatpush.msra.mxu0 %v815
    %1348 = vmatpush.msra.mxu0 %v811
    %1349 = vmatpush.msra.mxu0 %v807
    %1350 = vmatpush.msra.mxu0 %v803
    %1351 = vmatpush.msra.mxu0 %v799
    %1352 = vmatpush.msra.mxu0 %v795
    %1353 = vmatpush.msra.mxu0 %v791
    %1354 = vmatpush.msra.mxu0 %v787
    %1355 = vmatpush.msra.mxu0 %v783
    %1356 = vmatpush.msra.mxu0 %v779
    %1357 = vmatpush.msra.mxu0 %v775
    %1358 = vmatpush.msra.mxu0 %v771
    %1359 = vmatpush.msra.mxu0 %v767
    %1360 = vmatpush.msra.mxu0 %v763
    %1361 = vmatpush.msra.mxu0 %v759
    %1362 = vmatmul.f32.gmra.mxu0 %v896
    %v1363 = vpop.f32.mrf.mxu0
    %v1364 = vadd.f32 %v1344, %v1363
    %1365 = vdwg.mxu0
    %1366 = vmatpush.msra.mxu0 %v883
    %1367 = vmatpush.msra.mxu0 %v879
    %1368 = vmatpush.msra.mxu0 %v875
    %1369 = vmatpush.msra.mxu0 %v871
    %1370 = vmatpush.msra.mxu0 %v867
    %1371 = vmatpush.msra.mxu0 %v863
    %1372 = vmatpush.msra.mxu0 %v859
    %1373 = vmatpush.msra.mxu0 %v855
    %1374 = vmatpush.msra.mxu0 %v851
    %1375 = vmatpush.msra.mxu0 %v847
    %1376 = vmatpush.msra.mxu0 %v843
    %1377 = vmatpush.msra.mxu0 %v839
    %1378 = vmatpush.msra.mxu0 %v835
    %1379 = vmatpush.msra.mxu0 %v831
    %1380 = vmatpush.msra.mxu0 %v827
    %1381 = vmatpush.msra.mxu0 %v823
    %1382 = vmatmul.f32.gmra.mxu0 %v897
    %v1383 = vpop.f32.mrf.mxu0
    %v1384 = vadd.f32 %v1364, %v1383
    %1385 = vdwg.mxu0
    %1386 = vmatpush.msra.mxu0 %v436
    %1387 = vmatpush.msra.mxu0 %v432
    %1388 = vmatpush.msra.mxu0 %v428
    %1389 = vmatpush.msra.mxu0 %v424
    %1390 = vmatpush.msra.mxu0 %v420
    %1391 = vmatpush.msra.mxu0 %v416
    %1392 = vmatpush.msra.mxu0 %v412
    %1393 = vmatpush.msra.mxu0 %v408
    %1394 = vmatpush.msra.mxu0 %v404
    %1395 = vmatpush.msra.mxu0 %v400
    %1396 = vmatpush.msra.mxu0 %v396
    %1397 = vmatpush.msra.mxu0 %v392
    %1398 = vmatpush.msra.mxu0 %v388
    %1399 = vmatpush.msra.mxu0 %v384
    %1400 = vmatpush.msra.mxu0 %v380
    %1401 = vmatpush.msra.mxu0 %v376
    %1402 = vmatmul.f32.gmra.mxu0 %v890
    %v1403 = vpop.f32.mrf.mxu0
    %v1404 = vadd.f32 0.0, %v1403
    %1405 = vdwg.mxu0
    %1406 = vmatpush.msra.mxu0 %v500
    %1407 = vmatpush.msra.mxu0 %v496
    %1408 = vmatpush.msra.mxu0 %v492
    %1409 = vmatpush.msra.mxu0 %v488
    %1410 = vmatpush.msra.mxu0 %v484
    %1411 = vmatpush.msra.mxu0 %v480
    %1412 = vmatpush.msra.mxu0 %v476
    %1413 = vmatpush.msra.mxu0 %v472
    %1414 = vmatpush.msra.mxu0 %v468
    %1415 = vmatpush.msra.mxu0 %v464
    %1416 = vmatpush.msra.mxu0 %v460
    %1417 = vmatpush.msra.mxu0 %v456
    %1418 = vmatpush.msra.mxu0 %v452
    %1419 = vmatpush.msra.mxu0 %v448
    %1420 = vmatpush.msra.mxu0 %v444
    %1421 = vmatpush.msra.mxu0 %v440
    %1422 = vmatmul.f32.gmra.mxu0 %v891
    %v1423 = vpop.f32.mrf.mxu0
    %v1424 = vadd.f32 %v1404, %v1423
    %1425 = vdwg.mxu0
    %1426 = vmatpush.msra.mxu0 %v564
    %1427 = vmatpush.msra.mxu0 %v560
    %1428 = vmatpush.msra.mxu0 %v556
    %1429 = vmatpush.msra.mxu0 %v552
    %1430 = vmatpush.msra.mxu0 %v548
    %1431 = vmatpush.msra.mxu0 %v544
    %1432 = vmatpush.msra.mxu0 %v540
    %1433 = vmatpush.msra.mxu0 %v536
    %1434 = vmatpush.msra.mxu0 %v532
    %1435 = vmatpush.msra.mxu0 %v528
    %1436 = vmatpush.msra.mxu0 %v524
    %1437 = vmatpush.msra.mxu0 %v520
    %1438 = vmatpush.msra.mxu0 %v516
    %1439 = vmatpush.msra.mxu0 %v512
    %1440 = vmatpush.msra.mxu0 %v508
    %1441 = vmatpush.msra.mxu0 %v504
    %1442 = vmatmul.f32.gmra.mxu0 %v892
    %v1443 = vpop.f32.mrf.mxu0
    %v1444 = vadd.f32 %v1424, %v1443
    %1445 = vdwg.mxu0
    %1446 = vmatpush.msra.mxu0 %v628
    %1447 = vmatpush.msra.mxu0 %v624
    %1448 = vmatpush.msra.mxu0 %v620
    %1449 = vmatpush.msra.mxu0 %v616
    %1450 = vmatpush.msra.mxu0 %v612
    %1451 = vmatpush.msra.mxu0 %v608
    %1452 = vmatpush.msra.mxu0 %v604
    %1453 = vmatpush.msra.mxu0 %v600
    %1454 = vmatpush.msra.mxu0 %v596
    %1455 = vmatpush.msra.mxu0 %v592
    %1456 = vmatpush.msra.mxu0 %v588
    %1457 = vmatpush.msra.mxu0 %v584
    %1458 = vmatpush.msra.mxu0 %v580
    %1459 = vmatpush.msra.mxu0 %v576
    %1460 = vmatpush.msra.mxu0 %v572
    %1461 = vmatpush.msra.mxu0 %v568
    %1462 = vmatmul.f32.gmra.mxu0 %v893
    %v1463 = vpop.f32.mrf.mxu0
    %v1464 = vadd.f32 %v1444, %v1463
    %1465 = vdwg.mxu0
    %1466 = vmatpush.msra.mxu0 %v692
    %1467 = vmatpush.msra.mxu0 %v688
    %1468 = vmatpush.msra.mxu0 %v684
    %1469 = vmatpush.msra.mxu0 %v680
    %1470 = vmatpush.msra.mxu0 %v676
    %1471 = vmatpush.msra.mxu0 %v672
    %1472 = vmatpush.msra.mxu0 %v668
    %1473 = vmatpush.msra.mxu0 %v664
    %1474 = vmatpush.msra.mxu0 %v660
    %1475 = vmatpush.msra.mxu0 %v656
    %1476 = vmatpush.msra.mxu0 %v652
    %1477 = vmatpush.msra.mxu0 %v648
    %1478 = vmatpush.msra.mxu0 %v644
    %1479 = vmatpush.msra.mxu0 %v640
    %1480 = vmatpush.msra.mxu0 %v636
    %1481 = vmatpush.msra.mxu0 %v632
    %1482 = vmatmul.f32.gmra.mxu0 %v894
    %v1483 = vpop.f32.mrf.mxu0
    %v1484 = vadd.f32 %v1464, %v1483
    %1485 = vdwg.mxu0
    %1486 = vmatpush.msra.mxu0 %v756
    %1487 = vmatpush.msra.mxu0 %v752
    %1488 = vmatpush.msra.mxu0 %v748
    %1489 = vmatpush.msra.mxu0 %v744
    %1490 = vmatpush.msra.mxu0 %v740
    %1491 = vmatpush.msra.mxu0 %v736
    %1492 = vmatpush.msra.mxu0 %v732
    %1493 = vmatpush.msra.mxu0 %v728
    %1494 = vmatpush.msra.mxu0 %v724
    %1495 = vmatpush.msra.mxu0 %v720
    %1496 = vmatpush.msra.mxu0 %v716
    %1497 = vmatpush.msra.mxu0 %v712
    %1498 = vmatpush.msra.mxu0 %v708
    %1499 = vmatpush.msra.mxu0 %v704
    %1500 = vmatpush.msra.mxu0 %v700
    %1501 = vmatpush.msra.mxu0 %v696
    %1502 = vmatmul.f32.gmra.mxu0 %v895
    %v1503 = vpop.f32.mrf.mxu0
    %v1504 = vadd.f32 %v1484, %v1503
    %1505 = vdwg.mxu0
    %1506 = vmatpush.msra.mxu0 %v820
    %1507 = vmatpush.msra.mxu0 %v816
    %1508 = vmatpush.msra.mxu0 %v812
    %1509 = vmatpush.msra.mxu0 %v808
    %1510 = vmatpush.msra.mxu0 %v804
    %1511 = vmatpush.msra.mxu0 %v800
    %1512 = vmatpush.msra.mxu0 %v796
    %1513 = vmatpush.msra.mxu0 %v792
    %1514 = vmatpush.msra.mxu0 %v788
    %1515 = vmatpush.msra.mxu0 %v784
    %1516 = vmatpush.msra.mxu0 %v780
    %1517 = vmatpush.msra.mxu0 %v776
    %1518 = vmatpush.msra.mxu0 %v772
    %1519 = vmatpush.msra.mxu0 %v768
    %1520 = vmatpush.msra.mxu0 %v764
    %1521 = vmatpush.msra.mxu0 %v760
    %1522 = vmatmul.f32.gmra.mxu0 %v896
    %v1523 = vpop.f32.mrf.mxu0
    %v1524 = vadd.f32 %v1504, %v1523
    %1525 = vdwg.mxu0
    %1526 = vmatpush.msra.mxu0 %v884
    %1527 = vmatpush.msra.mxu0 %v880
    %1528 = vmatpush.msra.mxu0 %v876
    %1529 = vmatpush.msra.mxu0 %v872
    %1530 = vmatpush.msra.mxu0 %v868
    %1531 = vmatpush.msra.mxu0 %v864
    %1532 = vmatpush.msra.mxu0 %v860
    %1533 = vmatpush.msra.mxu0 %v856
    %1534 = vmatpush.msra.mxu0 %v852
    %1535 = vmatpush.msra.mxu0 %v848
    %1536 = vmatpush.msra.mxu0 %v844
    %1537 = vmatpush.msra.mxu0 %v840
    %1538 = vmatpush.msra.mxu0 %v836
    %1539 = vmatpush.msra.mxu0 %v832
    %1540 = vmatpush.msra.mxu0 %v828
    %1541 = vmatpush.msra.mxu0 %v824
    %1542 = vmatmul.f32.gmra.mxu0 %v897
    %v1543 = vpop.f32.mrf.mxu0
    %v1544 = vadd.f32 %v1524, %v1543
    %1545 = vdwg.mxu0
    %vm1546 = vcmask 1041408
    %v1547 = vsel %vm1546, %v1064, 0.0
    %v1548 = vrot.slane %v1547, 4
    %v1549 = vadd.f32 %v1547, %v1548
    %v1550 = vrot.slane %v1549, 2
    %v1551 = vadd.f32 %v1549, %v1550
    %v1552 = vrot.slane %v1551, 1
    %v1553 = vadd.f32 %v1551, %v1552
    %v1554 = vsel %vm1546, %v1224, 0.0
    %v1555 = vrot.slane %v1554, 4
    %v1556 = vadd.f32 %v1554, %v1555
    %v1557 = vrot.slane %v1556, 2
    %v1558 = vadd.f32 %v1556, %v1557
    %v1559 = vrot.slane %v1558, 1
    %v1560 = vadd.f32 %v1558, %v1559
    %v1561 = vsel %vm1546, %v1384, 0.0
    %v1562 = vrot.slane %v1561, 4
    %v1563 = vadd.f32 %v1561, %v1562
    %v1564 = vrot.slane %v1563, 2
    %v1565 = vadd.f32 %v1563, %v1564
    %v1566 = vrot.slane %v1565, 1
    %v1567 = vadd.f32 %v1565, %v1566
    %v1568 = vsel %vm1546, %v1544, 0.0
    %v1569 = vrot.slane %v1568, 4
    %v1570 = vadd.f32 %v1568, %v1569
    %v1571 = vrot.slane %v1570, 2
    %v1572 = vadd.f32 %v1570, %v1571
    %v1573 = vrot.slane %v1572, 1
    %v1574 = vadd.f32 %v1572, %v1573
    %v1575 = vld [vmem:[%s5] sm:$0xff]
    %v1576 = vld [vmem:[%s5 + $0x8] sm:$0xff]
    %v1577 = vld [vmem:[%s5 + $0x10] sm:$0xff]
    %v1578 = vld [vmem:[%s5 + $0x18] sm:$0xff]
    %v1579 = vld [vmem:[%s5 + $0x20] sm:$0xff]
    %v1580 = vld [vmem:[%s5 + $0x28] sm:$0xff]
    %v1581 = vld [vmem:[%s5 + $0x30] sm:$0xff]
    %v1582 = vld [vmem:[%s5 + $0x38] sm:$0xff]
    %v1583 = vld [vmem:[%s5 + $0x40] sm:$0xff]
    %v1584 = vld [vmem:[%s5 + $0x48] sm:$0xff]
    %v1585 = vld [vmem:[%s5 + $0x50] sm:$0xff]
    %v1586 = vld [vmem:[%s5 + $0x58] sm:$0xff]
    %v1587 = vld [vmem:[%s5 + $0x60] sm:$0xff]
    %v1588 = vld [vmem:[%s5 + $0x68] sm:$0xff]
    %v1589 = vld [vmem:[%s5 + $0x70] sm:$0xff]
    %v1590 = vld [vmem:[%s5 + $0x78] sm:$0xff]
    %v1591 = vld [vmem:[%s5 + $0x80] sm:$0xff]
    %v1592 = vld [vmem:[%s5 + $0x88] sm:$0xff]
    %v1593 = vld [vmem:[%s5 + $0x90] sm:$0xff]
    %v1594 = vld [vmem:[%s5 + $0x98] sm:$0xff]
    %v1595 = vld [vmem:[%s5 + $0xa0] sm:$0xff]
    %v1596 = vld [vmem:[%s5 + $0xa8] sm:$0xff]
    %v1597 = vld [vmem:[%s5 + $0xb0] sm:$0xff]
    %v1598 = vld [vmem:[%s5 + $0xb8] sm:$0xff]
    %v1599 = vld [vmem:[%s5 + $0xc0] sm:$0xff]
    %v1600 = vld [vmem:[%s5 + $0xc8] sm:$0xff]
    %v1601 = vld [vmem:[%s5 + $0xd0] sm:$0xff]
    %v1602 = vld [vmem:[%s5 + $0xd8] sm:$0xff]
    %v1603 = vld [vmem:[%s5 + $0xe0] sm:$0xff]
    %v1604 = vld [vmem:[%s5 + $0xe8] sm:$0xff]
    %v1605 = vld [vmem:[%s5 + $0xf0] sm:$0xff]
    %v1606 = vld [vmem:[%s5 + $0xf8] sm:$0xff]
    %v1607 = vld [vmem:[%s5 + $0x100] sm:$0xff]
    %v1608 = vld [vmem:[%s5 + $0x108] sm:$0xff]
    %v1609 = vld [vmem:[%s5 + $0x110] sm:$0xff]
    %v1610 = vld [vmem:[%s5 + $0x118] sm:$0xff]
    %v1611 = vld [vmem:[%s5 + $0x120] sm:$0xff]
    %v1612 = vld [vmem:[%s5 + $0x128] sm:$0xff]
    %v1613 = vld [vmem:[%s5 + $0x130] sm:$0xff]
    %v1614 = vld [vmem:[%s5 + $0x138] sm:$0xff]
    %v1615 = vld [vmem:[%s5 + $0x140] sm:$0xff]
    %v1616 = vld [vmem:[%s5 + $0x148] sm:$0xff]
    %v1617 = vld [vmem:[%s5 + $0x150] sm:$0xff]
    %v1618 = vld [vmem:[%s5 + $0x158] sm:$0xff]
    %v1619 = vld [vmem:[%s5 + $0x160] sm:$0xff]
    %v1620 = vld [vmem:[%s5 + $0x168] sm:$0xff]
    %v1621 = vld [vmem:[%s5 + $0x170] sm:$0xff]
    %v1622 = vld [vmem:[%s5 + $0x178] sm:$0xff]
    %v1623 = vld [vmem:[%s5 + $0x180] sm:$0xff]
    %v1624 = vld [vmem:[%s5 + $0x188] sm:$0xff]
    %v1625 = vld [vmem:[%s5 + $0x190] sm:$0xff]
    %v1626 = vld [vmem:[%s5 + $0x198] sm:$0xff]
    %v1627 = vld [vmem:[%s5 + $0x1a0] sm:$0xff]
    %v1628 = vld [vmem:[%s5 + $0x1a8] sm:$0xff]
    %v1629 = vld [vmem:[%s5 + $0x1b0] sm:$0xff]
    %v1630 = vld [vmem:[%s5 + $0x1b8] sm:$0xff]
    %v1631 = vld [vmem:[%s5 + $0x1c0] sm:$0xff]
    %v1632 = vld [vmem:[%s5 + $0x1c8] sm:$0xff]
    %v1633 = vld [vmem:[%s5 + $0x1d0] sm:$0xff]
    %v1634 = vld [vmem:[%s5 + $0x1d8] sm:$0xff]
    %v1635 = vld [vmem:[%s5 + $0x1e0] sm:$0xff]
    %v1636 = vld [vmem:[%s5 + $0x1e8] sm:$0xff]
    %v1637 = vld [vmem:[%s5 + $0x1f0] sm:$0xff]
    %v1638 = vld [vmem:[%s5 + $0x1f8] sm:$0xff]
    %1639 = vmatpush.msra.mxu0 %v1590
    %1640 = vmatpush.msra.mxu0 %v1589
    %1641 = vmatpush.msra.mxu0 %v1588
    %1642 = vmatpush.msra.mxu0 %v1587
    %1643 = vmatpush.msra.mxu0 %v1586
    %1644 = vmatpush.msra.mxu0 %v1585
    %1645 = vmatpush.msra.mxu0 %v1584
    %1646 = vmatpush.msra.mxu0 %v1583
    %1647 = vmatpush.msra.mxu0 %v1582
    %1648 = vmatpush.msra.mxu0 %v1581
    %1649 = vmatpush.msra.mxu0 %v1580
    %1650 = vmatpush.msra.mxu0 %v1579
    %1651 = vmatpush.msra.mxu0 %v1578
    %1652 = vmatpush.msra.mxu0 %v1577
    %1653 = vmatpush.msra.mxu0 %v1576
    %1654 = vmatpush.msra.mxu0 %v1575
    %1655 = vmatmul.f32.gmra.mxu0 %v1553
    %v1656 = vpop.f32.mrf.mxu0
    %v1657 = vadd.f32 0.0, %v1656
    %1658 = vdwg.mxu0
    %1659 = vmatpush.msra.mxu0 %v1606
    %1660 = vmatpush.msra.mxu0 %v1605
    %1661 = vmatpush.msra.mxu0 %v1604
    %1662 = vmatpush.msra.mxu0 %v1603
    %1663 = vmatpush.msra.mxu0 %v1602
    %1664 = vmatpush.msra.mxu0 %v1601
    %1665 = vmatpush.msra.mxu0 %v1600
    %1666 = vmatpush.msra.mxu0 %v1599
    %1667 = vmatpush.msra.mxu0 %v1598
    %1668 = vmatpush.msra.mxu0 %v1597
    %1669 = vmatpush.msra.mxu0 %v1596
    %1670 = vmatpush.msra.mxu0 %v1595
    %1671 = vmatpush.msra.mxu0 %v1594
    %1672 = vmatpush.msra.mxu0 %v1593
    %1673 = vmatpush.msra.mxu0 %v1592
    %1674 = vmatpush.msra.mxu0 %v1591
    %1675 = vmatmul.f32.gmra.mxu0 %v1560
    %v1676 = vpop.f32.mrf.mxu0
    %v1677 = vadd.f32 %v1657, %v1676
    %1678 = vdwg.mxu0
    %1679 = vmatpush.msra.mxu0 %v1622
    %1680 = vmatpush.msra.mxu0 %v1621
    %1681 = vmatpush.msra.mxu0 %v1620
    %1682 = vmatpush.msra.mxu0 %v1619
    %1683 = vmatpush.msra.mxu0 %v1618
    %1684 = vmatpush.msra.mxu0 %v1617
    %1685 = vmatpush.msra.mxu0 %v1616
    %1686 = vmatpush.msra.mxu0 %v1615
    %1687 = vmatpush.msra.mxu0 %v1614
    %1688 = vmatpush.msra.mxu0 %v1613
    %1689 = vmatpush.msra.mxu0 %v1612
    %1690 = vmatpush.msra.mxu0 %v1611
    %1691 = vmatpush.msra.mxu0 %v1610
    %1692 = vmatpush.msra.mxu0 %v1609
    %1693 = vmatpush.msra.mxu0 %v1608
    %1694 = vmatpush.msra.mxu0 %v1607
    %1695 = vmatmul.f32.gmra.mxu0 %v1567
    %v1696 = vpop.f32.mrf.mxu0
    %v1697 = vadd.f32 %v1677, %v1696
    %1698 = vdwg.mxu0
    %1699 = vmatpush.msra.mxu0 %v1638
    %1700 = vmatpush.msra.mxu0 %v1637
    %1701 = vmatpush.msra.mxu0 %v1636
    %1702 = vmatpush.msra.mxu0 %v1635
    %1703 = vmatpush.msra.mxu0 %v1634
    %1704 = vmatpush.msra.mxu0 %v1633
    %1705 = vmatpush.msra.mxu0 %v1632
    %1706 = vmatpush.msra.mxu0 %v1631
    %1707 = vmatpush.msra.mxu0 %v1630
    %1708 = vmatpush.msra.mxu0 %v1629
    %1709 = vmatpush.msra.mxu0 %v1628
    %1710 = vmatpush.msra.mxu0 %v1627
    %1711 = vmatpush.msra.mxu0 %v1626
    %1712 = vmatpush.msra.mxu0 %v1625
    %1713 = vmatpush.msra.mxu0 %v1624
    %1714 = vmatpush.msra.mxu0 %v1623
    %1715 = vmatmul.f32.gmra.mxu0 %v1574
    %v1716 = vpop.f32.mrf.mxu0
    %v1717 = vadd.f32 %v1697, %v1716
    %1718 = vdwg.mxu0
    %v1719 = vmul.f32 %v1717, 0.0078125
    %v1720 = vld [vmem:[#allocation10] sm:$0xff]
    %v1721 = vld [vmem:[#allocation10 + $0x8] sm:$0xff]
    %v1722 = vld [vmem:[#allocation10 + $0x10] sm:$0xff]
    %v1723 = vld [vmem:[#allocation10 + $0x18] sm:$0xff]
    %vm1724 = vcmask 64512
    %v1726 = vsel %vm1724, %v1719, 0
    %1728 = vmatpush.msra.mxu0 0.0
    %1729 = vmatpush.msra.mxu0 0.0
    %1730 = vmatpush.msra.mxu0 0.0
    %1731 = vmatpush.msra.mxu0 0.0
    %1732 = vmatpush.msra.mxu0 0.0
    %1733 = vmatpush.msra.mxu0 0.0
    %1734 = vmatpush.msra.mxu0 0.0
    %1735 = vmatpush.msra.mxu0 0.0
    %1736 = vmatpush.msra.mxu0 0.0
    %1737 = vmatpush.msra.mxu0 0.0
    %1738 = vmatpush.msra.mxu0 0.0
    %1739 = vmatpush.msra.mxu0 0.0
    %1740 = vmatpush.msra.mxu0 0.0
    %1741 = vmatpush.msra.mxu0 0.0
    %1742 = vmatpush.msra.mxu0 0.0
    %1743 = vmatpush.msra.mxu0 %v1720
    %1744 = vmatmul.f32.gmra.mxu0 %v1726
    %v1745 = vpop.f32.mrf.mxu0
    %v1746 = vadd.f32 0.0, %v1745
    %1747 = vdwg.mxu0
    %1748 = vmatpush.msra.mxu0 0.0
    %1749 = vmatpush.msra.mxu0 0.0
    %1750 = vmatpush.msra.mxu0 0.0
    %1751 = vmatpush.msra.mxu0 0.0
    %1752 = vmatpush.msra.mxu0 0.0
    %1753 = vmatpush.msra.mxu0 0.0
    %1754 = vmatpush.msra.mxu0 0.0
    %1755 = vmatpush.msra.mxu0 0.0
    %1756 = vmatpush.msra.mxu0 0.0
    %1757 = vmatpush.msra.mxu0 0.0
    %1758 = vmatpush.msra.mxu0 0.0
    %1759 = vmatpush.msra.mxu0 0.0
    %1760 = vmatpush.msra.mxu0 0.0
    %1761 = vmatpush.msra.mxu0 0.0
    %1762 = vmatpush.msra.mxu0 0.0
    %1763 = vmatpush.msra.mxu0 %v1721
    %1764 = vmatmul.f32.gmra.mxu0 %v1726
    %v1765 = vpop.f32.mrf.mxu0
    %v1766 = vadd.f32 0.0, %v1765
    %1767 = vdwg.mxu0
    %1768 = vmatpush.msra.mxu0 0.0
    %1769 = vmatpush.msra.mxu0 0.0
    %1770 = vmatpush.msra.mxu0 0.0
    %1771 = vmatpush.msra.mxu0 0.0
    %1772 = vmatpush.msra.mxu0 0.0
    %1773 = vmatpush.msra.mxu0 0.0
    %1774 = vmatpush.msra.mxu0 0.0
    %1775 = vmatpush.msra.mxu0 0.0
    %1776 = vmatpush.msra.mxu0 0.0
    %1777 = vmatpush.msra.mxu0 0.0
    %1778 = vmatpush.msra.mxu0 0.0
    %1779 = vmatpush.msra.mxu0 0.0
    %1780 = vmatpush.msra.mxu0 0.0
    %1781 = vmatpush.msra.mxu0 0.0
    %1782 = vmatpush.msra.mxu0 0.0
    %1783 = vmatpush.msra.mxu0 %v1722
    %1784 = vmatmul.f32.gmra.mxu0 %v1726
    %v1785 = vpop.f32.mrf.mxu0
    %v1786 = vadd.f32 0.0, %v1785
    %1787 = vdwg.mxu0
    %1788 = vmatpush.msra.mxu0 0.0
    %1789 = vmatpush.msra.mxu0 0.0
    %1790 = vmatpush.msra.mxu0 0.0
    %1791 = vmatpush.msra.mxu0 0.0
    %1792 = vmatpush.msra.mxu0 0.0
    %1793 = vmatpush.msra.mxu0 0.0
    %1794 = vmatpush.msra.mxu0 0.0
    %1795 = vmatpush.msra.mxu0 0.0
    %1796 = vmatpush.msra.mxu0 0.0
    %1797 = vmatpush.msra.mxu0 0.0
    %1798 = vmatpush.msra.mxu0 0.0
    %1799 = vmatpush.msra.mxu0 0.0
    %1800 = vmatpush.msra.mxu0 0.0
    %1801 = vmatpush.msra.mxu0 0.0
    %1802 = vmatpush.msra.mxu0 0.0
    %1803 = vmatpush.msra.mxu0 %v1723
    %1804 = vmatmul.f32.gmra.mxu0 %v1726
    %v1805 = vpop.f32.mrf.mxu0
    %v1806 = vadd.f32 0.0, %v1805
    %1807 = vdwg.mxu0
    %v1808 = vperm.slane %v1746, 0
    %v1809 = vperm.slane %v1766, 0
    %v1810 = vperm.slane %v1786, 0
    %v1811 = vperm.slane %v1806, 0
    %v1812 = vsub.f32 %v1064, %v1808
    %v1813 = vsub.f32 %v1224, %v1809
    %v1814 = vsub.f32 %v1384, %v1810
    %v1815 = vsub.f32 %v1544, %v1811
    %v1816 = vmul.f32 %v1812, %v1812
    %v1817 = vmul.f32 %v1813, %v1813
    %v1818 = vmul.f32 %v1814, %v1814
    %v1819 = vmul.f32 %v1815, %v1815
    %v1820 = vsel %vm1546, %v1816, 0.0
    %v1821 = vrot.slane %v1820, 4
    %v1822 = vadd.f32 %v1820, %v1821
    %v1823 = vrot.slane %v1822, 2
    %v1824 = vadd.f32 %v1822, %v1823
    %v1825 = vrot.slane %v1824, 1
    %v1826 = vadd.f32 %v1824, %v1825
    %v1827 = vsel %vm1546, %v1817, 0.0
    %v1828 = vrot.slane %v1827, 4
    %v1829 = vadd.f32 %v1827, %v1828
    %v1830 = vrot.slane %v1829, 2
    %v1831 = vadd.f32 %v1829, %v1830
    %v1832 = vrot.slane %v1831, 1
    %v1833 = vadd.f32 %v1831, %v1832
    %v1834 = vsel %vm1546, %v1818, 0.0
    %v1835 = vrot.slane %v1834, 4
    %v1836 = vadd.f32 %v1834, %v1835
    %v1837 = vrot.slane %v1836, 2
    %v1838 = vadd.f32 %v1836, %v1837
    %v1839 = vrot.slane %v1838, 1
    %v1840 = vadd.f32 %v1838, %v1839
    %v1841 = vsel %vm1546, %v1819, 0.0
    %v1842 = vrot.slane %v1841, 4
    %v1843 = vadd.f32 %v1841, %v1842
    %v1844 = vrot.slane %v1843, 2
    %v1845 = vadd.f32 %v1843, %v1844
    %v1846 = vrot.slane %v1845, 1
    %v1847 = vadd.f32 %v1845, %v1846
    %1848 = vmatpush.msra.mxu0 %v1590
    %1849 = vmatpush.msra.mxu0 %v1589
    %1850 = vmatpush.msra.mxu0 %v1588
    %1851 = vmatpush.msra.mxu0 %v1587
    %1852 = vmatpush.msra.mxu0 %v1586
    %1853 = vmatpush.msra.mxu0 %v1585
    %1854 = vmatpush.msra.mxu0 %v1584
    %1855 = vmatpush.msra.mxu0 %v1583
    %1856 = vmatpush.msra.mxu0 %v1582
    %1857 = vmatpush.msra.mxu0 %v1581
    %1858 = vmatpush.msra.mxu0 %v1580
    %1859 = vmatpush.msra.mxu0 %v1579
    %1860 = vmatpush.msra.mxu0 %v1578
    %1861 = vmatpush.msra.mxu0 %v1577
    %1862 = vmatpush.msra.mxu0 %v1576
    %1863 = vmatpush.msra.mxu0 %v1575
    %1864 = vmatmul.f32.gmra.mxu0 %v1826
    %v1865 = vpop.f32.mrf.mxu0
    %v1866 = vadd.f32 0.0, %v1865
    %1867 = vdwg.mxu0
    %1868 = vmatpush.msra.mxu0 %v1606
    %1869 = vmatpush.msra.mxu0 %v1605
    %1870 = vmatpush.msra.mxu0 %v1604
    %1871 = vmatpush.msra.mxu0 %v1603
    %1872 = vmatpush.msra.mxu0 %v1602
    %1873 = vmatpush.msra.mxu0 %v1601
    %1874 = vmatpush.msra.mxu0 %v1600
    %1875 = vmatpush.msra.mxu0 %v1599
    %1876 = vmatpush.msra.mxu0 %v1598
    %1877 = vmatpush.msra.mxu0 %v1597
    %1878 = vmatpush.msra.mxu0 %v1596
    %1879 = vmatpush.msra.mxu0 %v1595
    %1880 = vmatpush.msra.mxu0 %v1594
    %1881 = vmatpush.msra.mxu0 %v1593
    %1882 = vmatpush.msra.mxu0 %v1592
    %1883 = vmatpush.msra.mxu0 %v1591
    %1884 = vmatmul.f32.gmra.mxu0 %v1833
    %v1885 = vpop.f32.mrf.mxu0
    %v1886 = vadd.f32 %v1866, %v1885
    %1887 = vdwg.mxu0
    %1888 = vmatpush.msra.mxu0 %v1622
    %1889 = vmatpush.msra.mxu0 %v1621
    %1890 = vmatpush.msra.mxu0 %v1620
    %1891 = vmatpush.msra.mxu0 %v1619
    %1892 = vmatpush.msra.mxu0 %v1618
    %1893 = vmatpush.msra.mxu0 %v1617
    %1894 = vmatpush.msra.mxu0 %v1616
    %1895 = vmatpush.msra.mxu0 %v1615
    %1896 = vmatpush.msra.mxu0 %v1614
    %1897 = vmatpush.msra.mxu0 %v1613
    %1898 = vmatpush.msra.mxu0 %v1612
    %1899 = vmatpush.msra.mxu0 %v1611
    %1900 = vmatpush.msra.mxu0 %v1610
    %1901 = vmatpush.msra.mxu0 %v1609
    %1902 = vmatpush.msra.mxu0 %v1608
    %1903 = vmatpush.msra.mxu0 %v1607
    %1904 = vmatmul.f32.gmra.mxu0 %v1840
    %v1905 = vpop.f32.mrf.mxu0
    %v1906 = vadd.f32 %v1886, %v1905
    %1907 = vdwg.mxu0
    %1908 = vmatpush.msra.mxu0 %v1638
    %1909 = vmatpush.msra.mxu0 %v1637
    %1910 = vmatpush.msra.mxu0 %v1636
    %1911 = vmatpush.msra.mxu0 %v1635
    %1912 = vmatpush.msra.mxu0 %v1634
    %1913 = vmatpush.msra.mxu0 %v1633
    %1914 = vmatpush.msra.mxu0 %v1632
    %1915 = vmatpush.msra.mxu0 %v1631
    %1916 = vmatpush.msra.mxu0 %v1630
    %1917 = vmatpush.msra.mxu0 %v1629
    %1918 = vmatpush.msra.mxu0 %v1628
    %1919 = vmatpush.msra.mxu0 %v1627
    %1920 = vmatpush.msra.mxu0 %v1626
    %1921 = vmatpush.msra.mxu0 %v1625
    %1922 = vmatpush.msra.mxu0 %v1624
    %1923 = vmatpush.msra.mxu0 %v1623
    %1924 = vmatmul.f32.gmra.mxu0 %v1847
    %v1925 = vpop.f32.mrf.mxu0
    %v1926 = vadd.f32 %v1906, %v1925
    %1927 = vdwg.mxu0
    %v1928 = vmul.f32 %v1926, 0.0078125
    %v1930 = vsel %vm1724, %v1928, 0
    %1932 = vmatpush.msra.mxu0 0.0
    %1933 = vmatpush.msra.mxu0 0.0
    %1934 = vmatpush.msra.mxu0 0.0
    %1935 = vmatpush.msra.mxu0 0.0
    %1936 = vmatpush.msra.mxu0 0.0
    %1937 = vmatpush.msra.mxu0 0.0
    %1938 = vmatpush.msra.mxu0 0.0
    %1939 = vmatpush.msra.mxu0 0.0
    %1940 = vmatpush.msra.mxu0 0.0
    %1941 = vmatpush.msra.mxu0 0.0
    %1942 = vmatpush.msra.mxu0 0.0
    %1943 = vmatpush.msra.mxu0 0.0
    %1944 = vmatpush.msra.mxu0 0.0
    %1945 = vmatpush.msra.mxu0 0.0
    %1946 = vmatpush.msra.mxu0 0.0
    %1947 = vmatpush.msra.mxu0 %v1720
    %1948 = vmatmul.f32.gmra.mxu0 %v1930
    %v1949 = vpop.f32.mrf.mxu0
    %v1950 = vadd.f32 1e-05, %v1949
    %1951 = vdwg.mxu0
    %1952 = vmatpush.msra.mxu0 0.0
    %1953 = vmatpush.msra.mxu0 0.0
    %1954 = vmatpush.msra.mxu0 0.0
    %1955 = vmatpush.msra.mxu0 0.0
    %1956 = vmatpush.msra.mxu0 0.0
    %1957 = vmatpush.msra.mxu0 0.0
    %1958 = vmatpush.msra.mxu0 0.0
    %1959 = vmatpush.msra.mxu0 0.0
    %1960 = vmatpush.msra.mxu0 0.0
    %1961 = vmatpush.msra.mxu0 0.0
    %1962 = vmatpush.msra.mxu0 0.0
    %1963 = vmatpush.msra.mxu0 0.0
    %1964 = vmatpush.msra.mxu0 0.0
    %1965 = vmatpush.msra.mxu0 0.0
    %1966 = vmatpush.msra.mxu0 0.0
    %1967 = vmatpush.msra.mxu0 %v1721
    %1968 = vmatmul.f32.gmra.mxu0 %v1930
    %v1969 = vpop.f32.mrf.mxu0
    %v1970 = vadd.f32 1e-05, %v1969
    %1971 = vdwg.mxu0
    %1972 = vmatpush.msra.mxu0 0.0
    %1973 = vmatpush.msra.mxu0 0.0
    %1974 = vmatpush.msra.mxu0 0.0
    %1975 = vmatpush.msra.mxu0 0.0
    %1976 = vmatpush.msra.mxu0 0.0
    %1977 = vmatpush.msra.mxu0 0.0
    %1978 = vmatpush.msra.mxu0 0.0
    %1979 = vmatpush.msra.mxu0 0.0
    %1980 = vmatpush.msra.mxu0 0.0
    %1981 = vmatpush.msra.mxu0 0.0
    %1982 = vmatpush.msra.mxu0 0.0
    %1983 = vmatpush.msra.mxu0 0.0
    %1984 = vmatpush.msra.mxu0 0.0
    %1985 = vmatpush.msra.mxu0 0.0
    %1986 = vmatpush.msra.mxu0 0.0
    %1987 = vmatpush.msra.mxu0 %v1722
    %1988 = vmatmul.f32.gmra.mxu0 %v1930
    %v1989 = vpop.f32.mrf.mxu0
    %v1990 = vadd.f32 1e-05, %v1989
    %1991 = vdwg.mxu0
    %1992 = vmatpush.msra.mxu0 0.0
    %1993 = vmatpush.msra.mxu0 0.0
    %1994 = vmatpush.msra.mxu0 0.0
    %1995 = vmatpush.msra.mxu0 0.0
    %1996 = vmatpush.msra.mxu0 0.0
    %1997 = vmatpush.msra.mxu0 0.0
    %1998 = vmatpush.msra.mxu0 0.0
    %1999 = vmatpush.msra.mxu0 0.0
    %2000 = vmatpush.msra.mxu0 0.0
    %2001 = vmatpush.msra.mxu0 0.0
    %2002 = vmatpush.msra.mxu0 0.0
    %2003 = vmatpush.msra.mxu0 0.0
    %2004 = vmatpush.msra.mxu0 0.0
    %2005 = vmatpush.msra.mxu0 0.0
    %2006 = vmatpush.msra.mxu0 0.0
    %2007 = vmatpush.msra.mxu0 %v1723
    %2008 = vmatmul.f32.gmra.mxu0 %v1930
    %v2009 = vpop.f32.mrf.mxu0
    %v2010 = vadd.f32 1e-05, %v2009
    %2011 = vdwg.mxu0
    %v2012 = vrsqrt.pop %v1950
    %v2013 = vmul.f32 %v2012, %v1950
    %v2014 = vmul.f32 %v2013, %v2012
    %v2015 = vmul.f32 0.5, %v2014
    %v2016 = vsub.f32 1.5, %v2015
    %v2017 = vmul.f32 %v2012, %v2016
    %vm2018 = vweird.f32 %v1950
    %vm2019 = vweird.f32 %v2012
    %vm2020 = vmor %vm2018, %vm2019
    %v2021 = vsel %vm2020, %v2012, %v2017
    %v2022 = vrsqrt.pop %v1970
    %v2023 = vmul.f32 %v2022, %v1970
    %v2024 = vmul.f32 %v2023, %v2022
    %v2025 = vmul.f32 0.5, %v2024
    %v2026 = vsub.f32 1.5, %v2025
    %v2027 = vmul.f32 %v2022, %v2026
    %vm2028 = vweird.f32 %v1970
    %vm2029 = vweird.f32 %v2022
    %vm2030 = vmor %vm2028, %vm2029
    %v2031 = vsel %vm2030, %v2022, %v2027
    %v2032 = vrsqrt.pop %v1990
    %v2033 = vmul.f32 %v2032, %v1990
    %v2034 = vmul.f32 %v2033, %v2032
    %v2035 = vmul.f32 0.5, %v2034
    %v2036 = vsub.f32 1.5, %v2035
    %v2037 = vmul.f32 %v2032, %v2036
    %vm2038 = vweird.f32 %v1990
    %vm2039 = vweird.f32 %v2032
    %vm2040 = vmor %vm2038, %vm2039
    %v2041 = vsel %vm2040, %v2032, %v2037
    %v2042 = vrsqrt.pop %v2010
    %v2043 = vmul.f32 %v2042, %v2010
    %v2044 = vmul.f32 %v2043, %v2042
    %v2045 = vmul.f32 0.5, %v2044
    %v2046 = vsub.f32 1.5, %v2045
    %v2047 = vmul.f32 %v2042, %v2046
    %vm2048 = vweird.f32 %v2010
    %vm2049 = vweird.f32 %v2042
    %vm2050 = vmor %vm2048, %vm2049
    %v2051 = vsel %vm2050, %v2042, %v2047
    %v2052 = vperm.slane %v2021, 0
    %v2053 = vperm.slane %v2031, 0
    %v2054 = vperm.slane %v2041, 0
    %v2055 = vperm.slane %v2051, 0
    %v2056 = vmul.f32 %v1812, %v2052
    %v2057 = vmul.f32 %v1813, %v2053
    %v2058 = vmul.f32 %v1814, %v2054
    %v2059 = vmul.f32 %v1815, %v2055
    %v2060 = vld [vmem:[#allocation7] sm:$0xf]
    %v2062 = vperm.slane %v2060, 0
    %v2063 = vperm.slane %v2060, 1
    %v2064 = vperm.slane %v2060, 2
    %v2065 = vperm.slane %v2060, 3
    %v2070 = vmul.f32 %v2056, %v2062
    %v2071 = vmul.f32 %v2057, %v2063
    %v2072 = vmul.f32 %v2058, %v2064
    %v2073 = vmul.f32 %v2059, %v2065
    %v2074 = vld [vmem:[#allocation8] sm:$0xf]
    %v2076 = vperm.slane %v2074, 0
    %v2077 = vperm.slane %v2074, 1
    %v2078 = vperm.slane %v2074, 2
    %v2079 = vperm.slane %v2074, 3
    %v2084 = vadd.f32 %v2070, %v2076
    %v2085 = vadd.f32 %v2071, %v2077
    %v2086 = vadd.f32 %v2072, %v2078
    %v2087 = vadd.f32 %v2073, %v2079
    %vm2088 = vcmp.ge.f32.partialorder %v2084, 0.0
    %vm2089 = vcmp.ge.f32.partialorder %v2085, 0.0
    %vm2090 = vcmp.ge.f32.partialorder %v2086, 0.0
    %vm2091 = vcmp.ge.f32.partialorder %v2087, 0.0
    %v2092 = vmul.f32 %v2084, 0.01
    %v2093 = vmul.f32 %v2085, 0.01
    %v2094 = vmul.f32 %v2086, 0.01
    %v2095 = vmul.f32 %v2087, 0.01
    %v2096 = vsel %vm2088, %v2084, %v2092
    %v2097 = vsel %vm2089, %v2085, %v2093
    %v2098 = vsel %vm2090, %v2086, %v2094
    %v2099 = vsel %vm2091, %v2087, %v2095
    %v2100 = vld [vmem:[#allocation11] sm:$0xff]
    %v2101 = vld [vmem:[#allocation11 + $0x8] sm:$0xff]
    %v2102 = vld [vmem:[#allocation11 + $0x10] sm:$0xff]
    %v2103 = vld [vmem:[#allocation11 + $0x18] sm:$0xff]
    %v2104 = vld [vmem:[#allocation11 + $0x20] sm:$0xff]
    %v2105 = vld [vmem:[#allocation11 + $0x28] sm:$0xff]
    %v2106 = vld [vmem:[#allocation11 + $0x30] sm:$0xff]
    %v2107 = vld [vmem:[#allocation11 + $0x38] sm:$0xff]
    %v2108 = vld [vmem:[#allocation11 + $0x40] sm:$0xff]
    %v2109 = vld [vmem:[#allocation11 + $0x48] sm:$0xff]
    %v2110 = vld [vmem:[#allocation11 + $0x50] sm:$0xff]
    %v2111 = vld [vmem:[#allocation11 + $0x58] sm:$0xff]
    %v2112 = vld [vmem:[#allocation11 + $0x60] sm:$0xff]
    %v2113 = vld [vmem:[#allocation11 + $0x68] sm:$0xff]
    %v2114 = vld [vmem:[#allocation11 + $0x70] sm:$0xff]
    %v2115 = vld [vmem:[#allocation11 + $0x78] sm:$0xff]
    %v2116 = vld [vmem:[#allocation11 + $0x80] sm:$0xff]
    %v2117 = vld [vmem:[#allocation11 + $0x88] sm:$0xff]
    %v2118 = vld [vmem:[#allocation11 + $0x90] sm:$0xff]
    %v2119 = vld [vmem:[#allocation11 + $0x98] sm:$0xff]
    %v2120 = vld [vmem:[#allocation11 + $0xa0] sm:$0xff]
    %v2121 = vld [vmem:[#allocation11 + $0xa8] sm:$0xff]
    %v2122 = vld [vmem:[#allocation11 + $0xb0] sm:$0xff]
    %v2123 = vld [vmem:[#allocation11 + $0xb8] sm:$0xff]
    %v2124 = vld [vmem:[#allocation11 + $0xc0] sm:$0xff]
    %v2125 = vld [vmem:[#allocation11 + $0xc8] sm:$0xff]
    %v2126 = vld [vmem:[#allocation11 + $0xd0] sm:$0xff]
    %v2127 = vld [vmem:[#allocation11 + $0xd8] sm:$0xff]
    %v2128 = vld [vmem:[#allocation11 + $0xe0] sm:$0xff]
    %v2129 = vld [vmem:[#allocation11 + $0xe8] sm:$0xff]
    %v2130 = vld [vmem:[#allocation11 + $0xf0] sm:$0xff]
    %v2131 = vld [vmem:[#allocation11 + $0xf8] sm:$0xff]
    %v2132 = vld [vmem:[#allocation11 + $0x100] sm:$0xff]
    %v2133 = vld [vmem:[#allocation11 + $0x108] sm:$0xff]
    %v2134 = vld [vmem:[#allocation11 + $0x110] sm:$0xff]
    %v2135 = vld [vmem:[#allocation11 + $0x118] sm:$0xff]
    %v2136 = vld [vmem:[#allocation11 + $0x120] sm:$0xff]
    %v2137 = vld [vmem:[#allocation11 + $0x128] sm:$0xff]
    %v2138 = vld [vmem:[#allocation11 + $0x130] sm:$0xff]
    %v2139 = vld [vmem:[#allocation11 + $0x138] sm:$0xff]
    %v2140 = vld [vmem:[#allocation11 + $0x140] sm:$0xff]
    %v2141 = vld [vmem:[#allocation11 + $0x148] sm:$0xff]
    %v2142 = vld [vmem:[#allocation11 + $0x150] sm:$0xff]
    %v2143 = vld [vmem:[#allocation11 + $0x158] sm:$0xff]
    %v2144 = vld [vmem:[#allocation11 + $0x160] sm:$0xff]
    %v2145 = vld [vmem:[#allocation11 + $0x168] sm:$0xff]
    %v2146 = vld [vmem:[#allocation11 + $0x170] sm:$0xff]
    %v2147 = vld [vmem:[#allocation11 + $0x178] sm:$0xff]
    %v2148 = vld [vmem:[#allocation11 + $0x180] sm:$0xff]
    %v2149 = vld [vmem:[#allocation11 + $0x188] sm:$0xff]
    %v2150 = vld [vmem:[#allocation11 + $0x190] sm:$0xff]
    %v2151 = vld [vmem:[#allocation11 + $0x198] sm:$0xff]
    %v2152 = vld [vmem:[#allocation11 + $0x1a0] sm:$0xff]
    %v2153 = vld [vmem:[#allocation11 + $0x1a8] sm:$0xff]
    %v2154 = vld [vmem:[#allocation11 + $0x1b0] sm:$0xff]
    %v2155 = vld [vmem:[#allocation11 + $0x1b8] sm:$0xff]
    %v2156 = vld [vmem:[#allocation11 + $0x1c0] sm:$0xff]
    %v2157 = vld [vmem:[#allocation11 + $0x1c8] sm:$0xff]
    %v2158 = vld [vmem:[#allocation11 + $0x1d0] sm:$0xff]
    %v2159 = vld [vmem:[#allocation11 + $0x1d8] sm:$0xff]
    %v2160 = vld [vmem:[#allocation11 + $0x1e0] sm:$0xff]
    %v2161 = vld [vmem:[#allocation11 + $0x1e8] sm:$0xff]
    %v2162 = vld [vmem:[#allocation11 + $0x1f0] sm:$0xff]
    %v2163 = vld [vmem:[#allocation11 + $0x1f8] sm:$0xff]
    %v2164 = vld [vmem:[#allocation11 + $0x200] sm:$0xff]
    %v2165 = vld [vmem:[#allocation11 + $0x208] sm:$0xff]
    %v2166 = vld [vmem:[#allocation11 + $0x210] sm:$0xff]
    %v2167 = vld [vmem:[#allocation11 + $0x218] sm:$0xff]
    %v2168 = vld [vmem:[#allocation11 + $0x220] sm:$0xff]
    %v2169 = vld [vmem:[#allocation11 + $0x228] sm:$0xff]
    %v2170 = vld [vmem:[#allocation11 + $0x230] sm:$0xff]
    %v2171 = vld [vmem:[#allocation11 + $0x238] sm:$0xff]
    %v2172 = vld [vmem:[#allocation11 + $0x240] sm:$0xff]
    %v2173 = vld [vmem:[#allocation11 + $0x248] sm:$0xff]
    %v2174 = vld [vmem:[#allocation11 + $0x250] sm:$0xff]
    %v2175 = vld [vmem:[#allocation11 + $0x258] sm:$0xff]
    %v2176 = vld [vmem:[#allocation11 + $0x260] sm:$0xff]
    %v2177 = vld [vmem:[#allocation11 + $0x268] sm:$0xff]
    %v2178 = vld [vmem:[#allocation11 + $0x270] sm:$0xff]
    %v2179 = vld [vmem:[#allocation11 + $0x278] sm:$0xff]
    %v2180 = vld [vmem:[#allocation11 + $0x280] sm:$0xff]
    %v2181 = vld [vmem:[#allocation11 + $0x288] sm:$0xff]
    %v2182 = vld [vmem:[#allocation11 + $0x290] sm:$0xff]
    %v2183 = vld [vmem:[#allocation11 + $0x298] sm:$0xff]
    %v2184 = vld [vmem:[#allocation11 + $0x2a0] sm:$0xff]
    %v2185 = vld [vmem:[#allocation11 + $0x2a8] sm:$0xff]
    %v2186 = vld [vmem:[#allocation11 + $0x2b0] sm:$0xff]
    %v2187 = vld [vmem:[#allocation11 + $0x2b8] sm:$0xff]
    %v2188 = vld [vmem:[#allocation11 + $0x2c0] sm:$0xff]
    %v2189 = vld [vmem:[#allocation11 + $0x2c8] sm:$0xff]
    %v2190 = vld [vmem:[#allocation11 + $0x2d0] sm:$0xff]
    %v2191 = vld [vmem:[#allocation11 + $0x2d8] sm:$0xff]
    %v2192 = vld [vmem:[#allocation11 + $0x2e0] sm:$0xff]
    %v2193 = vld [vmem:[#allocation11 + $0x2e8] sm:$0xff]
    %v2194 = vld [vmem:[#allocation11 + $0x2f0] sm:$0xff]
    %v2195 = vld [vmem:[#allocation11 + $0x2f8] sm:$0xff]
    %v2196 = vld [vmem:[#allocation11 + $0x300] sm:$0xff]
    %v2197 = vld [vmem:[#allocation11 + $0x308] sm:$0xff]
    %v2198 = vld [vmem:[#allocation11 + $0x310] sm:$0xff]
    %v2199 = vld [vmem:[#allocation11 + $0x318] sm:$0xff]
    %v2200 = vld [vmem:[#allocation11 + $0x320] sm:$0xff]
    %v2201 = vld [vmem:[#allocation11 + $0x328] sm:$0xff]
    %v2202 = vld [vmem:[#allocation11 + $0x330] sm:$0xff]
    %v2203 = vld [vmem:[#allocation11 + $0x338] sm:$0xff]
    %v2204 = vld [vmem:[#allocation11 + $0x340] sm:$0xff]
    %v2205 = vld [vmem:[#allocation11 + $0x348] sm:$0xff]
    %v2206 = vld [vmem:[#allocation11 + $0x350] sm:$0xff]
    %v2207 = vld [vmem:[#allocation11 + $0x358] sm:$0xff]
    %v2208 = vld [vmem:[#allocation11 + $0x360] sm:$0xff]
    %v2209 = vld [vmem:[#allocation11 + $0x368] sm:$0xff]
    %v2210 = vld [vmem:[#allocation11 + $0x370] sm:$0xff]
    %v2211 = vld [vmem:[#allocation11 + $0x378] sm:$0xff]
    %v2212 = vld [vmem:[#allocation11 + $0x380] sm:$0xff]
    %v2213 = vld [vmem:[#allocation11 + $0x388] sm:$0xff]
    %v2214 = vld [vmem:[#allocation11 + $0x390] sm:$0xff]
    %v2215 = vld [vmem:[#allocation11 + $0x398] sm:$0xff]
    %v2216 = vld [vmem:[#allocation11 + $0x3a0] sm:$0xff]
    %v2217 = vld [vmem:[#allocation11 + $0x3a8] sm:$0xff]
    %v2218 = vld [vmem:[#allocation11 + $0x3b0] sm:$0xff]
    %v2219 = vld [vmem:[#allocation11 + $0x3b8] sm:$0xff]
    %v2220 = vld [vmem:[#allocation11 + $0x3c0] sm:$0xff]
    %v2221 = vld [vmem:[#allocation11 + $0x3c8] sm:$0xff]
    %v2222 = vld [vmem:[#allocation11 + $0x3d0] sm:$0xff]
    %v2223 = vld [vmem:[#allocation11 + $0x3d8] sm:$0xff]
    %v2224 = vld [vmem:[#allocation11 + $0x3e0] sm:$0xff]
    %v2225 = vld [vmem:[#allocation11 + $0x3e8] sm:$0xff]
    %v2226 = vld [vmem:[#allocation11 + $0x3f0] sm:$0xff]
    %v2227 = vld [vmem:[#allocation11 + $0x3f8] sm:$0xff]
    %2228 = vmatpush.msra.mxu0 %v2130
    %2229 = vmatpush.msra.mxu0 %v2128
    %2230 = vmatpush.msra.mxu0 %v2126
    %2231 = vmatpush.msra.mxu0 %v2124
    %2232 = vmatpush.msra.mxu0 %v2122
    %2233 = vmatpush.msra.mxu0 %v2120
    %2234 = vmatpush.msra.mxu0 %v2118
    %2235 = vmatpush.msra.mxu0 %v2116
    %2236 = vmatpush.msra.mxu0 %v2114
    %2237 = vmatpush.msra.mxu0 %v2112
    %2238 = vmatpush.msra.mxu0 %v2110
    %2239 = vmatpush.msra.mxu0 %v2108
    %2240 = vmatpush.msra.mxu0 %v2106
    %2241 = vmatpush.msra.mxu0 %v2104
    %2242 = vmatpush.msra.mxu0 %v2102
    %2243 = vmatpush.msra.mxu0 %v2100
    %2244 = vmatmul.f32.gmra.mxu0 %v2096
    %v2245 = vpop.f32.mrf.mxu0
    %v2246 = vadd.f32 0.0, %v2245
    %2247 = vdwg.mxu0
    %2248 = vmatpush.msra.mxu0 %v2162
    %2249 = vmatpush.msra.mxu0 %v2160
    %2250 = vmatpush.msra.mxu0 %v2158
    %2251 = vmatpush.msra.mxu0 %v2156
    %2252 = vmatpush.msra.mxu0 %v2154
    %2253 = vmatpush.msra.mxu0 %v2152
    %2254 = vmatpush.msra.mxu0 %v2150
    %2255 = vmatpush.msra.mxu0 %v2148
    %2256 = vmatpush.msra.mxu0 %v2146
    %2257 = vmatpush.msra.mxu0 %v2144
    %2258 = vmatpush.msra.mxu0 %v2142
    %2259 = vmatpush.msra.mxu0 %v2140
    %2260 = vmatpush.msra.mxu0 %v2138
    %2261 = vmatpush.msra.mxu0 %v2136
    %2262 = vmatpush.msra.mxu0 %v2134
    %2263 = vmatpush.msra.mxu0 %v2132
    %2264 = vmatmul.f32.gmra.mxu0 %v2097
    %v2265 = vpop.f32.mrf.mxu0
    %v2266 = vadd.f32 %v2246, %v2265
    %2267 = vdwg.mxu0
    %2268 = vmatpush.msra.mxu0 %v2194
    %2269 = vmatpush.msra.mxu0 %v2192
    %2270 = vmatpush.msra.mxu0 %v2190
    %2271 = vmatpush.msra.mxu0 %v2188
    %2272 = vmatpush.msra.mxu0 %v2186
    %2273 = vmatpush.msra.mxu0 %v2184
    %2274 = vmatpush.msra.mxu0 %v2182
    %2275 = vmatpush.msra.mxu0 %v2180
    %2276 = vmatpush.msra.mxu0 %v2178
    %2277 = vmatpush.msra.mxu0 %v2176
    %2278 = vmatpush.msra.mxu0 %v2174
    %2279 = vmatpush.msra.mxu0 %v2172
    %2280 = vmatpush.msra.mxu0 %v2170
    %2281 = vmatpush.msra.mxu0 %v2168
    %2282 = vmatpush.msra.mxu0 %v2166
    %2283 = vmatpush.msra.mxu0 %v2164
    %2284 = vmatmul.f32.gmra.mxu0 %v2098
    %v2285 = vpop.f32.mrf.mxu0
    %v2286 = vadd.f32 %v2266, %v2285
    %2287 = vdwg.mxu0
    %2288 = vmatpush.msra.mxu0 %v2226
    %2289 = vmatpush.msra.mxu0 %v2224
    %2290 = vmatpush.msra.mxu0 %v2222
    %2291 = vmatpush.msra.mxu0 %v2220
    %2292 = vmatpush.msra.mxu0 %v2218
    %2293 = vmatpush.msra.mxu0 %v2216
    %2294 = vmatpush.msra.mxu0 %v2214
    %2295 = vmatpush.msra.mxu0 %v2212
    %2296 = vmatpush.msra.mxu0 %v2210
    %2297 = vmatpush.msra.mxu0 %v2208
    %2298 = vmatpush.msra.mxu0 %v2206
    %2299 = vmatpush.msra.mxu0 %v2204
    %2300 = vmatpush.msra.mxu0 %v2202
    %2301 = vmatpush.msra.mxu0 %v2200
    %2302 = vmatpush.msra.mxu0 %v2198
    %2303 = vmatpush.msra.mxu0 %v2196
    %2304 = vmatmul.f32.gmra.mxu0 %v2099
    %v2305 = vpop.f32.mrf.mxu0
    %v2306 = vadd.f32 %v2286, %v2305
    %2307 = vdwg.mxu0
    %2308 = vmatpush.msra.mxu0 %v2131
    %2309 = vmatpush.msra.mxu0 %v2129
    %2310 = vmatpush.msra.mxu0 %v2127
    %2311 = vmatpush.msra.mxu0 %v2125
    %2312 = vmatpush.msra.mxu0 %v2123
    %2313 = vmatpush.msra.mxu0 %v2121
    %2314 = vmatpush.msra.mxu0 %v2119
    %2315 = vmatpush.msra.mxu0 %v2117
    %2316 = vmatpush.msra.mxu0 %v2115
    %2317 = vmatpush.msra.mxu0 %v2113
    %2318 = vmatpush.msra.mxu0 %v2111
    %2319 = vmatpush.msra.mxu0 %v2109
    %2320 = vmatpush.msra.mxu0 %v2107
    %2321 = vmatpush.msra.mxu0 %v2105
    %2322 = vmatpush.msra.mxu0 %v2103
    %2323 = vmatpush.msra.mxu0 %v2101
    %2324 = vmatmul.f32.gmra.mxu0 %v2096
    %v2325 = vpop.f32.mrf.mxu0
    %v2326 = vadd.f32 0.0, %v2325
    %2327 = vdwg.mxu0
    %2328 = vmatpush.msra.mxu0 %v2163
    %2329 = vmatpush.msra.mxu0 %v2161
    %2330 = vmatpush.msra.mxu0 %v2159
    %2331 = vmatpush.msra.mxu0 %v2157
    %2332 = vmatpush.msra.mxu0 %v2155
    %2333 = vmatpush.msra.mxu0 %v2153
    %2334 = vmatpush.msra.mxu0 %v2151
    %2335 = vmatpush.msra.mxu0 %v2149
    %2336 = vmatpush.msra.mxu0 %v2147
    %2337 = vmatpush.msra.mxu0 %v2145
    %2338 = vmatpush.msra.mxu0 %v2143
    %2339 = vmatpush.msra.mxu0 %v2141
    %2340 = vmatpush.msra.mxu0 %v2139
    %2341 = vmatpush.msra.mxu0 %v2137
    %2342 = vmatpush.msra.mxu0 %v2135
    %2343 = vmatpush.msra.mxu0 %v2133
    %2344 = vmatmul.f32.gmra.mxu0 %v2097
    %v2345 = vpop.f32.mrf.mxu0
    %v2346 = vadd.f32 %v2326, %v2345
    %2347 = vdwg.mxu0
    %2348 = vmatpush.msra.mxu0 %v2195
    %2349 = vmatpush.msra.mxu0 %v2193
    %2350 = vmatpush.msra.mxu0 %v2191
    %2351 = vmatpush.msra.mxu0 %v2189
    %2352 = vmatpush.msra.mxu0 %v2187
    %2353 = vmatpush.msra.mxu0 %v2185
    %2354 = vmatpush.msra.mxu0 %v2183
    %2355 = vmatpush.msra.mxu0 %v2181
    %2356 = vmatpush.msra.mxu0 %v2179
    %2357 = vmatpush.msra.mxu0 %v2177
    %2358 = vmatpush.msra.mxu0 %v2175
    %2359 = vmatpush.msra.mxu0 %v2173
    %2360 = vmatpush.msra.mxu0 %v2171
    %2361 = vmatpush.msra.mxu0 %v2169
    %2362 = vmatpush.msra.mxu0 %v2167
    %2363 = vmatpush.msra.mxu0 %v2165
    %2364 = vmatmul.f32.gmra.mxu0 %v2098
    %v2365 = vpop.f32.mrf.mxu0
    %v2366 = vadd.f32 %v2346, %v2365
    %2367 = vdwg.mxu0
    %2368 = vmatpush.msra.mxu0 %v2227
    %2369 = vmatpush.msra.mxu0 %v2225
    %2370 = vmatpush.msra.mxu0 %v2223
    %2371 = vmatpush.msra.mxu0 %v2221
    %2372 = vmatpush.msra.mxu0 %v2219
    %2373 = vmatpush.msra.mxu0 %v2217
    %2374 = vmatpush.msra.mxu0 %v2215
    %2375 = vmatpush.msra.mxu0 %v2213
    %2376 = vmatpush.msra.mxu0 %v2211
    %2377 = vmatpush.msra.mxu0 %v2209
    %2378 = vmatpush.msra.mxu0 %v2207
    %2379 = vmatpush.msra.mxu0 %v2205
    %2380 = vmatpush.msra.mxu0 %v2203
    %2381 = vmatpush.msra.mxu0 %v2201
    %2382 = vmatpush.msra.mxu0 %v2199
    %2383 = vmatpush.msra.mxu0 %v2197
    %2384 = vmatmul.f32.gmra.mxu0 %v2099
    %v2385 = vpop.f32.mrf.mxu0
    %v2386 = vadd.f32 %v2366, %v2385
    %2387 = vdwg.mxu0
    %v2388 = vsel %vm1546, %v2306, 0.0
    %v2389 = vrot.slane %v2388, 4
    %v2390 = vadd.f32 %v2388, %v2389
    %v2391 = vrot.slane %v2390, 2
    %v2392 = vadd.f32 %v2390, %v2391
    %v2393 = vrot.slane %v2392, 1
    %v2394 = vadd.f32 %v2392, %v2393
    %v2395 = vsel %vm1546, %v2386, 0.0
    %v2396 = vrot.slane %v2395, 4
    %v2397 = vadd.f32 %v2395, %v2396
    %v2398 = vrot.slane %v2397, 2
    %v2399 = vadd.f32 %v2397, %v2398
    %v2400 = vrot.slane %v2399, 1
    %v2401 = vadd.f32 %v2399, %v2400
    %v2402 = vld [vmem:[%s10] sm:$0xff]
    %v2403 = vld [vmem:[%s10 + $0x8] sm:$0xff]
    %v2404 = vld [vmem:[%s10 + $0x10] sm:$0xff]
    %v2405 = vld [vmem:[%s10 + $0x18] sm:$0xff]
    %v2406 = vld [vmem:[%s10 + $0x20] sm:$0xff]
    %v2407 = vld [vmem:[%s10 + $0x28] sm:$0xff]
    %v2408 = vld [vmem:[%s10 + $0x30] sm:$0xff]
    %v2409 = vld [vmem:[%s10 + $0x38] sm:$0xff]
    %v2410 = vld [vmem:[%s10 + $0x40] sm:$0xff]
    %v2411 = vld [vmem:[%s10 + $0x48] sm:$0xff]
    %v2412 = vld [vmem:[%s10 + $0x50] sm:$0xff]
    %v2413 = vld [vmem:[%s10 + $0x58] sm:$0xff]
    %v2414 = vld [vmem:[%s10 + $0x60] sm:$0xff]
    %v2415 = vld [vmem:[%s10 + $0x68] sm:$0xff]
    %v2416 = vld [vmem:[%s10 + $0x70] sm:$0xff]
    %v2417 = vld [vmem:[%s10 + $0x78] sm:$0xff]
    %v2418 = vld [vmem:[%s10 + $0x80] sm:$0xff]
    %v2419 = vld [vmem:[%s10 + $0x88] sm:$0xff]
    %v2420 = vld [vmem:[%s10 + $0x90] sm:$0xff]
    %v2421 = vld [vmem:[%s10 + $0x98] sm:$0xff]
    %v2422 = vld [vmem:[%s10 + $0xa0] sm:$0xff]
    %v2423 = vld [vmem:[%s10 + $0xa8] sm:$0xff]
    %v2424 = vld [vmem:[%s10 + $0xb0] sm:$0xff]
    %v2425 = vld [vmem:[%s10 + $0xb8] sm:$0xff]
    %v2426 = vld [vmem:[%s10 + $0xc0] sm:$0xff]
    %v2427 = vld [vmem:[%s10 + $0xc8] sm:$0xff]
    %v2428 = vld [vmem:[%s10 + $0xd0] sm:$0xff]
    %v2429 = vld [vmem:[%s10 + $0xd8] sm:$0xff]
    %v2430 = vld [vmem:[%s10 + $0xe0] sm:$0xff]
    %v2431 = vld [vmem:[%s10 + $0xe8] sm:$0xff]
    %v2432 = vld [vmem:[%s10 + $0xf0] sm:$0xff]
    %v2433 = vld [vmem:[%s10 + $0xf8] sm:$0xff]
    %2434 = vmatpush.msra.mxu0 %v2417
    %2435 = vmatpush.msra.mxu0 %v2416
    %2436 = vmatpush.msra.mxu0 %v2415
    %2437 = vmatpush.msra.mxu0 %v2414
    %2438 = vmatpush.msra.mxu0 %v2413
    %2439 = vmatpush.msra.mxu0 %v2412
    %2440 = vmatpush.msra.mxu0 %v2411
    %2441 = vmatpush.msra.mxu0 %v2410
    %2442 = vmatpush.msra.mxu0 %v2409
    %2443 = vmatpush.msra.mxu0 %v2408
    %2444 = vmatpush.msra.mxu0 %v2407
    %2445 = vmatpush.msra.mxu0 %v2406
    %2446 = vmatpush.msra.mxu0 %v2405
    %2447 = vmatpush.msra.mxu0 %v2404
    %2448 = vmatpush.msra.mxu0 %v2403
    %2449 = vmatpush.msra.mxu0 %v2402
    %2450 = vmatmul.f32.gmra.mxu0 %v2394
    %v2451 = vpop.f32.mrf.mxu0
    %v2452 = vadd.f32 0.0, %v2451
    %2453 = vdwg.mxu0
    %2454 = vmatpush.msra.mxu0 %v2433
    %2455 = vmatpush.msra.mxu0 %v2432
    %2456 = vmatpush.msra.mxu0 %v2431
    %2457 = vmatpush.msra.mxu0 %v2430
    %2458 = vmatpush.msra.mxu0 %v2429
    %2459 = vmatpush.msra.mxu0 %v2428
    %2460 = vmatpush.msra.mxu0 %v2427
    %2461 = vmatpush.msra.mxu0 %v2426
    %2462 = vmatpush.msra.mxu0 %v2425
    %2463 = vmatpush.msra.mxu0 %v2424
    %2464 = vmatpush.msra.mxu0 %v2423
    %2465 = vmatpush.msra.mxu0 %v2422
    %2466 = vmatpush.msra.mxu0 %v2421
    %2467 = vmatpush.msra.mxu0 %v2420
    %2468 = vmatpush.msra.mxu0 %v2419
    %2469 = vmatpush.msra.mxu0 %v2418
    %2470 = vmatmul.f32.gmra.mxu0 %v2401
    %v2471 = vpop.f32.mrf.mxu0
    %v2472 = vadd.f32 %v2452, %v2471
    %2473 = vdwg.mxu0
    %v2474 = vmul.f32 %v2472, 0.03125
    %v2475 = vld [vmem:[#allocation16] sm:$0xff]
    %v2476 = vld [vmem:[#allocation16 + $0x8] sm:$0xff]
    %v2477 = vld [vmem:[#allocation16 + $0x10] sm:$0xff]
    %v2478 = vld [vmem:[#allocation16 + $0x18] sm:$0xff]
    %vm2479 = vcmask 130048
    %v2481 = vsel %vm2479, %v2474, 0
    %2483 = vmatpush.msra.mxu0 0.0
    %2484 = vmatpush.msra.mxu0 0.0
    %2485 = vmatpush.msra.mxu0 0.0
    %2486 = vmatpush.msra.mxu0 0.0
    %2487 = vmatpush.msra.mxu0 0.0
    %2488 = vmatpush.msra.mxu0 0.0
    %2489 = vmatpush.msra.mxu0 0.0
    %2490 = vmatpush.msra.mxu0 0.0
    %2491 = vmatpush.msra.mxu0 0.0
    %2492 = vmatpush.msra.mxu0 0.0
    %2493 = vmatpush.msra.mxu0 0.0
    %2494 = vmatpush.msra.mxu0 0.0
    %2495 = vmatpush.msra.mxu0 0.0
    %2496 = vmatpush.msra.mxu0 0.0
    %2497 = vmatpush.msra.mxu0 %v2477
    %2498 = vmatpush.msra.mxu0 %v2475
    %2499 = vmatmul.f32.gmra.mxu0 %v2481
    %v2500 = vpop.f32.mrf.mxu0
    %v2501 = vadd.f32 0.0, %v2500
    %2502 = vdwg.mxu0
    %2503 = vmatpush.msra.mxu0 0.0
    %2504 = vmatpush.msra.mxu0 0.0
    %2505 = vmatpush.msra.mxu0 0.0
    %2506 = vmatpush.msra.mxu0 0.0
    %2507 = vmatpush.msra.mxu0 0.0
    %2508 = vmatpush.msra.mxu0 0.0
    %2509 = vmatpush.msra.mxu0 0.0
    %2510 = vmatpush.msra.mxu0 0.0
    %2511 = vmatpush.msra.mxu0 0.0
    %2512 = vmatpush.msra.mxu0 0.0
    %2513 = vmatpush.msra.mxu0 0.0
    %2514 = vmatpush.msra.mxu0 0.0
    %2515 = vmatpush.msra.mxu0 0.0
    %2516 = vmatpush.msra.mxu0 0.0
    %2517 = vmatpush.msra.mxu0 %v2478
    %2518 = vmatpush.msra.mxu0 %v2476
    %2519 = vmatmul.f32.gmra.mxu0 %v2481
    %v2520 = vpop.f32.mrf.mxu0
    %v2521 = vadd.f32 0.0, %v2520
    %2522 = vdwg.mxu0
    %v2523 = vperm.slane %v2501, 0
    %v2524 = vperm.slane %v2521, 0
    %v2525 = vsub.f32 %v2306, %v2523
    %v2526 = vsub.f32 %v2386, %v2524
    %v2527 = vmul.f32 %v2525, %v2525
    %v2528 = vmul.f32 %v2526, %v2526
    %v2529 = vsel %vm1546, %v2527, 0.0
    %v2530 = vrot.slane %v2529, 4
    %v2531 = vadd.f32 %v2529, %v2530
    %v2532 = vrot.slane %v2531, 2
    %v2533 = vadd.f32 %v2531, %v2532
    %v2534 = vrot.slane %v2533, 1
    %v2535 = vadd.f32 %v2533, %v2534
    %v2536 = vsel %vm1546, %v2528, 0.0
    %v2537 = vrot.slane %v2536, 4
    %v2538 = vadd.f32 %v2536, %v2537
    %v2539 = vrot.slane %v2538, 2
    %v2540 = vadd.f32 %v2538, %v2539
    %v2541 = vrot.slane %v2540, 1
    %v2542 = vadd.f32 %v2540, %v2541
    %2543 = vmatpush.msra.mxu0 %v2417
    %2544 = vmatpush.msra.mxu0 %v2416
    %2545 = vmatpush.msra.mxu0 %v2415
    %2546 = vmatpush.msra.mxu0 %v2414
    %2547 = vmatpush.msra.mxu0 %v2413
    %2548 = vmatpush.msra.mxu0 %v2412
    %2549 = vmatpush.msra.mxu0 %v2411
    %2550 = vmatpush.msra.mxu0 %v2410
    %2551 = vmatpush.msra.mxu0 %v2409
    %2552 = vmatpush.msra.mxu0 %v2408
    %2553 = vmatpush.msra.mxu0 %v2407
    %2554 = vmatpush.msra.mxu0 %v2406
    %2555 = vmatpush.msra.mxu0 %v2405
    %2556 = vmatpush.msra.mxu0 %v2404
    %2557 = vmatpush.msra.mxu0 %v2403
    %2558 = vmatpush.msra.mxu0 %v2402
    %2559 = vmatmul.f32.gmra.mxu0 %v2535
    %v2560 = vpop.f32.mrf.mxu0
    %v2561 = vadd.f32 0.0, %v2560
    %2562 = vdwg.mxu0
    %2563 = vmatpush.msra.mxu0 %v2433
    %2564 = vmatpush.msra.mxu0 %v2432
    %2565 = vmatpush.msra.mxu0 %v2431
    %2566 = vmatpush.msra.mxu0 %v2430
    %2567 = vmatpush.msra.mxu0 %v2429
    %2568 = vmatpush.msra.mxu0 %v2428
    %2569 = vmatpush.msra.mxu0 %v2427
    %2570 = vmatpush.msra.mxu0 %v2426
    %2571 = vmatpush.msra.mxu0 %v2425
    %2572 = vmatpush.msra.mxu0 %v2424
    %2573 = vmatpush.msra.mxu0 %v2423
    %2574 = vmatpush.msra.mxu0 %v2422
    %2575 = vmatpush.msra.mxu0 %v2421
    %2576 = vmatpush.msra.mxu0 %v2420
    %2577 = vmatpush.msra.mxu0 %v2419
    %2578 = vmatpush.msra.mxu0 %v2418
    %2579 = vmatmul.f32.gmra.mxu0 %v2542
    %v2580 = vpop.f32.mrf.mxu0
    %v2581 = vadd.f32 %v2561, %v2580
    %2582 = vdwg.mxu0
    %v2583 = vmul.f32 %v2581, 0.03125
    %v2585 = vsel %vm2479, %v2583, 0
    %2587 = vmatpush.msra.mxu0 0.0
    %2588 = vmatpush.msra.mxu0 0.0
    %2589 = vmatpush.msra.mxu0 0.0
    %2590 = vmatpush.msra.mxu0 0.0
    %2591 = vmatpush.msra.mxu0 0.0
    %2592 = vmatpush.msra.mxu0 0.0
    %2593 = vmatpush.msra.mxu0 0.0
    %2594 = vmatpush.msra.mxu0 0.0
    %2595 = vmatpush.msra.mxu0 0.0
    %2596 = vmatpush.msra.mxu0 0.0
    %2597 = vmatpush.msra.mxu0 0.0
    %2598 = vmatpush.msra.mxu0 0.0
    %2599 = vmatpush.msra.mxu0 0.0
    %2600 = vmatpush.msra.mxu0 0.0
    %2601 = vmatpush.msra.mxu0 %v2477
    %2602 = vmatpush.msra.mxu0 %v2475
    %2603 = vmatmul.f32.gmra.mxu0 %v2585
    %v2604 = vpop.f32.mrf.mxu0
    %v2605 = vadd.f32 1e-05, %v2604
    %2606 = vdwg.mxu0
    %2607 = vmatpush.msra.mxu0 0.0
    %2608 = vmatpush.msra.mxu0 0.0
    %2609 = vmatpush.msra.mxu0 0.0
    %2610 = vmatpush.msra.mxu0 0.0
    %2611 = vmatpush.msra.mxu0 0.0
    %2612 = vmatpush.msra.mxu0 0.0
    %2613 = vmatpush.msra.mxu0 0.0
    %2614 = vmatpush.msra.mxu0 0.0
    %2615 = vmatpush.msra.mxu0 0.0
    %2616 = vmatpush.msra.mxu0 0.0
    %2617 = vmatpush.msra.mxu0 0.0
    %2618 = vmatpush.msra.mxu0 0.0
    %2619 = vmatpush.msra.mxu0 0.0
    %2620 = vmatpush.msra.mxu0 0.0
    %2621 = vmatpush.msra.mxu0 %v2478
    %2622 = vmatpush.msra.mxu0 %v2476
    %2623 = vmatmul.f32.gmra.mxu0 %v2585
    %v2624 = vpop.f32.mrf.mxu0
    %v2625 = vadd.f32 1e-05, %v2624
    %2626 = vdwg.mxu0
    %v2627 = vrsqrt.pop %v2605
    %v2628 = vmul.f32 %v2627, %v2605
    %v2629 = vmul.f32 %v2628, %v2627
    %v2630 = vmul.f32 0.5, %v2629
    %v2631 = vsub.f32 1.5, %v2630
    %v2632 = vmul.f32 %v2627, %v2631
    %vm2633 = vweird.f32 %v2605
    %vm2634 = vweird.f32 %v2627
    %vm2635 = vmor %vm2633, %vm2634
    %v2636 = vsel %vm2635, %v2627, %v2632
    %v2637 = vrsqrt.pop %v2625
    %v2638 = vmul.f32 %v2637, %v2625
    %v2639 = vmul.f32 %v2638, %v2637
    %v2640 = vmul.f32 0.5, %v2639
    %v2641 = vsub.f32 1.5, %v2640
    %v2642 = vmul.f32 %v2637, %v2641
    %vm2643 = vweird.f32 %v2625
    %vm2644 = vweird.f32 %v2637
    %vm2645 = vmor %vm2643, %vm2644
    %v2646 = vsel %vm2645, %v2637, %v2642
    %v2647 = vperm.slane %v2636, 0
    %v2648 = vperm.slane %v2646, 0
    %v2649 = vmul.f32 %v2525, %v2647
    %v2650 = vmul.f32 %v2526, %v2648
    %v2651 = vld [vmem:[#allocation13] sm:$0x3]
    %v2653 = vperm.slane %v2651, 0
    %v2654 = vperm.slane %v2651, 1
    %v2657 = vmul.f32 %v2649, %v2653
    %v2658 = vmul.f32 %v2650, %v2654
    %v2659 = vld [vmem:[#allocation14] sm:$0x3]
    %v2661 = vperm.slane %v2659, 0
    %v2662 = vperm.slane %v2659, 1
    %v2665 = vadd.f32 %v2657, %v2661
    %v2666 = vadd.f32 %v2658, %v2662
    %vm2667 = vcmp.ge.f32.partialorder %v2665, 0.0
    %vm2668 = vcmp.ge.f32.partialorder %v2666, 0.0
    %v2669 = vmul.f32 %v2665, 0.01
    %v2670 = vmul.f32 %v2666, 0.01
    %v2671 = vsel %vm2667, %v2665, %v2669
    %v2672 = vsel %vm2668, %v2666, %v2670
    %v2673 = vld [vmem:[%s12] sm:$0xff]
    %v2674 = vld [vmem:[%s12 + $0x8] sm:$0xff]
    %v2675 = vld [vmem:[%s12 + $0x10] sm:$0xff]
    %v2676 = vld [vmem:[%s12 + $0x18] sm:$0xff]
    %v2677 = vld [vmem:[%s12 + $0x20] sm:$0xff]
    %v2678 = vld [vmem:[%s12 + $0x28] sm:$0xff]
    %v2679 = vld [vmem:[%s12 + $0x30] sm:$0xff]
    %v2680 = vld [vmem:[%s12 + $0x38] sm:$0xff]
    %v2681 = vld [vmem:[%s12 + $0x40] sm:$0xff]
    %v2682 = vld [vmem:[%s12 + $0x48] sm:$0xff]
    %v2683 = vld [vmem:[%s12 + $0x50] sm:$0xff]
    %v2684 = vld [vmem:[%s12 + $0x58] sm:$0xff]
    %v2685 = vld [vmem:[%s12 + $0x60] sm:$0xff]
    %v2686 = vld [vmem:[%s12 + $0x68] sm:$0xff]
    %v2687 = vld [vmem:[%s12 + $0x70] sm:$0xff]
    %v2688 = vld [vmem:[%s12 + $0x78] sm:$0xff]
    %v2689 = vld [vmem:[%s12 + $0x80] sm:$0xff]
    %v2690 = vld [vmem:[%s12 + $0x88] sm:$0xff]
    %v2691 = vld [vmem:[%s12 + $0x90] sm:$0xff]
    %v2692 = vld [vmem:[%s12 + $0x98] sm:$0xff]
    %v2693 = vld [vmem:[%s12 + $0xa0] sm:$0xff]
    %v2694 = vld [vmem:[%s12 + $0xa8] sm:$0xff]
    %v2695 = vld [vmem:[%s12 + $0xb0] sm:$0xff]
    %v2696 = vld [vmem:[%s12 + $0xb8] sm:$0xff]
    %v2697 = vld [vmem:[%s12 + $0xc0] sm:$0xff]
    %v2698 = vld [vmem:[%s12 + $0xc8] sm:$0xff]
    %v2699 = vld [vmem:[%s12 + $0xd0] sm:$0xff]
    %v2700 = vld [vmem:[%s12 + $0xd8] sm:$0xff]
    %v2701 = vld [vmem:[%s12 + $0xe0] sm:$0xff]
    %v2702 = vld [vmem:[%s12 + $0xe8] sm:$0xff]
    %v2703 = vld [vmem:[%s12 + $0xf0] sm:$0xff]
    %v2704 = vld [vmem:[%s12 + $0xf8] sm:$0xff]
    %v2705 = vld [vmem:[#allocation17] sm:$0x1]
    %v2707 = vperm.slane %v2705, 0
    %2709 = vmatpush.msra.mxu0 %v2688
    %2710 = vmatpush.msra.mxu0 %v2687
    %2711 = vmatpush.msra.mxu0 %v2686
    %2712 = vmatpush.msra.mxu0 %v2685
    %2713 = vmatpush.msra.mxu0 %v2684
    %2714 = vmatpush.msra.mxu0 %v2683
    %2715 = vmatpush.msra.mxu0 %v2682
    %2716 = vmatpush.msra.mxu0 %v2681
    %2717 = vmatpush.msra.mxu0 %v2680
    %2718 = vmatpush.msra.mxu0 %v2679
    %2719 = vmatpush.msra.mxu0 %v2678
    %2720 = vmatpush.msra.mxu0 %v2677
    %2721 = vmatpush.msra.mxu0 %v2676
    %2722 = vmatpush.msra.mxu0 %v2675
    %2723 = vmatpush.msra.mxu0 %v2674
    %2724 = vmatpush.msra.mxu0 %v2673
    %2725 = vmatmul.f32.gmra.mxu0 %v2671
    %v2726 = vpop.f32.mrf.mxu0
    %v2727 = vadd.f32 %v2707, %v2726
    %2728 = vdwg.mxu0
    %2729 = vmatpush.msra.mxu0 %v2704
    %2730 = vmatpush.msra.mxu0 %v2703
    %2731 = vmatpush.msra.mxu0 %v2702
    %2732 = vmatpush.msra.mxu0 %v2701
    %2733 = vmatpush.msra.mxu0 %v2700
    %2734 = vmatpush.msra.mxu0 %v2699
    %2735 = vmatpush.msra.mxu0 %v2698
    %2736 = vmatpush.msra.mxu0 %v2697
    %2737 = vmatpush.msra.mxu0 %v2696
    %2738 = vmatpush.msra.mxu0 %v2695
    %2739 = vmatpush.msra.mxu0 %v2694
    %2740 = vmatpush.msra.mxu0 %v2693
    %2741 = vmatpush.msra.mxu0 %v2692
    %2742 = vmatpush.msra.mxu0 %v2691
    %2743 = vmatpush.msra.mxu0 %v2690
    %2744 = vmatpush.msra.mxu0 %v2689
    %2745 = vmatmul.f32.gmra.mxu0 %v2672
    %v2746 = vpop.f32.mrf.mxu0
    %v2747 = vadd.f32 %v2727, %v2746
    %2748 = vdwg.mxu0
    %v2749 = vld [vmem:[%s14] sm:$0xff]
    %v2750 = vld [vmem:[%s14 + $0x8] sm:$0xff]
    %v2751 = vld [vmem:[%s14 + $0x10] sm:$0xff]
    %v2752 = vld [vmem:[%s14 + $0x18] sm:$0xff]
    %v2753 = vld [vmem:[%s14 + $0x20] sm:$0xff]
    %v2754 = vld [vmem:[%s14 + $0x28] sm:$0xff]
    %v2755 = vld [vmem:[%s14 + $0x30] sm:$0xff]
    %v2756 = vld [vmem:[%s14 + $0x38] sm:$0xff]
    %v2757 = vld [vmem:[%s14 + $0x40] sm:$0xff]
    %v2758 = vld [vmem:[%s14 + $0x48] sm:$0xff]
    %v2759 = vld [vmem:[%s14 + $0x50] sm:$0xff]
    %v2760 = vld [vmem:[%s14 + $0x58] sm:$0xff]
    %v2761 = vld [vmem:[%s14 + $0x60] sm:$0xff]
    %v2762 = vld [vmem:[%s14 + $0x68] sm:$0xff]
    %v2763 = vld [vmem:[%s14 + $0x70] sm:$0xff]
    %v2764 = vld [vmem:[%s14 + $0x78] sm:$0xff]
    %v2765 = vld [vmem:[%s14 + $0x80] sm:$0xff]
    %v2766 = vld [vmem:[%s14 + $0x88] sm:$0xff]
    %v2767 = vld [vmem:[%s14 + $0x90] sm:$0xff]
    %v2768 = vld [vmem:[%s14 + $0x98] sm:$0xff]
    %v2769 = vld [vmem:[%s14 + $0xa0] sm:$0xff]
    %v2770 = vld [vmem:[%s14 + $0xa8] sm:$0xff]
    %v2771 = vld [vmem:[%s14 + $0xb0] sm:$0xff]
    %v2772 = vld [vmem:[%s14 + $0xb8] sm:$0xff]
    %v2773 = vld [vmem:[%s14 + $0xc0] sm:$0xff]
    %v2774 = vld [vmem:[%s14 + $0xc8] sm:$0xff]
    %v2775 = vld [vmem:[%s14 + $0xd0] sm:$0xff]
    %v2776 = vld [vmem:[%s14 + $0xd8] sm:$0xff]
    %v2777 = vld [vmem:[%s14 + $0xe0] sm:$0xff]
    %v2778 = vld [vmem:[%s14 + $0xe8] sm:$0xff]
    %v2779 = vld [vmem:[%s14 + $0xf0] sm:$0xff]
    %v2780 = vld [vmem:[%s14 + $0xf8] sm:$0xff]
    %v2781 = vld [vmem:[#allocation19] sm:$0x1]
    %v2783 = vperm.slane %v2781, 0
    %2785 = vmatpush.msra.mxu0 %v2764
    %2786 = vmatpush.msra.mxu0 %v2763
    %2787 = vmatpush.msra.mxu0 %v2762
    %2788 = vmatpush.msra.mxu0 %v2761
    %2789 = vmatpush.msra.mxu0 %v2760
    %2790 = vmatpush.msra.mxu0 %v2759
    %2791 = vmatpush.msra.mxu0 %v2758
    %2792 = vmatpush.msra.mxu0 %v2757
    %2793 = vmatpush.msra.mxu0 %v2756
    %2794 = vmatpush.msra.mxu0 %v2755
    %2795 = vmatpush.msra.mxu0 %v2754
    %2796 = vmatpush.msra.mxu0 %v2753
    %2797 = vmatpush.msra.mxu0 %v2752
    %2798 = vmatpush.msra.mxu0 %v2751
    %2799 = vmatpush.msra.mxu0 %v2750
    %2800 = vmatpush.msra.mxu0 %v2749
    %2801 = vmatmul.f32.gmra.mxu0 %v2671
    %v2802 = vpop.f32.mrf.mxu0
    %v2803 = vadd.f32 %v2783, %v2802
    %2804 = vdwg.mxu0
    %2805 = vmatpush.msra.mxu0 %v2780
    %2806 = vmatpush.msra.mxu0 %v2779
    %2807 = vmatpush.msra.mxu0 %v2778
    %2808 = vmatpush.msra.mxu0 %v2777
    %2809 = vmatpush.msra.mxu0 %v2776
    %2810 = vmatpush.msra.mxu0 %v2775
    %2811 = vmatpush.msra.mxu0 %v2774
    %2812 = vmatpush.msra.mxu0 %v2773
    %2813 = vmatpush.msra.mxu0 %v2772
    %2814 = vmatpush.msra.mxu0 %v2771
    %2815 = vmatpush.msra.mxu0 %v2770
    %2816 = vmatpush.msra.mxu0 %v2769
    %2817 = vmatpush.msra.mxu0 %v2768
    %2818 = vmatpush.msra.mxu0 %v2767
    %2819 = vmatpush.msra.mxu0 %v2766
    %2820 = vmatpush.msra.mxu0 %v2765
    %2821 = vmatmul.f32.gmra.mxu0 %v2672
    %v2822 = vpop.f32.mrf.mxu0
    %v2823 = vadd.f32 %v2803, %v2822
    %2824 = vdwg.mxu0
    %vm2825 = vcmask 254976
    %2826 = vst.msk [vmem:[#allocation34] sm:$0x3] %vm2825, %v2747
    %2827 = vst.msk [vmem:[#allocation35] sm:$0x3] %vm2825, %v2823
    %v2828 = vmul.f32 %v2823, 0.5
    %v2829 = vmul.f32 %v2828, 1.442695
    %v2830 = vpow.pop %v2829
    %v2831 = vld [vmem:[#allocation2] sm:$0x3]
    %v2832 = vmul.f32 %v2830, %v2831
    %v2833 = vadd.f32 %v2747, %v2832
    %v2834 = vld [vmem:[#allocation20] sm:$0xff]
    %v2835 = vld [vmem:[#allocation20 + $0x8] sm:$0xff]
    %v2836 = vld [vmem:[#allocation20 + $0x10] sm:$0xff]
    %v2837 = vld [vmem:[#allocation20 + $0x18] sm:$0xff]
    %v2838 = vld [vmem:[#allocation20 + $0x20] sm:$0xff]
    %v2839 = vld [vmem:[#allocation20 + $0x28] sm:$0xff]
    %v2840 = vld [vmem:[#allocation20 + $0x30] sm:$0xff]
    %v2841 = vld [vmem:[#allocation20 + $0x38] sm:$0xff]
    %vm2842 = vcmask 261120
    %v2844 = vsel %vm2842, %v2833, 0
    %2846 = vmatpush.msra.mxu0 0.0
    %2847 = vmatpush.msra.mxu0 0.0
    %2848 = vmatpush.msra.mxu0 0.0
    %2849 = vmatpush.msra.mxu0 0.0
    %2850 = vmatpush.msra.mxu0 0.0
    %2851 = vmatpush.msra.mxu0 0.0
    %2852 = vmatpush.msra.mxu0 0.0
    %2853 = vmatpush.msra.mxu0 0.0
    %2854 = vmatpush.msra.mxu0 0.0
    %2855 = vmatpush.msra.mxu0 0.0
    %2856 = vmatpush.msra.mxu0 0.0
    %2857 = vmatpush.msra.mxu0 0.0
    %2858 = vmatpush.msra.mxu0 %v2840
    %2859 = vmatpush.msra.mxu0 %v2838
    %2860 = vmatpush.msra.mxu0 %v2836
    %2861 = vmatpush.msra.mxu0 %v2834
    %2862 = vmatmul.f32.gmra.mxu0 %v2844
    %v2863 = vpop.f32.mrf.mxu0
    %v2864 = vadd.f32 0.0, %v2863
    %2865 = vdwg.mxu0
    %2866 = vmatpush.msra.mxu0 0.0
    %2867 = vmatpush.msra.mxu0 0.0
    %2868 = vmatpush.msra.mxu0 0.0
    %2869 = vmatpush.msra.mxu0 0.0
    %2870 = vmatpush.msra.mxu0 0.0
    %2871 = vmatpush.msra.mxu0 0.0
    %2872 = vmatpush.msra.mxu0 0.0
    %2873 = vmatpush.msra.mxu0 0.0
    %2874 = vmatpush.msra.mxu0 0.0
    %2875 = vmatpush.msra.mxu0 0.0
    %2876 = vmatpush.msra.mxu0 0.0
    %2877 = vmatpush.msra.mxu0 0.0
    %2878 = vmatpush.msra.mxu0 %v2841
    %2879 = vmatpush.msra.mxu0 %v2839
    %2880 = vmatpush.msra.mxu0 %v2837
    %2881 = vmatpush.msra.mxu0 %v2835
    %2882 = vmatmul.f32.gmra.mxu0 %v2844
    %v2883 = vpop.f32.mrf.mxu0
    %v2884 = vadd.f32 0.0, %v2883
    %2885 = vdwg.mxu0
    %v2886 = vsel %vm1546, %v2864, 0.0
    %v2887 = vrot.slane %v2886, 4
    %v2888 = vadd.f32 %v2886, %v2887
    %v2889 = vrot.slane %v2888, 2
    %v2890 = vadd.f32 %v2888, %v2889
    %v2891 = vrot.slane %v2890, 1
    %v2892 = vadd.f32 %v2890, %v2891
    %v2893 = vsel %vm1546, %v2884, 0.0
    %v2894 = vrot.slane %v2893, 4
    %v2895 = vadd.f32 %v2893, %v2894
    %v2896 = vrot.slane %v2895, 2
    %v2897 = vadd.f32 %v2895, %v2896
    %v2898 = vrot.slane %v2897, 1
    %v2899 = vadd.f32 %v2897, %v2898
    %v2900 = vrcp.pop 2.0
    %v2901 = vmul.f32 2.0, %v2900
    %v2902 = vsub.f32 1.0, %v2901
    %v2903 = vmul.f32 %v2900, %v2902
    %v2904 = vadd.f32 %v2900, %v2903
    %vm2905 = vweird.f32 %v2900
    %v2906 = vsel %vm2905, %v2900, %v2904
    %v2907 = vmul.f32 %v2892, %v2906
    %v2908 = vmul.f32 %v2899, %v2906
    %v2909 = vsub.f32 %v2864, %v2907
    %v2910 = vsub.f32 %v2884, %v2908
    %v2911 = vmul.f32 %v2909, %v2909
    %v2912 = vmul.f32 %v2910, %v2910
    %v2913 = vsel %vm1546, %v2911, 0.0
    %v2914 = vrot.slane %v2913, 4
    %v2915 = vadd.f32 %v2913, %v2914
    %v2916 = vrot.slane %v2915, 2
    %v2917 = vadd.f32 %v2915, %v2916
    %v2918 = vrot.slane %v2917, 1
    %v2919 = vadd.f32 %v2917, %v2918
    %v2920 = vsel %vm1546, %v2912, 0.0
    %v2921 = vrot.slane %v2920, 4
    %v2922 = vadd.f32 %v2920, %v2921
    %v2923 = vrot.slane %v2922, 2
    %v2924 = vadd.f32 %v2922, %v2923
    %v2925 = vrot.slane %v2924, 1
    %v2926 = vadd.f32 %v2924, %v2925
    %v2927 = vmul.f32 %v2919, %v2906
    %v2928 = vmul.f32 %v2926, %v2906
    %v2929 = vadd.f32 %v2927, 1e-05
    %v2930 = vadd.f32 %v2928, 1e-05
    %v2931 = vrsqrt.pop %v2929
    %v2932 = vmul.f32 %v2931, %v2929
    %v2933 = vmul.f32 %v2932, %v2931
    %v2934 = vmul.f32 0.5, %v2933
    %v2935 = vsub.f32 1.5, %v2934
    %v2936 = vmul.f32 %v2931, %v2935
    %vm2937 = vweird.f32 %v2929
    %vm2938 = vweird.f32 %v2931
    %vm2939 = vmor %vm2937, %vm2938
    %v2940 = vsel %vm2939, %v2931, %v2936
    %v2941 = vrsqrt.pop %v2930
    %v2942 = vmul.f32 %v2941, %v2930
    %v2943 = vmul.f32 %v2942, %v2941
    %v2944 = vmul.f32 0.5, %v2943
    %v2945 = vsub.f32 1.5, %v2944
    %v2946 = vmul.f32 %v2941, %v2945
    %vm2947 = vweird.f32 %v2930
    %vm2948 = vweird.f32 %v2941
    %vm2949 = vmor %vm2947, %vm2948
    %v2950 = vsel %vm2949, %v2941, %v2946
    %v2951 = vmul.f32 %v2909, %v2940
    %v2952 = vmul.f32 %v2910, %v2950
    %v2953 = vld [vmem:[#allocation22] sm:$0x3]
    %v2955 = vperm.slane %v2953, 0
    %v2956 = vperm.slane %v2953, 1
    %v2959 = vmul.f32 %v2951, %v2955
    %v2960 = vmul.f32 %v2952, %v2956
    %v2961 = vld [vmem:[#allocation23] sm:$0x3]
    %v2963 = vperm.slane %v2961, 0
    %v2964 = vperm.slane %v2961, 1
    %v2967 = vadd.f32 %v2959, %v2963
    %v2968 = vadd.f32 %v2960, %v2964
    %vm2969 = vcmp.ge.f32.partialorder %v2967, 0.0
    %vm2970 = vcmp.ge.f32.partialorder %v2968, 0.0
    %v2971 = vmul.f32 %v2967, 0.01
    %v2972 = vmul.f32 %v2968, 0.01
    %v2973 = vsel %vm2969, %v2967, %v2971
    %v2974 = vsel %vm2970, %v2968, %v2972
    %v2975 = vld [vmem:[#allocation25] sm:$0xff]
    %v2976 = vld [vmem:[#allocation25 + $0x8] sm:$0xff]
    %v2977 = vld [vmem:[#allocation25 + $0x10] sm:$0xff]
    %v2978 = vld [vmem:[#allocation25 + $0x18] sm:$0xff]
    %v2979 = vld [vmem:[#allocation25 + $0x20] sm:$0xff]
    %v2980 = vld [vmem:[#allocation25 + $0x28] sm:$0xff]
    %v2981 = vld [vmem:[#allocation25 + $0x30] sm:$0xff]
    %v2982 = vld [vmem:[#allocation25 + $0x38] sm:$0xff]
    %v2983 = vld [vmem:[#allocation25 + $0x40] sm:$0xff]
    %v2984 = vld [vmem:[#allocation25 + $0x48] sm:$0xff]
    %v2985 = vld [vmem:[#allocation25 + $0x50] sm:$0xff]
    %v2986 = vld [vmem:[#allocation25 + $0x58] sm:$0xff]
    %v2987 = vld [vmem:[#allocation25 + $0x60] sm:$0xff]
    %v2988 = vld [vmem:[#allocation25 + $0x68] sm:$0xff]
    %v2989 = vld [vmem:[#allocation25 + $0x70] sm:$0xff]
    %v2990 = vld [vmem:[#allocation25 + $0x78] sm:$0xff]
    %v2991 = vld [vmem:[#allocation25 + $0x80] sm:$0xff]
    %v2992 = vld [vmem:[#allocation25 + $0x88] sm:$0xff]
    %v2993 = vld [vmem:[#allocation25 + $0x90] sm:$0xff]
    %v2994 = vld [vmem:[#allocation25 + $0x98] sm:$0xff]
    %v2995 = vld [vmem:[#allocation25 + $0xa0] sm:$0xff]
    %v2996 = vld [vmem:[#allocation25 + $0xa8] sm:$0xff]
    %v2997 = vld [vmem:[#allocation25 + $0xb0] sm:$0xff]
    %v2998 = vld [vmem:[#allocation25 + $0xb8] sm:$0xff]
    %v2999 = vld [vmem:[#allocation25 + $0xc0] sm:$0xff]
    %v3000 = vld [vmem:[#allocation25 + $0xc8] sm:$0xff]
    %v3001 = vld [vmem:[#allocation25 + $0xd0] sm:$0xff]
    %v3002 = vld [vmem:[#allocation25 + $0xd8] sm:$0xff]
    %v3003 = vld [vmem:[#allocation25 + $0xe0] sm:$0xff]
    %v3004 = vld [vmem:[#allocation25 + $0xe8] sm:$0xff]
    %v3005 = vld [vmem:[#allocation25 + $0xf0] sm:$0xff]
    %v3006 = vld [vmem:[#allocation25 + $0xf8] sm:$0xff]
    %v3007 = vld [vmem:[#allocation25 + $0x100] sm:$0xff]
    %v3008 = vld [vmem:[#allocation25 + $0x108] sm:$0xff]
    %v3009 = vld [vmem:[#allocation25 + $0x110] sm:$0xff]
    %v3010 = vld [vmem:[#allocation25 + $0x118] sm:$0xff]
    %v3011 = vld [vmem:[#allocation25 + $0x120] sm:$0xff]
    %v3012 = vld [vmem:[#allocation25 + $0x128] sm:$0xff]
    %v3013 = vld [vmem:[#allocation25 + $0x130] sm:$0xff]
    %v3014 = vld [vmem:[#allocation25 + $0x138] sm:$0xff]
    %v3015 = vld [vmem:[#allocation25 + $0x140] sm:$0xff]
    %v3016 = vld [vmem:[#allocation25 + $0x148] sm:$0xff]
    %v3017 = vld [vmem:[#allocation25 + $0x150] sm:$0xff]
    %v3018 = vld [vmem:[#allocation25 + $0x158] sm:$0xff]
    %v3019 = vld [vmem:[#allocation25 + $0x160] sm:$0xff]
    %v3020 = vld [vmem:[#allocation25 + $0x168] sm:$0xff]
    %v3021 = vld [vmem:[#allocation25 + $0x170] sm:$0xff]
    %v3022 = vld [vmem:[#allocation25 + $0x178] sm:$0xff]
    %v3023 = vld [vmem:[#allocation25 + $0x180] sm:$0xff]
    %v3024 = vld [vmem:[#allocation25 + $0x188] sm:$0xff]
    %v3025 = vld [vmem:[#allocation25 + $0x190] sm:$0xff]
    %v3026 = vld [vmem:[#allocation25 + $0x198] sm:$0xff]
    %v3027 = vld [vmem:[#allocation25 + $0x1a0] sm:$0xff]
    %v3028 = vld [vmem:[#allocation25 + $0x1a8] sm:$0xff]
    %v3029 = vld [vmem:[#allocation25 + $0x1b0] sm:$0xff]
    %v3030 = vld [vmem:[#allocation25 + $0x1b8] sm:$0xff]
    %v3031 = vld [vmem:[#allocation25 + $0x1c0] sm:$0xff]
    %v3032 = vld [vmem:[#allocation25 + $0x1c8] sm:$0xff]
    %v3033 = vld [vmem:[#allocation25 + $0x1d0] sm:$0xff]
    %v3034 = vld [vmem:[#allocation25 + $0x1d8] sm:$0xff]
    %v3035 = vld [vmem:[#allocation25 + $0x1e0] sm:$0xff]
    %v3036 = vld [vmem:[#allocation25 + $0x1e8] sm:$0xff]
    %v3037 = vld [vmem:[#allocation25 + $0x1f0] sm:$0xff]
    %v3038 = vld [vmem:[#allocation25 + $0x1f8] sm:$0xff]
    %v3039 = vld [vmem:[#allocation25 + $0x200] sm:$0xff]
    %v3040 = vld [vmem:[#allocation25 + $0x208] sm:$0xff]
    %v3041 = vld [vmem:[#allocation25 + $0x210] sm:$0xff]
    %v3042 = vld [vmem:[#allocation25 + $0x218] sm:$0xff]
    %v3043 = vld [vmem:[#allocation25 + $0x220] sm:$0xff]
    %v3044 = vld [vmem:[#allocation25 + $0x228] sm:$0xff]
    %v3045 = vld [vmem:[#allocation25 + $0x230] sm:$0xff]
    %v3046 = vld [vmem:[#allocation25 + $0x238] sm:$0xff]
    %v3047 = vld [vmem:[#allocation25 + $0x240] sm:$0xff]
    %v3048 = vld [vmem:[#allocation25 + $0x248] sm:$0xff]
    %v3049 = vld [vmem:[#allocation25 + $0x250] sm:$0xff]
    %v3050 = vld [vmem:[#allocation25 + $0x258] sm:$0xff]
    %v3051 = vld [vmem:[#allocation25 + $0x260] sm:$0xff]
    %v3052 = vld [vmem:[#allocation25 + $0x268] sm:$0xff]
    %v3053 = vld [vmem:[#allocation25 + $0x270] sm:$0xff]
    %v3054 = vld [vmem:[#allocation25 + $0x278] sm:$0xff]
    %v3055 = vld [vmem:[#allocation25 + $0x280] sm:$0xff]
    %v3056 = vld [vmem:[#allocation25 + $0x288] sm:$0xff]
    %v3057 = vld [vmem:[#allocation25 + $0x290] sm:$0xff]
    %v3058 = vld [vmem:[#allocation25 + $0x298] sm:$0xff]
    %v3059 = vld [vmem:[#allocation25 + $0x2a0] sm:$0xff]
    %v3060 = vld [vmem:[#allocation25 + $0x2a8] sm:$0xff]
    %v3061 = vld [vmem:[#allocation25 + $0x2b0] sm:$0xff]
    %v3062 = vld [vmem:[#allocation25 + $0x2b8] sm:$0xff]
    %v3063 = vld [vmem:[#allocation25 + $0x2c0] sm:$0xff]
    %v3064 = vld [vmem:[#allocation25 + $0x2c8] sm:$0xff]
    %v3065 = vld [vmem:[#allocation25 + $0x2d0] sm:$0xff]
    %v3066 = vld [vmem:[#allocation25 + $0x2d8] sm:$0xff]
    %v3067 = vld [vmem:[#allocation25 + $0x2e0] sm:$0xff]
    %v3068 = vld [vmem:[#allocation25 + $0x2e8] sm:$0xff]
    %v3069 = vld [vmem:[#allocation25 + $0x2f0] sm:$0xff]
    %v3070 = vld [vmem:[#allocation25 + $0x2f8] sm:$0xff]
    %v3071 = vld [vmem:[#allocation25 + $0x300] sm:$0xff]
    %v3072 = vld [vmem:[#allocation25 + $0x308] sm:$0xff]
    %v3073 = vld [vmem:[#allocation25 + $0x310] sm:$0xff]
    %v3074 = vld [vmem:[#allocation25 + $0x318] sm:$0xff]
    %v3075 = vld [vmem:[#allocation25 + $0x320] sm:$0xff]
    %v3076 = vld [vmem:[#allocation25 + $0x328] sm:$0xff]
    %v3077 = vld [vmem:[#allocation25 + $0x330] sm:$0xff]
    %v3078 = vld [vmem:[#allocation25 + $0x338] sm:$0xff]
    %v3079 = vld [vmem:[#allocation25 + $0x340] sm:$0xff]
    %v3080 = vld [vmem:[#allocation25 + $0x348] sm:$0xff]
    %v3081 = vld [vmem:[#allocation25 + $0x350] sm:$0xff]
    %v3082 = vld [vmem:[#allocation25 + $0x358] sm:$0xff]
    %v3083 = vld [vmem:[#allocation25 + $0x360] sm:$0xff]
    %v3084 = vld [vmem:[#allocation25 + $0x368] sm:$0xff]
    %v3085 = vld [vmem:[#allocation25 + $0x370] sm:$0xff]
    %v3086 = vld [vmem:[#allocation25 + $0x378] sm:$0xff]
    %v3087 = vld [vmem:[#allocation25 + $0x380] sm:$0xff]
    %v3088 = vld [vmem:[#allocation25 + $0x388] sm:$0xff]
    %v3089 = vld [vmem:[#allocation25 + $0x390] sm:$0xff]
    %v3090 = vld [vmem:[#allocation25 + $0x398] sm:$0xff]
    %v3091 = vld [vmem:[#allocation25 + $0x3a0] sm:$0xff]
    %v3092 = vld [vmem:[#allocation25 + $0x3a8] sm:$0xff]
    %v3093 = vld [vmem:[#allocation25 + $0x3b0] sm:$0xff]
    %v3094 = vld [vmem:[#allocation25 + $0x3b8] sm:$0xff]
    %v3095 = vld [vmem:[#allocation25 + $0x3c0] sm:$0xff]
    %v3096 = vld [vmem:[#allocation25 + $0x3c8] sm:$0xff]
    %v3097 = vld [vmem:[#allocation25 + $0x3d0] sm:$0xff]
    %v3098 = vld [vmem:[#allocation25 + $0x3d8] sm:$0xff]
    %v3099 = vld [vmem:[#allocation25 + $0x3e0] sm:$0xff]
    %v3100 = vld [vmem:[#allocation25 + $0x3e8] sm:$0xff]
    %v3101 = vld [vmem:[#allocation25 + $0x3f0] sm:$0xff]
    %v3102 = vld [vmem:[#allocation25 + $0x3f8] sm:$0xff]
    %3103 = vmatpush.msra.mxu0 %v3035
    %3104 = vmatpush.msra.mxu0 %v3031
    %3105 = vmatpush.msra.mxu0 %v3027
    %3106 = vmatpush.msra.mxu0 %v3023
    %3107 = vmatpush.msra.mxu0 %v3019
    %3108 = vmatpush.msra.mxu0 %v3015
    %3109 = vmatpush.msra.mxu0 %v3011
    %3110 = vmatpush.msra.mxu0 %v3007
    %3111 = vmatpush.msra.mxu0 %v3003
    %3112 = vmatpush.msra.mxu0 %v2999
    %3113 = vmatpush.msra.mxu0 %v2995
    %3114 = vmatpush.msra.mxu0 %v2991
    %3115 = vmatpush.msra.mxu0 %v2987
    %3116 = vmatpush.msra.mxu0 %v2983
    %3117 = vmatpush.msra.mxu0 %v2979
    %3118 = vmatpush.msra.mxu0 %v2975
    %3119 = vmatmul.f32.gmra.mxu0 %v2973
    %v3120 = vpop.f32.mrf.mxu0
    %v3121 = vadd.f32 0.0, %v3120
    %3122 = vdwg.mxu0
    %3123 = vmatpush.msra.mxu0 %v3099
    %3124 = vmatpush.msra.mxu0 %v3095
    %3125 = vmatpush.msra.mxu0 %v3091
    %3126 = vmatpush.msra.mxu0 %v3087
    %3127 = vmatpush.msra.mxu0 %v3083
    %3128 = vmatpush.msra.mxu0 %v3079
    %3129 = vmatpush.msra.mxu0 %v3075
    %3130 = vmatpush.msra.mxu0 %v3071
    %3131 = vmatpush.msra.mxu0 %v3067
    %3132 = vmatpush.msra.mxu0 %v3063
    %3133 = vmatpush.msra.mxu0 %v3059
    %3134 = vmatpush.msra.mxu0 %v3055
    %3135 = vmatpush.msra.mxu0 %v3051
    %3136 = vmatpush.msra.mxu0 %v3047
    %3137 = vmatpush.msra.mxu0 %v3043
    %3138 = vmatpush.msra.mxu0 %v3039
    %3139 = vmatmul.f32.gmra.mxu0 %v2974
    %v3140 = vpop.f32.mrf.mxu0
    %v3141 = vadd.f32 %v3121, %v3140
    %3142 = vdwg.mxu0
    %3143 = vmatpush.msra.mxu0 %v3036
    %3144 = vmatpush.msra.mxu0 %v3032
    %3145 = vmatpush.msra.mxu0 %v3028
    %3146 = vmatpush.msra.mxu0 %v3024
    %3147 = vmatpush.msra.mxu0 %v3020
    %3148 = vmatpush.msra.mxu0 %v3016
    %3149 = vmatpush.msra.mxu0 %v3012
    %3150 = vmatpush.msra.mxu0 %v3008
    %3151 = vmatpush.msra.mxu0 %v3004
    %3152 = vmatpush.msra.mxu0 %v3000
    %3153 = vmatpush.msra.mxu0 %v2996
    %3154 = vmatpush.msra.mxu0 %v2992
    %3155 = vmatpush.msra.mxu0 %v2988
    %3156 = vmatpush.msra.mxu0 %v2984
    %3157 = vmatpush.msra.mxu0 %v2980
    %3158 = vmatpush.msra.mxu0 %v2976
    %3159 = vmatmul.f32.gmra.mxu0 %v2973
    %v3160 = vpop.f32.mrf.mxu0
    %v3161 = vadd.f32 0.0, %v3160
    %3162 = vdwg.mxu0
    %3163 = vmatpush.msra.mxu0 %v3100
    %3164 = vmatpush.msra.mxu0 %v3096
    %3165 = vmatpush.msra.mxu0 %v3092
    %3166 = vmatpush.msra.mxu0 %v3088
    %3167 = vmatpush.msra.mxu0 %v3084
    %3168 = vmatpush.msra.mxu0 %v3080
    %3169 = vmatpush.msra.mxu0 %v3076
    %3170 = vmatpush.msra.mxu0 %v3072
    %3171 = vmatpush.msra.mxu0 %v3068
    %3172 = vmatpush.msra.mxu0 %v3064
    %3173 = vmatpush.msra.mxu0 %v3060
    %3174 = vmatpush.msra.mxu0 %v3056
    %3175 = vmatpush.msra.mxu0 %v3052
    %3176 = vmatpush.msra.mxu0 %v3048
    %3177 = vmatpush.msra.mxu0 %v3044
    %3178 = vmatpush.msra.mxu0 %v3040
    %3179 = vmatmul.f32.gmra.mxu0 %v2974
    %v3180 = vpop.f32.mrf.mxu0
    %v3181 = vadd.f32 %v3161, %v3180
    %3182 = vdwg.mxu0
    %3183 = vmatpush.msra.mxu0 %v3037
    %3184 = vmatpush.msra.mxu0 %v3033
    %3185 = vmatpush.msra.mxu0 %v3029
    %3186 = vmatpush.msra.mxu0 %v3025
    %3187 = vmatpush.msra.mxu0 %v3021
    %3188 = vmatpush.msra.mxu0 %v3017
    %3189 = vmatpush.msra.mxu0 %v3013
    %3190 = vmatpush.msra.mxu0 %v3009
    %3191 = vmatpush.msra.mxu0 %v3005
    %3192 = vmatpush.msra.mxu0 %v3001
    %3193 = vmatpush.msra.mxu0 %v2997
    %3194 = vmatpush.msra.mxu0 %v2993
    %3195 = vmatpush.msra.mxu0 %v2989
    %3196 = vmatpush.msra.mxu0 %v2985
    %3197 = vmatpush.msra.mxu0 %v2981
    %3198 = vmatpush.msra.mxu0 %v2977
    %3199 = vmatmul.f32.gmra.mxu0 %v2973
    %v3200 = vpop.f32.mrf.mxu0
    %v3201 = vadd.f32 0.0, %v3200
    %3202 = vdwg.mxu0
    %3203 = vmatpush.msra.mxu0 %v3101
    %3204 = vmatpush.msra.mxu0 %v3097
    %3205 = vmatpush.msra.mxu0 %v3093
    %3206 = vmatpush.msra.mxu0 %v3089
    %3207 = vmatpush.msra.mxu0 %v3085
    %3208 = vmatpush.msra.mxu0 %v3081
    %3209 = vmatpush.msra.mxu0 %v3077
    %3210 = vmatpush.msra.mxu0 %v3073
    %3211 = vmatpush.msra.mxu0 %v3069
    %3212 = vmatpush.msra.mxu0 %v3065
    %3213 = vmatpush.msra.mxu0 %v3061
    %3214 = vmatpush.msra.mxu0 %v3057
    %3215 = vmatpush.msra.mxu0 %v3053
    %3216 = vmatpush.msra.mxu0 %v3049
    %3217 = vmatpush.msra.mxu0 %v3045
    %3218 = vmatpush.msra.mxu0 %v3041
    %3219 = vmatmul.f32.gmra.mxu0 %v2974
    %v3220 = vpop.f32.mrf.mxu0
    %v3221 = vadd.f32 %v3201, %v3220
    %3222 = vdwg.mxu0
    %3223 = vmatpush.msra.mxu0 %v3038
    %3224 = vmatpush.msra.mxu0 %v3034
    %3225 = vmatpush.msra.mxu0 %v3030
    %3226 = vmatpush.msra.mxu0 %v3026
    %3227 = vmatpush.msra.mxu0 %v3022
    %3228 = vmatpush.msra.mxu0 %v3018
    %3229 = vmatpush.msra.mxu0 %v3014
    %3230 = vmatpush.msra.mxu0 %v3010
    %3231 = vmatpush.msra.mxu0 %v3006
    %3232 = vmatpush.msra.mxu0 %v3002
    %3233 = vmatpush.msra.mxu0 %v2998
    %3234 = vmatpush.msra.mxu0 %v2994
    %3235 = vmatpush.msra.mxu0 %v2990
    %3236 = vmatpush.msra.mxu0 %v2986
    %3237 = vmatpush.msra.mxu0 %v2982
    %3238 = vmatpush.msra.mxu0 %v2978
    %3239 = vmatmul.f32.gmra.mxu0 %v2973
    %v3240 = vpop.f32.mrf.mxu0
    %v3241 = vadd.f32 0.0, %v3240
    %3242 = vdwg.mxu0
    %3243 = vmatpush.msra.mxu0 %v3102
    %3244 = vmatpush.msra.mxu0 %v3098
    %3245 = vmatpush.msra.mxu0 %v3094
    %3246 = vmatpush.msra.mxu0 %v3090
    %3247 = vmatpush.msra.mxu0 %v3086
    %3248 = vmatpush.msra.mxu0 %v3082
    %3249 = vmatpush.msra.mxu0 %v3078
    %3250 = vmatpush.msra.mxu0 %v3074
    %3251 = vmatpush.msra.mxu0 %v3070
    %3252 = vmatpush.msra.mxu0 %v3066
    %3253 = vmatpush.msra.mxu0 %v3062
    %3254 = vmatpush.msra.mxu0 %v3058
    %3255 = vmatpush.msra.mxu0 %v3054
    %3256 = vmatpush.msra.mxu0 %v3050
    %3257 = vmatpush.msra.mxu0 %v3046
    %3258 = vmatpush.msra.mxu0 %v3042
    %3259 = vmatmul.f32.gmra.mxu0 %v2974
    %v3260 = vpop.f32.mrf.mxu0
    %v3261 = vadd.f32 %v3241, %v3260
    %3262 = vdwg.mxu0
    %v3263 = vsel %vm1546, %v3141, 0.0
    %v3264 = vrot.slane %v3263, 4
    %v3265 = vadd.f32 %v3263, %v3264
    %v3266 = vrot.slane %v3265, 2
    %v3267 = vadd.f32 %v3265, %v3266
    %v3268 = vrot.slane %v3267, 1
    %v3269 = vadd.f32 %v3267, %v3268
    %v3270 = vsel %vm1546, %v3181, 0.0
    %v3271 = vrot.slane %v3270, 4
    %v3272 = vadd.f32 %v3270, %v3271
    %v3273 = vrot.slane %v3272, 2
    %v3274 = vadd.f32 %v3272, %v3273
    %v3275 = vrot.slane %v3274, 1
    %v3276 = vadd.f32 %v3274, %v3275
    %v3277 = vsel %vm1546, %v3221, 0.0
    %v3278 = vrot.slane %v3277, 4
    %v3279 = vadd.f32 %v3277, %v3278
    %v3280 = vrot.slane %v3279, 2
    %v3281 = vadd.f32 %v3279, %v3280
    %v3282 = vrot.slane %v3281, 1
    %v3283 = vadd.f32 %v3281, %v3282
    %v3284 = vsel %vm1546, %v3261, 0.0
    %v3285 = vrot.slane %v3284, 4
    %v3286 = vadd.f32 %v3284, %v3285
    %v3287 = vrot.slane %v3286, 2
    %v3288 = vadd.f32 %v3286, %v3287
    %v3289 = vrot.slane %v3288, 1
    %v3290 = vadd.f32 %v3288, %v3289
    %v3291 = vld [vmem:[%s22] sm:$0xff]
    %v3292 = vld [vmem:[%s22 + $0x8] sm:$0xff]
    %v3293 = vld [vmem:[%s22 + $0x10] sm:$0xff]
    %v3294 = vld [vmem:[%s22 + $0x18] sm:$0xff]
    %v3295 = vld [vmem:[%s22 + $0x20] sm:$0xff]
    %v3296 = vld [vmem:[%s22 + $0x28] sm:$0xff]
    %v3297 = vld [vmem:[%s22 + $0x30] sm:$0xff]
    %v3298 = vld [vmem:[%s22 + $0x38] sm:$0xff]
    %v3299 = vld [vmem:[%s22 + $0x40] sm:$0xff]
    %v3300 = vld [vmem:[%s22 + $0x48] sm:$0xff]
    %v3301 = vld [vmem:[%s22 + $0x50] sm:$0xff]
    %v3302 = vld [vmem:[%s22 + $0x58] sm:$0xff]
    %v3303 = vld [vmem:[%s22 + $0x60] sm:$0xff]
    %v3304 = vld [vmem:[%s22 + $0x68] sm:$0xff]
    %v3305 = vld [vmem:[%s22 + $0x70] sm:$0xff]
    %v3306 = vld [vmem:[%s22 + $0x78] sm:$0xff]
    %v3307 = vld [vmem:[%s22 + $0x80] sm:$0xff]
    %v3308 = vld [vmem:[%s22 + $0x88] sm:$0xff]
    %v3309 = vld [vmem:[%s22 + $0x90] sm:$0xff]
    %v3310 = vld [vmem:[%s22 + $0x98] sm:$0xff]
    %v3311 = vld [vmem:[%s22 + $0xa0] sm:$0xff]
    %v3312 = vld [vmem:[%s22 + $0xa8] sm:$0xff]
    %v3313 = vld [vmem:[%s22 + $0xb0] sm:$0xff]
    %v3314 = vld [vmem:[%s22 + $0xb8] sm:$0xff]
    %v3315 = vld [vmem:[%s22 + $0xc0] sm:$0xff]
    %v3316 = vld [vmem:[%s22 + $0xc8] sm:$0xff]
    %v3317 = vld [vmem:[%s22 + $0xd0] sm:$0xff]
    %v3318 = vld [vmem:[%s22 + $0xd8] sm:$0xff]
    %v3319 = vld [vmem:[%s22 + $0xe0] sm:$0xff]
    %v3320 = vld [vmem:[%s22 + $0xe8] sm:$0xff]
    %v3321 = vld [vmem:[%s22 + $0xf0] sm:$0xff]
    %v3322 = vld [vmem:[%s22 + $0xf8] sm:$0xff]
    %v3323 = vld [vmem:[%s22 + $0x100] sm:$0xff]
    %v3324 = vld [vmem:[%s22 + $0x108] sm:$0xff]
    %v3325 = vld [vmem:[%s22 + $0x110] sm:$0xff]
    %v3326 = vld [vmem:[%s22 + $0x118] sm:$0xff]
    %v3327 = vld [vmem:[%s22 + $0x120] sm:$0xff]
    %v3328 = vld [vmem:[%s22 + $0x128] sm:$0xff]
    %v3329 = vld [vmem:[%s22 + $0x130] sm:$0xff]
    %v3330 = vld [vmem:[%s22 + $0x138] sm:$0xff]
    %v3331 = vld [vmem:[%s22 + $0x140] sm:$0xff]
    %v3332 = vld [vmem:[%s22 + $0x148] sm:$0xff]
    %v3333 = vld [vmem:[%s22 + $0x150] sm:$0xff]
    %v3334 = vld [vmem:[%s22 + $0x158] sm:$0xff]
    %v3335 = vld [vmem:[%s22 + $0x160] sm:$0xff]
    %v3336 = vld [vmem:[%s22 + $0x168] sm:$0xff]
    %v3337 = vld [vmem:[%s22 + $0x170] sm:$0xff]
    %v3338 = vld [vmem:[%s22 + $0x178] sm:$0xff]
    %v3339 = vld [vmem:[%s22 + $0x180] sm:$0xff]
    %v3340 = vld [vmem:[%s22 + $0x188] sm:$0xff]
    %v3341 = vld [vmem:[%s22 + $0x190] sm:$0xff]
    %v3342 = vld [vmem:[%s22 + $0x198] sm:$0xff]
    %v3343 = vld [vmem:[%s22 + $0x1a0] sm:$0xff]
    %v3344 = vld [vmem:[%s22 + $0x1a8] sm:$0xff]
    %v3345 = vld [vmem:[%s22 + $0x1b0] sm:$0xff]
    %v3346 = vld [vmem:[%s22 + $0x1b8] sm:$0xff]
    %v3347 = vld [vmem:[%s22 + $0x1c0] sm:$0xff]
    %v3348 = vld [vmem:[%s22 + $0x1c8] sm:$0xff]
    %v3349 = vld [vmem:[%s22 + $0x1d0] sm:$0xff]
    %v3350 = vld [vmem:[%s22 + $0x1d8] sm:$0xff]
    %v3351 = vld [vmem:[%s22 + $0x1e0] sm:$0xff]
    %v3352 = vld [vmem:[%s22 + $0x1e8] sm:$0xff]
    %v3353 = vld [vmem:[%s22 + $0x1f0] sm:$0xff]
    %v3354 = vld [vmem:[%s22 + $0x1f8] sm:$0xff]
    %3355 = vmatpush.msra.mxu0 %v3306
    %3356 = vmatpush.msra.mxu0 %v3305
    %3357 = vmatpush.msra.mxu0 %v3304
    %3358 = vmatpush.msra.mxu0 %v3303
    %3359 = vmatpush.msra.mxu0 %v3302
    %3360 = vmatpush.msra.mxu0 %v3301
    %3361 = vmatpush.msra.mxu0 %v3300
    %3362 = vmatpush.msra.mxu0 %v3299
    %3363 = vmatpush.msra.mxu0 %v3298
    %3364 = vmatpush.msra.mxu0 %v3297
    %3365 = vmatpush.msra.mxu0 %v3296
    %3366 = vmatpush.msra.mxu0 %v3295
    %3367 = vmatpush.msra.mxu0 %v3294
    %3368 = vmatpush.msra.mxu0 %v3293
    %3369 = vmatpush.msra.mxu0 %v3292
    %3370 = vmatpush.msra.mxu0 %v3291
    %3371 = vmatmul.f32.gmra.mxu0 %v3269
    %v3372 = vpop.f32.mrf.mxu0
    %v3373 = vadd.f32 0.0, %v3372
    %3374 = vdwg.mxu0
    %3375 = vmatpush.msra.mxu0 %v3322
    %3376 = vmatpush.msra.mxu0 %v3321
    %3377 = vmatpush.msra.mxu0 %v3320
    %3378 = vmatpush.msra.mxu0 %v3319
    %3379 = vmatpush.msra.mxu0 %v3318
    %3380 = vmatpush.msra.mxu0 %v3317
    %3381 = vmatpush.msra.mxu0 %v3316
    %3382 = vmatpush.msra.mxu0 %v3315
    %3383 = vmatpush.msra.mxu0 %v3314
    %3384 = vmatpush.msra.mxu0 %v3313
    %3385 = vmatpush.msra.mxu0 %v3312
    %3386 = vmatpush.msra.mxu0 %v3311
    %3387 = vmatpush.msra.mxu0 %v3310
    %3388 = vmatpush.msra.mxu0 %v3309
    %3389 = vmatpush.msra.mxu0 %v3308
    %3390 = vmatpush.msra.mxu0 %v3307
    %3391 = vmatmul.f32.gmra.mxu0 %v3276
    %v3392 = vpop.f32.mrf.mxu0
    %v3393 = vadd.f32 %v3373, %v3392
    %3394 = vdwg.mxu0
    %3395 = vmatpush.msra.mxu0 %v3338
    %3396 = vmatpush.msra.mxu0 %v3337
    %3397 = vmatpush.msra.mxu0 %v3336
    %3398 = vmatpush.msra.mxu0 %v3335
    %3399 = vmatpush.msra.mxu0 %v3334
    %3400 = vmatpush.msra.mxu0 %v3333
    %3401 = vmatpush.msra.mxu0 %v3332
    %3402 = vmatpush.msra.mxu0 %v3331
    %3403 = vmatpush.msra.mxu0 %v3330
    %3404 = vmatpush.msra.mxu0 %v3329
    %3405 = vmatpush.msra.mxu0 %v3328
    %3406 = vmatpush.msra.mxu0 %v3327
    %3407 = vmatpush.msra.mxu0 %v3326
    %3408 = vmatpush.msra.mxu0 %v3325
    %3409 = vmatpush.msra.mxu0 %v3324
    %3410 = vmatpush.msra.mxu0 %v3323
    %3411 = vmatmul.f32.gmra.mxu0 %v3283
    %v3412 = vpop.f32.mrf.mxu0
    %v3413 = vadd.f32 %v3393, %v3412
    %3414 = vdwg.mxu0
    %3415 = vmatpush.msra.mxu0 %v3354
    %3416 = vmatpush.msra.mxu0 %v3353
    %3417 = vmatpush.msra.mxu0 %v3352
    %3418 = vmatpush.msra.mxu0 %v3351
    %3419 = vmatpush.msra.mxu0 %v3350
    %3420 = vmatpush.msra.mxu0 %v3349
    %3421 = vmatpush.msra.mxu0 %v3348
    %3422 = vmatpush.msra.mxu0 %v3347
    %3423 = vmatpush.msra.mxu0 %v3346
    %3424 = vmatpush.msra.mxu0 %v3345
    %3425 = vmatpush.msra.mxu0 %v3344
    %3426 = vmatpush.msra.mxu0 %v3343
    %3427 = vmatpush.msra.mxu0 %v3342
    %3428 = vmatpush.msra.mxu0 %v3341
    %3429 = vmatpush.msra.mxu0 %v3340
    %3430 = vmatpush.msra.mxu0 %v3339
    %3431 = vmatmul.f32.gmra.mxu0 %v3290
    %v3432 = vpop.f32.mrf.mxu0
    %v3433 = vadd.f32 %v3413, %v3432
    %3434 = vdwg.mxu0
    %v3435 = vmul.f32 %v3433, 0.0078125
    %v3436 = vld [vmem:[#allocation29] sm:$0xff]
    %v3437 = vld [vmem:[#allocation29 + $0x8] sm:$0xff]
    %v3438 = vld [vmem:[#allocation29 + $0x10] sm:$0xff]
    %v3439 = vld [vmem:[#allocation29 + $0x18] sm:$0xff]
    %v3441 = vsel %vm1724, %v3435, 0
    %3443 = vmatpush.msra.mxu0 0.0
    %3444 = vmatpush.msra.mxu0 0.0
    %3445 = vmatpush.msra.mxu0 0.0
    %3446 = vmatpush.msra.mxu0 0.0
    %3447 = vmatpush.msra.mxu0 0.0
    %3448 = vmatpush.msra.mxu0 0.0
    %3449 = vmatpush.msra.mxu0 0.0
    %3450 = vmatpush.msra.mxu0 0.0
    %3451 = vmatpush.msra.mxu0 0.0
    %3452 = vmatpush.msra.mxu0 0.0
    %3453 = vmatpush.msra.mxu0 0.0
    %3454 = vmatpush.msra.mxu0 0.0
    %3455 = vmatpush.msra.mxu0 0.0
    %3456 = vmatpush.msra.mxu0 0.0
    %3457 = vmatpush.msra.mxu0 0.0
    %3458 = vmatpush.msra.mxu0 %v3436
    %3459 = vmatmul.f32.gmra.mxu0 %v3441
    %v3460 = vpop.f32.mrf.mxu0
    %v3461 = vadd.f32 0.0, %v3460
    %3462 = vdwg.mxu0
    %3463 = vmatpush.msra.mxu0 0.0
    %3464 = vmatpush.msra.mxu0 0.0
    %3465 = vmatpush.msra.mxu0 0.0
    %3466 = vmatpush.msra.mxu0 0.0
    %3467 = vmatpush.msra.mxu0 0.0
    %3468 = vmatpush.msra.mxu0 0.0
    %3469 = vmatpush.msra.mxu0 0.0
    %3470 = vmatpush.msra.mxu0 0.0
    %3471 = vmatpush.msra.mxu0 0.0
    %3472 = vmatpush.msra.mxu0 0.0
    %3473 = vmatpush.msra.mxu0 0.0
    %3474 = vmatpush.msra.mxu0 0.0
    %3475 = vmatpush.msra.mxu0 0.0
    %3476 = vmatpush.msra.mxu0 0.0
    %3477 = vmatpush.msra.mxu0 0.0
    %3478 = vmatpush.msra.mxu0 %v3437
    %3479 = vmatmul.f32.gmra.mxu0 %v3441
    %v3480 = vpop.f32.mrf.mxu0
    %v3481 = vadd.f32 0.0, %v3480
    %3482 = vdwg.mxu0
    %3483 = vmatpush.msra.mxu0 0.0
    %3484 = vmatpush.msra.mxu0 0.0
    %3485 = vmatpush.msra.mxu0 0.0
    %3486 = vmatpush.msra.mxu0 0.0
    %3487 = vmatpush.msra.mxu0 0.0
    %3488 = vmatpush.msra.mxu0 0.0
    %3489 = vmatpush.msra.mxu0 0.0
    %3490 = vmatpush.msra.mxu0 0.0
    %3491 = vmatpush.msra.mxu0 0.0
    %3492 = vmatpush.msra.mxu0 0.0
    %3493 = vmatpush.msra.mxu0 0.0
    %3494 = vmatpush.msra.mxu0 0.0
    %3495 = vmatpush.msra.mxu0 0.0
    %3496 = vmatpush.msra.mxu0 0.0
    %3497 = vmatpush.msra.mxu0 0.0
    %3498 = vmatpush.msra.mxu0 %v3438
    %3499 = vmatmul.f32.gmra.mxu0 %v3441
    %v3500 = vpop.f32.mrf.mxu0
    %v3501 = vadd.f32 0.0, %v3500
    %3502 = vdwg.mxu0
    %3503 = vmatpush.msra.mxu0 0.0
    %3504 = vmatpush.msra.mxu0 0.0
    %3505 = vmatpush.msra.mxu0 0.0
    %3506 = vmatpush.msra.mxu0 0.0
    %3507 = vmatpush.msra.mxu0 0.0
    %3508 = vmatpush.msra.mxu0 0.0
    %3509 = vmatpush.msra.mxu0 0.0
    %3510 = vmatpush.msra.mxu0 0.0
    %3511 = vmatpush.msra.mxu0 0.0
    %3512 = vmatpush.msra.mxu0 0.0
    %3513 = vmatpush.msra.mxu0 0.0
    %3514 = vmatpush.msra.mxu0 0.0
    %3515 = vmatpush.msra.mxu0 0.0
    %3516 = vmatpush.msra.mxu0 0.0
    %3517 = vmatpush.msra.mxu0 0.0
    %3518 = vmatpush.msra.mxu0 %v3439
    %3519 = vmatmul.f32.gmra.mxu0 %v3441
    %v3520 = vpop.f32.mrf.mxu0
    %v3521 = vadd.f32 0.0, %v3520
    %3522 = vdwg.mxu0
    %v3523 = vperm.slane %v3461, 0
    %v3524 = vperm.slane %v3481, 0
    %v3525 = vperm.slane %v3501, 0
    %v3526 = vperm.slane %v3521, 0
    %v3527 = vsub.f32 %v3141, %v3523
    %v3528 = vsub.f32 %v3181, %v3524
    %v3529 = vsub.f32 %v3221, %v3525
    %v3530 = vsub.f32 %v3261, %v3526
    %v3531 = vmul.f32 %v3527, %v3527
    %v3532 = vmul.f32 %v3528, %v3528
    %v3533 = vmul.f32 %v3529, %v3529
    %v3534 = vmul.f32 %v3530, %v3530
    %v3535 = vsel %vm1546, %v3531, 0.0
    %v3536 = vrot.slane %v3535, 4
    %v3537 = vadd.f32 %v3535, %v3536
    %v3538 = vrot.slane %v3537, 2
    %v3539 = vadd.f32 %v3537, %v3538
    %v3540 = vrot.slane %v3539, 1
    %v3541 = vadd.f32 %v3539, %v3540
    %v3542 = vsel %vm1546, %v3532, 0.0
    %v3543 = vrot.slane %v3542, 4
    %v3544 = vadd.f32 %v3542, %v3543
    %v3545 = vrot.slane %v3544, 2
    %v3546 = vadd.f32 %v3544, %v3545
    %v3547 = vrot.slane %v3546, 1
    %v3548 = vadd.f32 %v3546, %v3547
    %v3549 = vsel %vm1546, %v3533, 0.0
    %v3550 = vrot.slane %v3549, 4
    %v3551 = vadd.f32 %v3549, %v3550
    %v3552 = vrot.slane %v3551, 2
    %v3553 = vadd.f32 %v3551, %v3552
    %v3554 = vrot.slane %v3553, 1
    %v3555 = vadd.f32 %v3553, %v3554
    %v3556 = vsel %vm1546, %v3534, 0.0
    %v3557 = vrot.slane %v3556, 4
    %v3558 = vadd.f32 %v3556, %v3557
    %v3559 = vrot.slane %v3558, 2
    %v3560 = vadd.f32 %v3558, %v3559
    %v3561 = vrot.slane %v3560, 1
    %v3562 = vadd.f32 %v3560, %v3561
    %3563 = vmatpush.msra.mxu0 %v3306
    %3564 = vmatpush.msra.mxu0 %v3305
    %3565 = vmatpush.msra.mxu0 %v3304
    %3566 = vmatpush.msra.mxu0 %v3303
    %3567 = vmatpush.msra.mxu0 %v3302
    %3568 = vmatpush.msra.mxu0 %v3301
    %3569 = vmatpush.msra.mxu0 %v3300
    %3570 = vmatpush.msra.mxu0 %v3299
    %3571 = vmatpush.msra.mxu0 %v3298
    %3572 = vmatpush.msra.mxu0 %v3297
    %3573 = vmatpush.msra.mxu0 %v3296
    %3574 = vmatpush.msra.mxu0 %v3295
    %3575 = vmatpush.msra.mxu0 %v3294
    %3576 = vmatpush.msra.mxu0 %v3293
    %3577 = vmatpush.msra.mxu0 %v3292
    %3578 = vmatpush.msra.mxu0 %v3291
    %3579 = vmatmul.f32.gmra.mxu0 %v3541
    %v3580 = vpop.f32.mrf.mxu0
    %v3581 = vadd.f32 0.0, %v3580
    %3582 = vdwg.mxu0
    %3583 = vmatpush.msra.mxu0 %v3322
    %3584 = vmatpush.msra.mxu0 %v3321
    %3585 = vmatpush.msra.mxu0 %v3320
    %3586 = vmatpush.msra.mxu0 %v3319
    %3587 = vmatpush.msra.mxu0 %v3318
    %3588 = vmatpush.msra.mxu0 %v3317
    %3589 = vmatpush.msra.mxu0 %v3316
    %3590 = vmatpush.msra.mxu0 %v3315
    %3591 = vmatpush.msra.mxu0 %v3314
    %3592 = vmatpush.msra.mxu0 %v3313
    %3593 = vmatpush.msra.mxu0 %v3312
    %3594 = vmatpush.msra.mxu0 %v3311
    %3595 = vmatpush.msra.mxu0 %v3310
    %3596 = vmatpush.msra.mxu0 %v3309
    %3597 = vmatpush.msra.mxu0 %v3308
    %3598 = vmatpush.msra.mxu0 %v3307
    %3599 = vmatmul.f32.gmra.mxu0 %v3548
    %v3600 = vpop.f32.mrf.mxu0
    %v3601 = vadd.f32 %v3581, %v3600
    %3602 = vdwg.mxu0
    %3603 = vmatpush.msra.mxu0 %v3338
    %3604 = vmatpush.msra.mxu0 %v3337
    %3605 = vmatpush.msra.mxu0 %v3336
    %3606 = vmatpush.msra.mxu0 %v3335
    %3607 = vmatpush.msra.mxu0 %v3334
    %3608 = vmatpush.msra.mxu0 %v3333
    %3609 = vmatpush.msra.mxu0 %v3332
    %3610 = vmatpush.msra.mxu0 %v3331
    %3611 = vmatpush.msra.mxu0 %v3330
    %3612 = vmatpush.msra.mxu0 %v3329
    %3613 = vmatpush.msra.mxu0 %v3328
    %3614 = vmatpush.msra.mxu0 %v3327
    %3615 = vmatpush.msra.mxu0 %v3326
    %3616 = vmatpush.msra.mxu0 %v3325
    %3617 = vmatpush.msra.mxu0 %v3324
    %3618 = vmatpush.msra.mxu0 %v3323
    %3619 = vmatmul.f32.gmra.mxu0 %v3555
    %v3620 = vpop.f32.mrf.mxu0
    %v3621 = vadd.f32 %v3601, %v3620
    %3622 = vdwg.mxu0
    %3623 = vmatpush.msra.mxu0 %v3354
    %3624 = vmatpush.msra.mxu0 %v3353
    %3625 = vmatpush.msra.mxu0 %v3352
    %3626 = vmatpush.msra.mxu0 %v3351
    %3627 = vmatpush.msra.mxu0 %v3350
    %3628 = vmatpush.msra.mxu0 %v3349
    %3629 = vmatpush.msra.mxu0 %v3348
    %3630 = vmatpush.msra.mxu0 %v3347
    %3631 = vmatpush.msra.mxu0 %v3346
    %3632 = vmatpush.msra.mxu0 %v3345
    %3633 = vmatpush.msra.mxu0 %v3344
    %3634 = vmatpush.msra.mxu0 %v3343
    %3635 = vmatpush.msra.mxu0 %v3342
    %3636 = vmatpush.msra.mxu0 %v3341
    %3637 = vmatpush.msra.mxu0 %v3340
    %3638 = vmatpush.msra.mxu0 %v3339
    %3639 = vmatmul.f32.gmra.mxu0 %v3562
    %v3640 = vpop.f32.mrf.mxu0
    %v3641 = vadd.f32 %v3621, %v3640
    %3642 = vdwg.mxu0
    %v3643 = vmul.f32 %v3641, 0.0078125
    %v3645 = vsel %vm1724, %v3643, 0
    %3647 = vmatpush.msra.mxu0 0.0
    %3648 = vmatpush.msra.mxu0 0.0
    %3649 = vmatpush.msra.mxu0 0.0
    %3650 = vmatpush.msra.mxu0 0.0
    %3651 = vmatpush.msra.mxu0 0.0
    %3652 = vmatpush.msra.mxu0 0.0
    %3653 = vmatpush.msra.mxu0 0.0
    %3654 = vmatpush.msra.mxu0 0.0
    %3655 = vmatpush.msra.mxu0 0.0
    %3656 = vmatpush.msra.mxu0 0.0
    %3657 = vmatpush.msra.mxu0 0.0
    %3658 = vmatpush.msra.mxu0 0.0
    %3659 = vmatpush.msra.mxu0 0.0
    %3660 = vmatpush.msra.mxu0 0.0
    %3661 = vmatpush.msra.mxu0 0.0
    %3662 = vmatpush.msra.mxu0 %v3436
    %3663 = vmatmul.f32.gmra.mxu0 %v3645
    %v3664 = vpop.f32.mrf.mxu0
    %v3665 = vadd.f32 1e-05, %v3664
    %3666 = vdwg.mxu0
    %3667 = vmatpush.msra.mxu0 0.0
    %3668 = vmatpush.msra.mxu0 0.0
    %3669 = vmatpush.msra.mxu0 0.0
    %3670 = vmatpush.msra.mxu0 0.0
    %3671 = vmatpush.msra.mxu0 0.0
    %3672 = vmatpush.msra.mxu0 0.0
    %3673 = vmatpush.msra.mxu0 0.0
    %3674 = vmatpush.msra.mxu0 0.0
    %3675 = vmatpush.msra.mxu0 0.0
    %3676 = vmatpush.msra.mxu0 0.0
    %3677 = vmatpush.msra.mxu0 0.0
    %3678 = vmatpush.msra.mxu0 0.0
    %3679 = vmatpush.msra.mxu0 0.0
    %3680 = vmatpush.msra.mxu0 0.0
    %3681 = vmatpush.msra.mxu0 0.0
    %3682 = vmatpush.msra.mxu0 %v3437
    %3683 = vmatmul.f32.gmra.mxu0 %v3645
    %v3684 = vpop.f32.mrf.mxu0
    %v3685 = vadd.f32 1e-05, %v3684
    %3686 = vdwg.mxu0
    %3687 = vmatpush.msra.mxu0 0.0
    %3688 = vmatpush.msra.mxu0 0.0
    %3689 = vmatpush.msra.mxu0 0.0
    %3690 = vmatpush.msra.mxu0 0.0
    %3691 = vmatpush.msra.mxu0 0.0
    %3692 = vmatpush.msra.mxu0 0.0
    %3693 = vmatpush.msra.mxu0 0.0
    %3694 = vmatpush.msra.mxu0 0.0
    %3695 = vmatpush.msra.mxu0 0.0
    %3696 = vmatpush.msra.mxu0 0.0
    %3697 = vmatpush.msra.mxu0 0.0
    %3698 = vmatpush.msra.mxu0 0.0
    %3699 = vmatpush.msra.mxu0 0.0
    %3700 = vmatpush.msra.mxu0 0.0
    %3701 = vmatpush.msra.mxu0 0.0
    %3702 = vmatpush.msra.mxu0 %v3438
    %3703 = vmatmul.f32.gmra.mxu0 %v3645
    %v3704 = vpop.f32.mrf.mxu0
    %v3705 = vadd.f32 1e-05, %v3704
    %3706 = vdwg.mxu0
    %3707 = vmatpush.msra.mxu0 0.0
    %3708 = vmatpush.msra.mxu0 0.0
    %3709 = vmatpush.msra.mxu0 0.0
    %3710 = vmatpush.msra.mxu0 0.0
    %3711 = vmatpush.msra.mxu0 0.0
    %3712 = vmatpush.msra.mxu0 0.0
    %3713 = vmatpush.msra.mxu0 0.0
    %3714 = vmatpush.msra.mxu0 0.0
    %3715 = vmatpush.msra.mxu0 0.0
    %3716 = vmatpush.msra.mxu0 0.0
    %3717 = vmatpush.msra.mxu0 0.0
    %3718 = vmatpush.msra.mxu0 0.0
    %3719 = vmatpush.msra.mxu0 0.0
    %3720 = vmatpush.msra.mxu0 0.0
    %3721 = vmatpush.msra.mxu0 0.0
    %3722 = vmatpush.msra.mxu0 %v3439
    %3723 = vmatmul.f32.gmra.mxu0 %v3645
    %v3724 = vpop.f32.mrf.mxu0
    %v3725 = vadd.f32 1e-05, %v3724
    %3726 = vdwg.mxu0
    %v3727 = vrsqrt.pop %v3665
    %v3728 = vmul.f32 %v3727, %v3665
    %v3729 = vmul.f32 %v3728, %v3727
    %v3730 = vmul.f32 0.5, %v3729
    %v3731 = vsub.f32 1.5, %v3730
    %v3732 = vmul.f32 %v3727, %v3731
    %vm3733 = vweird.f32 %v3665
    %vm3734 = vweird.f32 %v3727
    %vm3735 = vmor %vm3733, %vm3734
    %v3736 = vsel %vm3735, %v3727, %v3732
    %v3737 = vrsqrt.pop %v3685
    %v3738 = vmul.f32 %v3737, %v3685
    %v3739 = vmul.f32 %v3738, %v3737
    %v3740 = vmul.f32 0.5, %v3739
    %v3741 = vsub.f32 1.5, %v3740
    %v3742 = vmul.f32 %v3737, %v3741
    %vm3743 = vweird.f32 %v3685
    %vm3744 = vweird.f32 %v3737
    %vm3745 = vmor %vm3743, %vm3744
    %v3746 = vsel %vm3745, %v3737, %v3742
    %v3747 = vrsqrt.pop %v3705
    %v3748 = vmul.f32 %v3747, %v3705
    %v3749 = vmul.f32 %v3748, %v3747
    %v3750 = vmul.f32 0.5, %v3749
    %v3751 = vsub.f32 1.5, %v3750
    %v3752 = vmul.f32 %v3747, %v3751
    %vm3753 = vweird.f32 %v3705
    %vm3754 = vweird.f32 %v3747
    %vm3755 = vmor %vm3753, %vm3754
    %v3756 = vsel %vm3755, %v3747, %v3752
    %v3757 = vrsqrt.pop %v3725
    %v3758 = vmul.f32 %v3757, %v3725
    %v3759 = vmul.f32 %v3758, %v3757
    %v3760 = vmul.f32 0.5, %v3759
    %v3761 = vsub.f32 1.5, %v3760
    %v3762 = vmul.f32 %v3757, %v3761
    %vm3763 = vweird.f32 %v3725
    %vm3764 = vweird.f32 %v3757
    %vm3765 = vmor %vm3763, %vm3764
    %v3766 = vsel %vm3765, %v3757, %v3762
    %v3767 = vperm.slane %v3736, 0
    %v3768 = vperm.slane %v3746, 0
    %v3769 = vperm.slane %v3756, 0
    %v3770 = vperm.slane %v3766, 0
    %v3771 = vmul.f32 %v3527, %v3767
    %v3772 = vmul.f32 %v3528, %v3768
    %v3773 = vmul.f32 %v3529, %v3769
    %v3774 = vmul.f32 %v3530, %v3770
    %v3775 = vld [vmem:[#allocation26] sm:$0xf]
    %v3777 = vperm.slane %v3775, 0
    %v3778 = vperm.slane %v3775, 1
    %v3779 = vperm.slane %v3775, 2
    %v3780 = vperm.slane %v3775, 3
    %v3785 = vmul.f32 %v3771, %v3777
    %v3786 = vmul.f32 %v3772, %v3778
    %v3787 = vmul.f32 %v3773, %v3779
    %v3788 = vmul.f32 %v3774, %v3780
    %v3789 = vld [vmem:[#allocation28] sm:$0xf]
    %v3791 = vperm.slane %v3789, 0
    %v3792 = vperm.slane %v3789, 1
    %v3793 = vperm.slane %v3789, 2
    %v3794 = vperm.slane %v3789, 3
    %v3799 = vadd.f32 %v3785, %v3791
    %v3800 = vadd.f32 %v3786, %v3792
    %v3801 = vadd.f32 %v3787, %v3793
    %v3802 = vadd.f32 %v3788, %v3794
    %vm3803 = vcmp.ge.f32.partialorder %v3799, 0.0
    %vm3804 = vcmp.ge.f32.partialorder %v3800, 0.0
    %vm3805 = vcmp.ge.f32.partialorder %v3801, 0.0
    %vm3806 = vcmp.ge.f32.partialorder %v3802, 0.0
    %v3807 = vmul.f32 %v3799, 0.01
    %v3808 = vmul.f32 %v3800, 0.01
    %v3809 = vmul.f32 %v3801, 0.01
    %v3810 = vmul.f32 %v3802, 0.01
    %v3811 = vsel %vm3803, %v3799, %v3807
    %v3812 = vsel %vm3804, %v3800, %v3808
    %v3813 = vsel %vm3805, %v3801, %v3809
    %v3814 = vsel %vm3806, %v3802, %v3810
    %v3815 = vld [vmem:[#allocation31] sm:$0xff]
    %v3816 = vld [vmem:[#allocation31 + $0x8] sm:$0xff]
    %v3817 = vld [vmem:[#allocation31 + $0x10] sm:$0xff]
    %v3818 = vld [vmem:[#allocation31 + $0x18] sm:$0xff]
    %v3819 = vld [vmem:[#allocation31 + $0x20] sm:$0xff]
    %v3820 = vld [vmem:[#allocation31 + $0x28] sm:$0xff]
    %v3821 = vld [vmem:[#allocation31 + $0x30] sm:$0xff]
    %v3822 = vld [vmem:[#allocation31 + $0x38] sm:$0xff]
    %v3823 = vld [vmem:[#allocation31 + $0x40] sm:$0xff]
    %v3824 = vld [vmem:[#allocation31 + $0x48] sm:$0xff]
    %v3825 = vld [vmem:[#allocation31 + $0x50] sm:$0xff]
    %v3826 = vld [vmem:[#allocation31 + $0x58] sm:$0xff]
    %v3827 = vld [vmem:[#allocation31 + $0x60] sm:$0xff]
    %v3828 = vld [vmem:[#allocation31 + $0x68] sm:$0xff]
    %v3829 = vld [vmem:[#allocation31 + $0x70] sm:$0xff]
    %v3830 = vld [vmem:[#allocation31 + $0x78] sm:$0xff]
    %v3831 = vld [vmem:[#allocation31 + $0x80] sm:$0xff]
    %v3832 = vld [vmem:[#allocation31 + $0x88] sm:$0xff]
    %v3833 = vld [vmem:[#allocation31 + $0x90] sm:$0xff]
    %v3834 = vld [vmem:[#allocation31 + $0x98] sm:$0xff]
    %v3835 = vld [vmem:[#allocation31 + $0xa0] sm:$0xff]
    %v3836 = vld [vmem:[#allocation31 + $0xa8] sm:$0xff]
    %v3837 = vld [vmem:[#allocation31 + $0xb0] sm:$0xff]
    %v3838 = vld [vmem:[#allocation31 + $0xb8] sm:$0xff]
    %v3839 = vld [vmem:[#allocation31 + $0xc0] sm:$0xff]
    %v3840 = vld [vmem:[#allocation31 + $0xc8] sm:$0xff]
    %v3841 = vld [vmem:[#allocation31 + $0xd0] sm:$0xff]
    %v3842 = vld [vmem:[#allocation31 + $0xd8] sm:$0xff]
    %v3843 = vld [vmem:[#allocation31 + $0xe0] sm:$0xff]
    %v3844 = vld [vmem:[#allocation31 + $0xe8] sm:$0xff]
    %v3845 = vld [vmem:[#allocation31 + $0xf0] sm:$0xff]
    %v3846 = vld [vmem:[#allocation31 + $0xf8] sm:$0xff]
    %v3847 = vld [vmem:[#allocation31 + $0x100] sm:$0xff]
    %v3848 = vld [vmem:[#allocation31 + $0x108] sm:$0xff]
    %v3849 = vld [vmem:[#allocation31 + $0x110] sm:$0xff]
    %v3850 = vld [vmem:[#allocation31 + $0x118] sm:$0xff]
    %v3851 = vld [vmem:[#allocation31 + $0x120] sm:$0xff]
    %v3852 = vld [vmem:[#allocation31 + $0x128] sm:$0xff]
    %v3853 = vld [vmem:[#allocation31 + $0x130] sm:$0xff]
    %v3854 = vld [vmem:[#allocation31 + $0x138] sm:$0xff]
    %v3855 = vld [vmem:[#allocation31 + $0x140] sm:$0xff]
    %v3856 = vld [vmem:[#allocation31 + $0x148] sm:$0xff]
    %v3857 = vld [vmem:[#allocation31 + $0x150] sm:$0xff]
    %v3858 = vld [vmem:[#allocation31 + $0x158] sm:$0xff]
    %v3859 = vld [vmem:[#allocation31 + $0x160] sm:$0xff]
    %v3860 = vld [vmem:[#allocation31 + $0x168] sm:$0xff]
    %v3861 = vld [vmem:[#allocation31 + $0x170] sm:$0xff]
    %v3862 = vld [vmem:[#allocation31 + $0x178] sm:$0xff]
    %v3863 = vld [vmem:[#allocation31 + $0x180] sm:$0xff]
    %v3864 = vld [vmem:[#allocation31 + $0x188] sm:$0xff]
    %v3865 = vld [vmem:[#allocation31 + $0x190] sm:$0xff]
    %v3866 = vld [vmem:[#allocation31 + $0x198] sm:$0xff]
    %v3867 = vld [vmem:[#allocation31 + $0x1a0] sm:$0xff]
    %v3868 = vld [vmem:[#allocation31 + $0x1a8] sm:$0xff]
    %v3869 = vld [vmem:[#allocation31 + $0x1b0] sm:$0xff]
    %v3870 = vld [vmem:[#allocation31 + $0x1b8] sm:$0xff]
    %v3871 = vld [vmem:[#allocation31 + $0x1c0] sm:$0xff]
    %v3872 = vld [vmem:[#allocation31 + $0x1c8] sm:$0xff]
    %v3873 = vld [vmem:[#allocation31 + $0x1d0] sm:$0xff]
    %v3874 = vld [vmem:[#allocation31 + $0x1d8] sm:$0xff]
    %v3875 = vld [vmem:[#allocation31 + $0x1e0] sm:$0xff]
    %v3876 = vld [vmem:[#allocation31 + $0x1e8] sm:$0xff]
    %v3877 = vld [vmem:[#allocation31 + $0x1f0] sm:$0xff]
    %v3878 = vld [vmem:[#allocation31 + $0x1f8] sm:$0xff]
    %v3879 = vld [vmem:[#allocation31 + $0x200] sm:$0xff]
    %v3880 = vld [vmem:[#allocation31 + $0x208] sm:$0xff]
    %v3881 = vld [vmem:[#allocation31 + $0x210] sm:$0xff]
    %v3882 = vld [vmem:[#allocation31 + $0x218] sm:$0xff]
    %v3883 = vld [vmem:[#allocation31 + $0x220] sm:$0xff]
    %v3884 = vld [vmem:[#allocation31 + $0x228] sm:$0xff]
    %v3885 = vld [vmem:[#allocation31 + $0x230] sm:$0xff]
    %v3886 = vld [vmem:[#allocation31 + $0x238] sm:$0xff]
    %v3887 = vld [vmem:[#allocation31 + $0x240] sm:$0xff]
    %v3888 = vld [vmem:[#allocation31 + $0x248] sm:$0xff]
    %v3889 = vld [vmem:[#allocation31 + $0x250] sm:$0xff]
    %v3890 = vld [vmem:[#allocation31 + $0x258] sm:$0xff]
    %v3891 = vld [vmem:[#allocation31 + $0x260] sm:$0xff]
    %v3892 = vld [vmem:[#allocation31 + $0x268] sm:$0xff]
    %v3893 = vld [vmem:[#allocation31 + $0x270] sm:$0xff]
    %v3894 = vld [vmem:[#allocation31 + $0x278] sm:$0xff]
    %v3895 = vld [vmem:[#allocation31 + $0x280] sm:$0xff]
    %v3896 = vld [vmem:[#allocation31 + $0x288] sm:$0xff]
    %v3897 = vld [vmem:[#allocation31 + $0x290] sm:$0xff]
    %v3898 = vld [vmem:[#allocation31 + $0x298] sm:$0xff]
    %v3899 = vld [vmem:[#allocation31 + $0x2a0] sm:$0xff]
    %v3900 = vld [vmem:[#allocation31 + $0x2a8] sm:$0xff]
    %v3901 = vld [vmem:[#allocation31 + $0x2b0] sm:$0xff]
    %v3902 = vld [vmem:[#allocation31 + $0x2b8] sm:$0xff]
    %v3903 = vld [vmem:[#allocation31 + $0x2c0] sm:$0xff]
    %v3904 = vld [vmem:[#allocation31 + $0x2c8] sm:$0xff]
    %v3905 = vld [vmem:[#allocation31 + $0x2d0] sm:$0xff]
    %v3906 = vld [vmem:[#allocation31 + $0x2d8] sm:$0xff]
    %v3907 = vld [vmem:[#allocation31 + $0x2e0] sm:$0xff]
    %v3908 = vld [vmem:[#allocation31 + $0x2e8] sm:$0xff]
    %v3909 = vld [vmem:[#allocation31 + $0x2f0] sm:$0xff]
    %v3910 = vld [vmem:[#allocation31 + $0x2f8] sm:$0xff]
    %v3911 = vld [vmem:[#allocation31 + $0x300] sm:$0xff]
    %v3912 = vld [vmem:[#allocation31 + $0x308] sm:$0xff]
    %v3913 = vld [vmem:[#allocation31 + $0x310] sm:$0xff]
    %v3914 = vld [vmem:[#allocation31 + $0x318] sm:$0xff]
    %v3915 = vld [vmem:[#allocation31 + $0x320] sm:$0xff]
    %v3916 = vld [vmem:[#allocation31 + $0x328] sm:$0xff]
    %v3917 = vld [vmem:[#allocation31 + $0x330] sm:$0xff]
    %v3918 = vld [vmem:[#allocation31 + $0x338] sm:$0xff]
    %v3919 = vld [vmem:[#allocation31 + $0x340] sm:$0xff]
    %v3920 = vld [vmem:[#allocation31 + $0x348] sm:$0xff]
    %v3921 = vld [vmem:[#allocation31 + $0x350] sm:$0xff]
    %v3922 = vld [vmem:[#allocation31 + $0x358] sm:$0xff]
    %v3923 = vld [vmem:[#allocation31 + $0x360] sm:$0xff]
    %v3924 = vld [vmem:[#allocation31 + $0x368] sm:$0xff]
    %v3925 = vld [vmem:[#allocation31 + $0x370] sm:$0xff]
    %v3926 = vld [vmem:[#allocation31 + $0x378] sm:$0xff]
    %v3927 = vld [vmem:[#allocation31 + $0x380] sm:$0xff]
    %v3928 = vld [vmem:[#allocation31 + $0x388] sm:$0xff]
    %v3929 = vld [vmem:[#allocation31 + $0x390] sm:$0xff]
    %v3930 = vld [vmem:[#allocation31 + $0x398] sm:$0xff]
    %v3931 = vld [vmem:[#allocation31 + $0x3a0] sm:$0xff]
    %v3932 = vld [vmem:[#allocation31 + $0x3a8] sm:$0xff]
    %v3933 = vld [vmem:[#allocation31 + $0x3b0] sm:$0xff]
    %v3934 = vld [vmem:[#allocation31 + $0x3b8] sm:$0xff]
    %v3935 = vld [vmem:[#allocation31 + $0x3c0] sm:$0xff]
    %v3936 = vld [vmem:[#allocation31 + $0x3c8] sm:$0xff]
    %v3937 = vld [vmem:[#allocation31 + $0x3d0] sm:$0xff]
    %v3938 = vld [vmem:[#allocation31 + $0x3d8] sm:$0xff]
    %v3939 = vld [vmem:[#allocation31 + $0x3e0] sm:$0xff]
    %v3940 = vld [vmem:[#allocation31 + $0x3e8] sm:$0xff]
    %v3941 = vld [vmem:[#allocation31 + $0x3f0] sm:$0xff]
    %v3942 = vld [vmem:[#allocation31 + $0x3f8] sm:$0xff]
    %v3943 = vld [vmem:[#allocation31 + $0x400] sm:$0xff]
    %v3944 = vld [vmem:[#allocation31 + $0x408] sm:$0xff]
    %v3945 = vld [vmem:[#allocation31 + $0x410] sm:$0xff]
    %v3946 = vld [vmem:[#allocation31 + $0x418] sm:$0xff]
    %v3947 = vld [vmem:[#allocation31 + $0x420] sm:$0xff]
    %v3948 = vld [vmem:[#allocation31 + $0x428] sm:$0xff]
    %v3949 = vld [vmem:[#allocation31 + $0x430] sm:$0xff]
    %v3950 = vld [vmem:[#allocation31 + $0x438] sm:$0xff]
    %v3951 = vld [vmem:[#allocation31 + $0x440] sm:$0xff]
    %v3952 = vld [vmem:[#allocation31 + $0x448] sm:$0xff]
    %v3953 = vld [vmem:[#allocation31 + $0x450] sm:$0xff]
    %v3954 = vld [vmem:[#allocation31 + $0x458] sm:$0xff]
    %v3955 = vld [vmem:[#allocation31 + $0x460] sm:$0xff]
    %v3956 = vld [vmem:[#allocation31 + $0x468] sm:$0xff]
    %v3957 = vld [vmem:[#allocation31 + $0x470] sm:$0xff]
    %v3958 = vld [vmem:[#allocation31 + $0x478] sm:$0xff]
    %v3959 = vld [vmem:[#allocation31 + $0x480] sm:$0xff]
    %v3960 = vld [vmem:[#allocation31 + $0x488] sm:$0xff]
    %v3961 = vld [vmem:[#allocation31 + $0x490] sm:$0xff]
    %v3962 = vld [vmem:[#allocation31 + $0x498] sm:$0xff]
    %v3963 = vld [vmem:[#allocation31 + $0x4a0] sm:$0xff]
    %v3964 = vld [vmem:[#allocation31 + $0x4a8] sm:$0xff]
    %v3965 = vld [vmem:[#allocation31 + $0x4b0] sm:$0xff]
    %v3966 = vld [vmem:[#allocation31 + $0x4b8] sm:$0xff]
    %v3967 = vld [vmem:[#allocation31 + $0x4c0] sm:$0xff]
    %v3968 = vld [vmem:[#allocation31 + $0x4c8] sm:$0xff]
    %v3969 = vld [vmem:[#allocation31 + $0x4d0] sm:$0xff]
    %v3970 = vld [vmem:[#allocation31 + $0x4d8] sm:$0xff]
    %v3971 = vld [vmem:[#allocation31 + $0x4e0] sm:$0xff]
    %v3972 = vld [vmem:[#allocation31 + $0x4e8] sm:$0xff]
    %v3973 = vld [vmem:[#allocation31 + $0x4f0] sm:$0xff]
    %v3974 = vld [vmem:[#allocation31 + $0x4f8] sm:$0xff]
    %v3975 = vld [vmem:[#allocation31 + $0x500] sm:$0xff]
    %v3976 = vld [vmem:[#allocation31 + $0x508] sm:$0xff]
    %v3977 = vld [vmem:[#allocation31 + $0x510] sm:$0xff]
    %v3978 = vld [vmem:[#allocation31 + $0x518] sm:$0xff]
    %v3979 = vld [vmem:[#allocation31 + $0x520] sm:$0xff]
    %v3980 = vld [vmem:[#allocation31 + $0x528] sm:$0xff]
    %v3981 = vld [vmem:[#allocation31 + $0x530] sm:$0xff]
    %v3982 = vld [vmem:[#allocation31 + $0x538] sm:$0xff]
    %v3983 = vld [vmem:[#allocation31 + $0x540] sm:$0xff]
    %v3984 = vld [vmem:[#allocation31 + $0x548] sm:$0xff]
    %v3985 = vld [vmem:[#allocation31 + $0x550] sm:$0xff]
    %v3986 = vld [vmem:[#allocation31 + $0x558] sm:$0xff]
    %v3987 = vld [vmem:[#allocation31 + $0x560] sm:$0xff]
    %v3988 = vld [vmem:[#allocation31 + $0x568] sm:$0xff]
    %v3989 = vld [vmem:[#allocation31 + $0x570] sm:$0xff]
    %v3990 = vld [vmem:[#allocation31 + $0x578] sm:$0xff]
    %v3991 = vld [vmem:[#allocation31 + $0x580] sm:$0xff]
    %v3992 = vld [vmem:[#allocation31 + $0x588] sm:$0xff]
    %v3993 = vld [vmem:[#allocation31 + $0x590] sm:$0xff]
    %v3994 = vld [vmem:[#allocation31 + $0x598] sm:$0xff]
    %v3995 = vld [vmem:[#allocation31 + $0x5a0] sm:$0xff]
    %v3996 = vld [vmem:[#allocation31 + $0x5a8] sm:$0xff]
    %v3997 = vld [vmem:[#allocation31 + $0x5b0] sm:$0xff]
    %v3998 = vld [vmem:[#allocation31 + $0x5b8] sm:$0xff]
    %v3999 = vld [vmem:[#allocation31 + $0x5c0] sm:$0xff]
    %v4000 = vld [vmem:[#allocation31 + $0x5c8] sm:$0xff]
    %v4001 = vld [vmem:[#allocation31 + $0x5d0] sm:$0xff]
    %v4002 = vld [vmem:[#allocation31 + $0x5d8] sm:$0xff]
    %v4003 = vld [vmem:[#allocation31 + $0x5e0] sm:$0xff]
    %v4004 = vld [vmem:[#allocation31 + $0x5e8] sm:$0xff]
    %v4005 = vld [vmem:[#allocation31 + $0x5f0] sm:$0xff]
    %v4006 = vld [vmem:[#allocation31 + $0x5f8] sm:$0xff]
    %v4007 = vld [vmem:[#allocation31 + $0x600] sm:$0xff]
    %v4008 = vld [vmem:[#allocation31 + $0x608] sm:$0xff]
    %v4009 = vld [vmem:[#allocation31 + $0x610] sm:$0xff]
    %v4010 = vld [vmem:[#allocation31 + $0x618] sm:$0xff]
    %v4011 = vld [vmem:[#allocation31 + $0x620] sm:$0xff]
    %v4012 = vld [vmem:[#allocation31 + $0x628] sm:$0xff]
    %v4013 = vld [vmem:[#allocation31 + $0x630] sm:$0xff]
    %v4014 = vld [vmem:[#allocation31 + $0x638] sm:$0xff]
    %v4015 = vld [vmem:[#allocation31 + $0x640] sm:$0xff]
    %v4016 = vld [vmem:[#allocation31 + $0x648] sm:$0xff]
    %v4017 = vld [vmem:[#allocation31 + $0x650] sm:$0xff]
    %v4018 = vld [vmem:[#allocation31 + $0x658] sm:$0xff]
    %v4019 = vld [vmem:[#allocation31 + $0x660] sm:$0xff]
    %v4020 = vld [vmem:[#allocation31 + $0x668] sm:$0xff]
    %v4021 = vld [vmem:[#allocation31 + $0x670] sm:$0xff]
    %v4022 = vld [vmem:[#allocation31 + $0x678] sm:$0xff]
    %v4023 = vld [vmem:[#allocation31 + $0x680] sm:$0xff]
    %v4024 = vld [vmem:[#allocation31 + $0x688] sm:$0xff]
    %v4025 = vld [vmem:[#allocation31 + $0x690] sm:$0xff]
    %v4026 = vld [vmem:[#allocation31 + $0x698] sm:$0xff]
    %v4027 = vld [vmem:[#allocation31 + $0x6a0] sm:$0xff]
    %v4028 = vld [vmem:[#allocation31 + $0x6a8] sm:$0xff]
    %v4029 = vld [vmem:[#allocation31 + $0x6b0] sm:$0xff]
    %v4030 = vld [vmem:[#allocation31 + $0x6b8] sm:$0xff]
    %v4031 = vld [vmem:[#allocation31 + $0x6c0] sm:$0xff]
    %v4032 = vld [vmem:[#allocation31 + $0x6c8] sm:$0xff]
    %v4033 = vld [vmem:[#allocation31 + $0x6d0] sm:$0xff]
    %v4034 = vld [vmem:[#allocation31 + $0x6d8] sm:$0xff]
    %v4035 = vld [vmem:[#allocation31 + $0x6e0] sm:$0xff]
    %v4036 = vld [vmem:[#allocation31 + $0x6e8] sm:$0xff]
    %v4037 = vld [vmem:[#allocation31 + $0x6f0] sm:$0xff]
    %v4038 = vld [vmem:[#allocation31 + $0x6f8] sm:$0xff]
    %v4039 = vld [vmem:[#allocation31 + $0x700] sm:$0xff]
    %v4040 = vld [vmem:[#allocation31 + $0x708] sm:$0xff]
    %v4041 = vld [vmem:[#allocation31 + $0x710] sm:$0xff]
    %v4042 = vld [vmem:[#allocation31 + $0x718] sm:$0xff]
    %v4043 = vld [vmem:[#allocation31 + $0x720] sm:$0xff]
    %v4044 = vld [vmem:[#allocation31 + $0x728] sm:$0xff]
    %v4045 = vld [vmem:[#allocation31 + $0x730] sm:$0xff]
    %v4046 = vld [vmem:[#allocation31 + $0x738] sm:$0xff]
    %v4047 = vld [vmem:[#allocation31 + $0x740] sm:$0xff]
    %v4048 = vld [vmem:[#allocation31 + $0x748] sm:$0xff]
    %v4049 = vld [vmem:[#allocation31 + $0x750] sm:$0xff]
    %v4050 = vld [vmem:[#allocation31 + $0x758] sm:$0xff]
    %v4051 = vld [vmem:[#allocation31 + $0x760] sm:$0xff]
    %v4052 = vld [vmem:[#allocation31 + $0x768] sm:$0xff]
    %v4053 = vld [vmem:[#allocation31 + $0x770] sm:$0xff]
    %v4054 = vld [vmem:[#allocation31 + $0x778] sm:$0xff]
    %v4055 = vld [vmem:[#allocation31 + $0x780] sm:$0xff]
    %v4056 = vld [vmem:[#allocation31 + $0x788] sm:$0xff]
    %v4057 = vld [vmem:[#allocation31 + $0x790] sm:$0xff]
    %v4058 = vld [vmem:[#allocation31 + $0x798] sm:$0xff]
    %v4059 = vld [vmem:[#allocation31 + $0x7a0] sm:$0xff]
    %v4060 = vld [vmem:[#allocation31 + $0x7a8] sm:$0xff]
    %v4061 = vld [vmem:[#allocation31 + $0x7b0] sm:$0xff]
    %v4062 = vld [vmem:[#allocation31 + $0x7b8] sm:$0xff]
    %v4063 = vld [vmem:[#allocation31 + $0x7c0] sm:$0xff]
    %v4064 = vld [vmem:[#allocation31 + $0x7c8] sm:$0xff]
    %v4065 = vld [vmem:[#allocation31 + $0x7d0] sm:$0xff]
    %v4066 = vld [vmem:[#allocation31 + $0x7d8] sm:$0xff]
    %v4067 = vld [vmem:[#allocation31 + $0x7e0] sm:$0xff]
    %v4068 = vld [vmem:[#allocation31 + $0x7e8] sm:$0xff]
    %v4069 = vld [vmem:[#allocation31 + $0x7f0] sm:$0xff]
    %v4070 = vld [vmem:[#allocation31 + $0x7f8] sm:$0xff]
    %v4071 = vld [vmem:[#allocation31 + $0x800] sm:$0xff]
    %v4072 = vld [vmem:[#allocation31 + $0x808] sm:$0xff]
    %v4073 = vld [vmem:[#allocation31 + $0x810] sm:$0xff]
    %v4074 = vld [vmem:[#allocation31 + $0x818] sm:$0xff]
    %v4075 = vld [vmem:[#allocation31 + $0x820] sm:$0xff]
    %v4076 = vld [vmem:[#allocation31 + $0x828] sm:$0xff]
    %v4077 = vld [vmem:[#allocation31 + $0x830] sm:$0xff]
    %v4078 = vld [vmem:[#allocation31 + $0x838] sm:$0xff]
    %v4079 = vld [vmem:[#allocation31 + $0x840] sm:$0xff]
    %v4080 = vld [vmem:[#allocation31 + $0x848] sm:$0xff]
    %v4081 = vld [vmem:[#allocation31 + $0x850] sm:$0xff]
    %v4082 = vld [vmem:[#allocation31 + $0x858] sm:$0xff]
    %v4083 = vld [vmem:[#allocation31 + $0x860] sm:$0xff]
    %v4084 = vld [vmem:[#allocation31 + $0x868] sm:$0xff]
    %v4085 = vld [vmem:[#allocation31 + $0x870] sm:$0xff]
    %v4086 = vld [vmem:[#allocation31 + $0x878] sm:$0xff]
    %v4087 = vld [vmem:[#allocation31 + $0x880] sm:$0xff]
    %v4088 = vld [vmem:[#allocation31 + $0x888] sm:$0xff]
    %v4089 = vld [vmem:[#allocation31 + $0x890] sm:$0xff]
    %v4090 = vld [vmem:[#allocation31 + $0x898] sm:$0xff]
    %v4091 = vld [vmem:[#allocation31 + $0x8a0] sm:$0xff]
    %v4092 = vld [vmem:[#allocation31 + $0x8a8] sm:$0xff]
    %v4093 = vld [vmem:[#allocation31 + $0x8b0] sm:$0xff]
    %v4094 = vld [vmem:[#allocation31 + $0x8b8] sm:$0xff]
    %v4095 = vld [vmem:[#allocation31 + $0x8c0] sm:$0xff]
    %v4096 = vld [vmem:[#allocation31 + $0x8c8] sm:$0xff]
    %v4097 = vld [vmem:[#allocation31 + $0x8d0] sm:$0xff]
    %v4098 = vld [vmem:[#allocation31 + $0x8d8] sm:$0xff]
    %v4099 = vld [vmem:[#allocation31 + $0x8e0] sm:$0xff]
    %v4100 = vld [vmem:[#allocation31 + $0x8e8] sm:$0xff]
    %v4101 = vld [vmem:[#allocation31 + $0x8f0] sm:$0xff]
    %v4102 = vld [vmem:[#allocation31 + $0x8f8] sm:$0xff]
    %v4103 = vld [vmem:[#allocation31 + $0x900] sm:$0xff]
    %v4104 = vld [vmem:[#allocation31 + $0x908] sm:$0xff]
    %v4105 = vld [vmem:[#allocation31 + $0x910] sm:$0xff]
    %v4106 = vld [vmem:[#allocation31 + $0x918] sm:$0xff]
    %v4107 = vld [vmem:[#allocation31 + $0x920] sm:$0xff]
    %v4108 = vld [vmem:[#allocation31 + $0x928] sm:$0xff]
    %v4109 = vld [vmem:[#allocation31 + $0x930] sm:$0xff]
    %v4110 = vld [vmem:[#allocation31 + $0x938] sm:$0xff]
    %v4111 = vld [vmem:[#allocation31 + $0x940] sm:$0xff]
    %v4112 = vld [vmem:[#allocation31 + $0x948] sm:$0xff]
    %v4113 = vld [vmem:[#allocation31 + $0x950] sm:$0xff]
    %v4114 = vld [vmem:[#allocation31 + $0x958] sm:$0xff]
    %v4115 = vld [vmem:[#allocation31 + $0x960] sm:$0xff]
    %v4116 = vld [vmem:[#allocation31 + $0x968] sm:$0xff]
    %v4117 = vld [vmem:[#allocation31 + $0x970] sm:$0xff]
    %v4118 = vld [vmem:[#allocation31 + $0x978] sm:$0xff]
    %v4119 = vld [vmem:[#allocation31 + $0x980] sm:$0xff]
    %v4120 = vld [vmem:[#allocation31 + $0x988] sm:$0xff]
    %v4121 = vld [vmem:[#allocation31 + $0x990] sm:$0xff]
    %v4122 = vld [vmem:[#allocation31 + $0x998] sm:$0xff]
    %v4123 = vld [vmem:[#allocation31 + $0x9a0] sm:$0xff]
    %v4124 = vld [vmem:[#allocation31 + $0x9a8] sm:$0xff]
    %v4125 = vld [vmem:[#allocation31 + $0x9b0] sm:$0xff]
    %v4126 = vld [vmem:[#allocation31 + $0x9b8] sm:$0xff]
    %v4127 = vld [vmem:[#allocation31 + $0x9c0] sm:$0xff]
    %v4128 = vld [vmem:[#allocation31 + $0x9c8] sm:$0xff]
    %v4129 = vld [vmem:[#allocation31 + $0x9d0] sm:$0xff]
    %v4130 = vld [vmem:[#allocation31 + $0x9d8] sm:$0xff]
    %v4131 = vld [vmem:[#allocation31 + $0x9e0] sm:$0xff]
    %v4132 = vld [vmem:[#allocation31 + $0x9e8] sm:$0xff]
    %v4133 = vld [vmem:[#allocation31 + $0x9f0] sm:$0xff]
    %v4134 = vld [vmem:[#allocation31 + $0x9f8] sm:$0xff]
    %v4135 = vld [vmem:[#allocation31 + $0xa00] sm:$0xff]
    %v4136 = vld [vmem:[#allocation31 + $0xa08] sm:$0xff]
    %v4137 = vld [vmem:[#allocation31 + $0xa10] sm:$0xff]
    %v4138 = vld [vmem:[#allocation31 + $0xa18] sm:$0xff]
    %v4139 = vld [vmem:[#allocation31 + $0xa20] sm:$0xff]
    %v4140 = vld [vmem:[#allocation31 + $0xa28] sm:$0xff]
    %v4141 = vld [vmem:[#allocation31 + $0xa30] sm:$0xff]
    %v4142 = vld [vmem:[#allocation31 + $0xa38] sm:$0xff]
    %v4143 = vld [vmem:[#allocation31 + $0xa40] sm:$0xff]
    %v4144 = vld [vmem:[#allocation31 + $0xa48] sm:$0xff]
    %v4145 = vld [vmem:[#allocation31 + $0xa50] sm:$0xff]
    %v4146 = vld [vmem:[#allocation31 + $0xa58] sm:$0xff]
    %v4147 = vld [vmem:[#allocation31 + $0xa60] sm:$0xff]
    %v4148 = vld [vmem:[#allocation31 + $0xa68] sm:$0xff]
    %v4149 = vld [vmem:[#allocation31 + $0xa70] sm:$0xff]
    %v4150 = vld [vmem:[#allocation31 + $0xa78] sm:$0xff]
    %v4151 = vld [vmem:[#allocation31 + $0xa80] sm:$0xff]
    %v4152 = vld [vmem:[#allocation31 + $0xa88] sm:$0xff]
    %v4153 = vld [vmem:[#allocation31 + $0xa90] sm:$0xff]
    %v4154 = vld [vmem:[#allocation31 + $0xa98] sm:$0xff]
    %v4155 = vld [vmem:[#allocation31 + $0xaa0] sm:$0xff]
    %v4156 = vld [vmem:[#allocation31 + $0xaa8] sm:$0xff]
    %v4157 = vld [vmem:[#allocation31 + $0xab0] sm:$0xff]
    %v4158 = vld [vmem:[#allocation31 + $0xab8] sm:$0xff]
    %v4159 = vld [vmem:[#allocation31 + $0xac0] sm:$0xff]
    %v4160 = vld [vmem:[#allocation31 + $0xac8] sm:$0xff]
    %v4161 = vld [vmem:[#allocation31 + $0xad0] sm:$0xff]
    %v4162 = vld [vmem:[#allocation31 + $0xad8] sm:$0xff]
    %v4163 = vld [vmem:[#allocation31 + $0xae0] sm:$0xff]
    %v4164 = vld [vmem:[#allocation31 + $0xae8] sm:$0xff]
    %v4165 = vld [vmem:[#allocation31 + $0xaf0] sm:$0xff]
    %v4166 = vld [vmem:[#allocation31 + $0xaf8] sm:$0xff]
    %v4167 = vld [vmem:[#allocation31 + $0xb00] sm:$0xff]
    %v4168 = vld [vmem:[#allocation31 + $0xb08] sm:$0xff]
    %v4169 = vld [vmem:[#allocation31 + $0xb10] sm:$0xff]
    %v4170 = vld [vmem:[#allocation31 + $0xb18] sm:$0xff]
    %v4171 = vld [vmem:[#allocation31 + $0xb20] sm:$0xff]
    %v4172 = vld [vmem:[#allocation31 + $0xb28] sm:$0xff]
    %v4173 = vld [vmem:[#allocation31 + $0xb30] sm:$0xff]
    %v4174 = vld [vmem:[#allocation31 + $0xb38] sm:$0xff]
    %v4175 = vld [vmem:[#allocation31 + $0xb40] sm:$0xff]
    %v4176 = vld [vmem:[#allocation31 + $0xb48] sm:$0xff]
    %v4177 = vld [vmem:[#allocation31 + $0xb50] sm:$0xff]
    %v4178 = vld [vmem:[#allocation31 + $0xb58] sm:$0xff]
    %v4179 = vld [vmem:[#allocation31 + $0xb60] sm:$0xff]
    %v4180 = vld [vmem:[#allocation31 + $0xb68] sm:$0xff]
    %v4181 = vld [vmem:[#allocation31 + $0xb70] sm:$0xff]
    %v4182 = vld [vmem:[#allocation31 + $0xb78] sm:$0xff]
    %v4183 = vld [vmem:[#allocation31 + $0xb80] sm:$0xff]
    %v4184 = vld [vmem:[#allocation31 + $0xb88] sm:$0xff]
    %v4185 = vld [vmem:[#allocation31 + $0xb90] sm:$0xff]
    %v4186 = vld [vmem:[#allocation31 + $0xb98] sm:$0xff]
    %v4187 = vld [vmem:[#allocation31 + $0xba0] sm:$0xff]
    %v4188 = vld [vmem:[#allocation31 + $0xba8] sm:$0xff]
    %v4189 = vld [vmem:[#allocation31 + $0xbb0] sm:$0xff]
    %v4190 = vld [vmem:[#allocation31 + $0xbb8] sm:$0xff]
    %v4191 = vld [vmem:[#allocation31 + $0xbc0] sm:$0xff]
    %v4192 = vld [vmem:[#allocation31 + $0xbc8] sm:$0xff]
    %v4193 = vld [vmem:[#allocation31 + $0xbd0] sm:$0xff]
    %v4194 = vld [vmem:[#allocation31 + $0xbd8] sm:$0xff]
    %v4195 = vld [vmem:[#allocation31 + $0xbe0] sm:$0xff]
    %v4196 = vld [vmem:[#allocation31 + $0xbe8] sm:$0xff]
    %v4197 = vld [vmem:[#allocation31 + $0xbf0] sm:$0xff]
    %v4198 = vld [vmem:[#allocation31 + $0xbf8] sm:$0xff]
    %v4199 = vld [vmem:[#allocation31 + $0xc00] sm:$0xff]
    %v4200 = vld [vmem:[#allocation31 + $0xc08] sm:$0xff]
    %v4201 = vld [vmem:[#allocation31 + $0xc10] sm:$0xff]
    %v4202 = vld [vmem:[#allocation31 + $0xc18] sm:$0xff]
    %v4203 = vld [vmem:[#allocation31 + $0xc20] sm:$0xff]
    %v4204 = vld [vmem:[#allocation31 + $0xc28] sm:$0xff]
    %v4205 = vld [vmem:[#allocation31 + $0xc30] sm:$0xff]
    %v4206 = vld [vmem:[#allocation31 + $0xc38] sm:$0xff]
    %v4207 = vld [vmem:[#allocation31 + $0xc40] sm:$0xff]
    %v4208 = vld [vmem:[#allocation31 + $0xc48] sm:$0xff]
    %v4209 = vld [vmem:[#allocation31 + $0xc50] sm:$0xff]
    %v4210 = vld [vmem:[#allocation31 + $0xc58] sm:$0xff]
    %v4211 = vld [vmem:[#allocation31 + $0xc60] sm:$0xff]
    %v4212 = vld [vmem:[#allocation31 + $0xc68] sm:$0xff]
    %v4213 = vld [vmem:[#allocation31 + $0xc70] sm:$0xff]
    %v4214 = vld [vmem:[#allocation31 + $0xc78] sm:$0xff]
    %v4215 = vld [vmem:[#allocation31 + $0xc80] sm:$0xff]
    %v4216 = vld [vmem:[#allocation31 + $0xc88] sm:$0xff]
    %v4217 = vld [vmem:[#allocation31 + $0xc90] sm:$0xff]
    %v4218 = vld [vmem:[#allocation31 + $0xc98] sm:$0xff]
    %v4219 = vld [vmem:[#allocation31 + $0xca0] sm:$0xff]
    %v4220 = vld [vmem:[#allocation31 + $0xca8] sm:$0xff]
    %v4221 = vld [vmem:[#allocation31 + $0xcb0] sm:$0xff]
    %v4222 = vld [vmem:[#allocation31 + $0xcb8] sm:$0xff]
    %v4223 = vld [vmem:[#allocation31 + $0xcc0] sm:$0xff]
    %v4224 = vld [vmem:[#allocation31 + $0xcc8] sm:$0xff]
    %v4225 = vld [vmem:[#allocation31 + $0xcd0] sm:$0xff]
    %v4226 = vld [vmem:[#allocation31 + $0xcd8] sm:$0xff]
    %v4227 = vld [vmem:[#allocation31 + $0xce0] sm:$0xff]
    %v4228 = vld [vmem:[#allocation31 + $0xce8] sm:$0xff]
    %v4229 = vld [vmem:[#allocation31 + $0xcf0] sm:$0xff]
    %v4230 = vld [vmem:[#allocation31 + $0xcf8] sm:$0xff]
    %v4231 = vld [vmem:[#allocation31 + $0xd00] sm:$0xff]
    %v4232 = vld [vmem:[#allocation31 + $0xd08] sm:$0xff]
    %v4233 = vld [vmem:[#allocation31 + $0xd10] sm:$0xff]
    %v4234 = vld [vmem:[#allocation31 + $0xd18] sm:$0xff]
    %v4235 = vld [vmem:[#allocation31 + $0xd20] sm:$0xff]
    %v4236 = vld [vmem:[#allocation31 + $0xd28] sm:$0xff]
    %v4237 = vld [vmem:[#allocation31 + $0xd30] sm:$0xff]
    %v4238 = vld [vmem:[#allocation31 + $0xd38] sm:$0xff]
    %v4239 = vld [vmem:[#allocation31 + $0xd40] sm:$0xff]
    %v4240 = vld [vmem:[#allocation31 + $0xd48] sm:$0xff]
    %v4241 = vld [vmem:[#allocation31 + $0xd50] sm:$0xff]
    %v4242 = vld [vmem:[#allocation31 + $0xd58] sm:$0xff]
    %v4243 = vld [vmem:[#allocation31 + $0xd60] sm:$0xff]
    %v4244 = vld [vmem:[#allocation31 + $0xd68] sm:$0xff]
    %v4245 = vld [vmem:[#allocation31 + $0xd70] sm:$0xff]
    %v4246 = vld [vmem:[#allocation31 + $0xd78] sm:$0xff]
    %v4247 = vld [vmem:[#allocation31 + $0xd80] sm:$0xff]
    %v4248 = vld [vmem:[#allocation31 + $0xd88] sm:$0xff]
    %v4249 = vld [vmem:[#allocation31 + $0xd90] sm:$0xff]
    %v4250 = vld [vmem:[#allocation31 + $0xd98] sm:$0xff]
    %v4251 = vld [vmem:[#allocation31 + $0xda0] sm:$0xff]
    %v4252 = vld [vmem:[#allocation31 + $0xda8] sm:$0xff]
    %v4253 = vld [vmem:[#allocation31 + $0xdb0] sm:$0xff]
    %v4254 = vld [vmem:[#allocation31 + $0xdb8] sm:$0xff]
    %v4255 = vld [vmem:[#allocation31 + $0xdc0] sm:$0xff]
    %v4256 = vld [vmem:[#allocation31 + $0xdc8] sm:$0xff]
    %v4257 = vld [vmem:[#allocation31 + $0xdd0] sm:$0xff]
    %v4258 = vld [vmem:[#allocation31 + $0xdd8] sm:$0xff]
    %v4259 = vld [vmem:[#allocation31 + $0xde0] sm:$0xff]
    %v4260 = vld [vmem:[#allocation31 + $0xde8] sm:$0xff]
    %v4261 = vld [vmem:[#allocation31 + $0xdf0] sm:$0xff]
    %v4262 = vld [vmem:[#allocation31 + $0xdf8] sm:$0xff]
    %v4263 = vld [vmem:[#allocation31 + $0xe00] sm:$0xff]
    %v4264 = vld [vmem:[#allocation31 + $0xe08] sm:$0xff]
    %v4265 = vld [vmem:[#allocation31 + $0xe10] sm:$0xff]
    %v4266 = vld [vmem:[#allocation31 + $0xe18] sm:$0xff]
    %v4267 = vld [vmem:[#allocation31 + $0xe20] sm:$0xff]
    %v4268 = vld [vmem:[#allocation31 + $0xe28] sm:$0xff]
    %v4269 = vld [vmem:[#allocation31 + $0xe30] sm:$0xff]
    %v4270 = vld [vmem:[#allocation31 + $0xe38] sm:$0xff]
    %v4271 = vld [vmem:[#allocation31 + $0xe40] sm:$0xff]
    %v4272 = vld [vmem:[#allocation31 + $0xe48] sm:$0xff]
    %v4273 = vld [vmem:[#allocation31 + $0xe50] sm:$0xff]
    %v4274 = vld [vmem:[#allocation31 + $0xe58] sm:$0xff]
    %v4275 = vld [vmem:[#allocation31 + $0xe60] sm:$0xff]
    %v4276 = vld [vmem:[#allocation31 + $0xe68] sm:$0xff]
    %v4277 = vld [vmem:[#allocation31 + $0xe70] sm:$0xff]
    %v4278 = vld [vmem:[#allocation31 + $0xe78] sm:$0xff]
    %v4279 = vld [vmem:[#allocation31 + $0xe80] sm:$0xff]
    %v4280 = vld [vmem:[#allocation31 + $0xe88] sm:$0xff]
    %v4281 = vld [vmem:[#allocation31 + $0xe90] sm:$0xff]
    %v4282 = vld [vmem:[#allocation31 + $0xe98] sm:$0xff]
    %v4283 = vld [vmem:[#allocation31 + $0xea0] sm:$0xff]
    %v4284 = vld [vmem:[#allocation31 + $0xea8] sm:$0xff]
    %v4285 = vld [vmem:[#allocation31 + $0xeb0] sm:$0xff]
    %v4286 = vld [vmem:[#allocation31 + $0xeb8] sm:$0xff]
    %v4287 = vld [vmem:[#allocation31 + $0xec0] sm:$0xff]
    %v4288 = vld [vmem:[#allocation31 + $0xec8] sm:$0xff]
    %v4289 = vld [vmem:[#allocation31 + $0xed0] sm:$0xff]
    %v4290 = vld [vmem:[#allocation31 + $0xed8] sm:$0xff]
    %v4291 = vld [vmem:[#allocation31 + $0xee0] sm:$0xff]
    %v4292 = vld [vmem:[#allocation31 + $0xee8] sm:$0xff]
    %v4293 = vld [vmem:[#allocation31 + $0xef0] sm:$0xff]
    %v4294 = vld [vmem:[#allocation31 + $0xef8] sm:$0xff]
    %v4295 = vld [vmem:[#allocation31 + $0xf00] sm:$0xff]
    %v4296 = vld [vmem:[#allocation31 + $0xf08] sm:$0xff]
    %v4297 = vld [vmem:[#allocation31 + $0xf10] sm:$0xff]
    %v4298 = vld [vmem:[#allocation31 + $0xf18] sm:$0xff]
    %v4299 = vld [vmem:[#allocation31 + $0xf20] sm:$0xff]
    %v4300 = vld [vmem:[#allocation31 + $0xf28] sm:$0xff]
    %v4301 = vld [vmem:[#allocation31 + $0xf30] sm:$0xff]
    %v4302 = vld [vmem:[#allocation31 + $0xf38] sm:$0xff]
    %v4303 = vld [vmem:[#allocation31 + $0xf40] sm:$0xff]
    %v4304 = vld [vmem:[#allocation31 + $0xf48] sm:$0xff]
    %v4305 = vld [vmem:[#allocation31 + $0xf50] sm:$0xff]
    %v4306 = vld [vmem:[#allocation31 + $0xf58] sm:$0xff]
    %v4307 = vld [vmem:[#allocation31 + $0xf60] sm:$0xff]
    %v4308 = vld [vmem:[#allocation31 + $0xf68] sm:$0xff]
    %v4309 = vld [vmem:[#allocation31 + $0xf70] sm:$0xff]
    %v4310 = vld [vmem:[#allocation31 + $0xf78] sm:$0xff]
    %v4311 = vld [vmem:[#allocation31 + $0xf80] sm:$0xff]
    %v4312 = vld [vmem:[#allocation31 + $0xf88] sm:$0xff]
    %v4313 = vld [vmem:[#allocation31 + $0xf90] sm:$0xff]
    %v4314 = vld [vmem:[#allocation31 + $0xf98] sm:$0xff]
    %v4315 = vld [vmem:[#allocation31 + $0xfa0] sm:$0xff]
    %v4316 = vld [vmem:[#allocation31 + $0xfa8] sm:$0xff]
    %v4317 = vld [vmem:[#allocation31 + $0xfb0] sm:$0xff]
    %v4318 = vld [vmem:[#allocation31 + $0xfb8] sm:$0xff]
    %v4319 = vld [vmem:[#allocation31 + $0xfc0] sm:$0xff]
    %v4320 = vld [vmem:[#allocation31 + $0xfc8] sm:$0xff]
    %v4321 = vld [vmem:[#allocation31 + $0xfd0] sm:$0xff]
    %v4322 = vld [vmem:[#allocation31 + $0xfd8] sm:$0xff]
    %v4323 = vld [vmem:[#allocation31 + $0xfe0] sm:$0xff]
    %v4324 = vld [vmem:[#allocation31 + $0xfe8] sm:$0xff]
    %v4325 = vld [vmem:[#allocation31 + $0xff0] sm:$0xff]
    %v4326 = vld [vmem:[#allocation31 + $0xff8] sm:$0xff]
    %v4327 = vld [vmem:[#allocation32] sm:$0xff]
    %v4329 = vperm.slane %v4327, 0
    %v4330 = vperm.slane %v4327, 1
    %v4331 = vperm.slane %v4327, 2
    %v4332 = vperm.slane %v4327, 3
    %v4333 = vperm.slane %v4327, 4
    %v4334 = vperm.slane %v4327, 5
    %v4335 = vperm.slane %v4327, 6
    %v4336 = vperm.slane %v4327, 7
    %4345 = vmatpush.msra.mxu0 %v3935
    %4346 = vmatpush.msra.mxu0 %v3927
    %4347 = vmatpush.msra.mxu0 %v3919
    %4348 = vmatpush.msra.mxu0 %v3911
    %4349 = vmatpush.msra.mxu0 %v3903
    %4350 = vmatpush.msra.mxu0 %v3895
    %4351 = vmatpush.msra.mxu0 %v3887
    %4352 = vmatpush.msra.mxu0 %v3879
    %4353 = vmatpush.msra.mxu0 %v3871
    %4354 = vmatpush.msra.mxu0 %v3863
    %4355 = vmatpush.msra.mxu0 %v3855
    %4356 = vmatpush.msra.mxu0 %v3847
    %4357 = vmatpush.msra.mxu0 %v3839
    %4358 = vmatpush.msra.mxu0 %v3831
    %4359 = vmatpush.msra.mxu0 %v3823
    %4360 = vmatpush.msra.mxu0 %v3815
    %4361 = vmatmul.f32.gmra.mxu0 %v3811
    %v4362 = vpop.f32.mrf.mxu0
    %v4363 = vadd.f32 %v4329, %v4362
    %4364 = vdwg.mxu0
    %4365 = vmatpush.msra.mxu0 %v4063
    %4366 = vmatpush.msra.mxu0 %v4055
    %4367 = vmatpush.msra.mxu0 %v4047
    %4368 = vmatpush.msra.mxu0 %v4039
    %4369 = vmatpush.msra.mxu0 %v4031
    %4370 = vmatpush.msra.mxu0 %v4023
    %4371 = vmatpush.msra.mxu0 %v4015
    %4372 = vmatpush.msra.mxu0 %v4007
    %4373 = vmatpush.msra.mxu0 %v3999
    %4374 = vmatpush.msra.mxu0 %v3991
    %4375 = vmatpush.msra.mxu0 %v3983
    %4376 = vmatpush.msra.mxu0 %v3975
    %4377 = vmatpush.msra.mxu0 %v3967
    %4378 = vmatpush.msra.mxu0 %v3959
    %4379 = vmatpush.msra.mxu0 %v3951
    %4380 = vmatpush.msra.mxu0 %v3943
    %4381 = vmatmul.f32.gmra.mxu0 %v3812
    %v4382 = vpop.f32.mrf.mxu0
    %v4383 = vadd.f32 %v4363, %v4382
    %4384 = vdwg.mxu0
    %4385 = vmatpush.msra.mxu0 %v4191
    %4386 = vmatpush.msra.mxu0 %v4183
    %4387 = vmatpush.msra.mxu0 %v4175
    %4388 = vmatpush.msra.mxu0 %v4167
    %4389 = vmatpush.msra.mxu0 %v4159
    %4390 = vmatpush.msra.mxu0 %v4151
    %4391 = vmatpush.msra.mxu0 %v4143
    %4392 = vmatpush.msra.mxu0 %v4135
    %4393 = vmatpush.msra.mxu0 %v4127
    %4394 = vmatpush.msra.mxu0 %v4119
    %4395 = vmatpush.msra.mxu0 %v4111
    %4396 = vmatpush.msra.mxu0 %v4103
    %4397 = vmatpush.msra.mxu0 %v4095
    %4398 = vmatpush.msra.mxu0 %v4087
    %4399 = vmatpush.msra.mxu0 %v4079
    %4400 = vmatpush.msra.mxu0 %v4071
    %4401 = vmatmul.f32.gmra.mxu0 %v3813
    %v4402 = vpop.f32.mrf.mxu0
    %v4403 = vadd.f32 %v4383, %v4402
    %4404 = vdwg.mxu0
    %4405 = vmatpush.msra.mxu0 %v4319
    %4406 = vmatpush.msra.mxu0 %v4311
    %4407 = vmatpush.msra.mxu0 %v4303
    %4408 = vmatpush.msra.mxu0 %v4295
    %4409 = vmatpush.msra.mxu0 %v4287
    %4410 = vmatpush.msra.mxu0 %v4279
    %4411 = vmatpush.msra.mxu0 %v4271
    %4412 = vmatpush.msra.mxu0 %v4263
    %4413 = vmatpush.msra.mxu0 %v4255
    %4414 = vmatpush.msra.mxu0 %v4247
    %4415 = vmatpush.msra.mxu0 %v4239
    %4416 = vmatpush.msra.mxu0 %v4231
    %4417 = vmatpush.msra.mxu0 %v4223
    %4418 = vmatpush.msra.mxu0 %v4215
    %4419 = vmatpush.msra.mxu0 %v4207
    %4420 = vmatpush.msra.mxu0 %v4199
    %4421 = vmatmul.f32.gmra.mxu0 %v3814
    %v4422 = vpop.f32.mrf.mxu0
    %v4423 = vadd.f32 %v4403, %v4422
    %4424 = vdwg.mxu0
    %4425 = vmatpush.msra.mxu0 %v3936
    %4426 = vmatpush.msra.mxu0 %v3928
    %4427 = vmatpush.msra.mxu0 %v3920
    %4428 = vmatpush.msra.mxu0 %v3912
    %4429 = vmatpush.msra.mxu0 %v3904
    %4430 = vmatpush.msra.mxu0 %v3896
    %4431 = vmatpush.msra.mxu0 %v3888
    %4432 = vmatpush.msra.mxu0 %v3880
    %4433 = vmatpush.msra.mxu0 %v3872
    %4434 = vmatpush.msra.mxu0 %v3864
    %4435 = vmatpush.msra.mxu0 %v3856
    %4436 = vmatpush.msra.mxu0 %v3848
    %4437 = vmatpush.msra.mxu0 %v3840
    %4438 = vmatpush.msra.mxu0 %v3832
    %4439 = vmatpush.msra.mxu0 %v3824
    %4440 = vmatpush.msra.mxu0 %v3816
    %4441 = vmatmul.f32.gmra.mxu0 %v3811
    %v4442 = vpop.f32.mrf.mxu0
    %v4443 = vadd.f32 %v4330, %v4442
    %4444 = vdwg.mxu0
    %4445 = vmatpush.msra.mxu0 %v4064
    %4446 = vmatpush.msra.mxu0 %v4056
    %4447 = vmatpush.msra.mxu0 %v4048
    %4448 = vmatpush.msra.mxu0 %v4040
    %4449 = vmatpush.msra.mxu0 %v4032
    %4450 = vmatpush.msra.mxu0 %v4024
    %4451 = vmatpush.msra.mxu0 %v4016
    %4452 = vmatpush.msra.mxu0 %v4008
    %4453 = vmatpush.msra.mxu0 %v4000
    %4454 = vmatpush.msra.mxu0 %v3992
    %4455 = vmatpush.msra.mxu0 %v3984
    %4456 = vmatpush.msra.mxu0 %v3976
    %4457 = vmatpush.msra.mxu0 %v3968
    %4458 = vmatpush.msra.mxu0 %v3960
    %4459 = vmatpush.msra.mxu0 %v3952
    %4460 = vmatpush.msra.mxu0 %v3944
    %4461 = vmatmul.f32.gmra.mxu0 %v3812
    %v4462 = vpop.f32.mrf.mxu0
    %v4463 = vadd.f32 %v4443, %v4462
    %4464 = vdwg.mxu0
    %4465 = vmatpush.msra.mxu0 %v4192
    %4466 = vmatpush.msra.mxu0 %v4184
    %4467 = vmatpush.msra.mxu0 %v4176
    %4468 = vmatpush.msra.mxu0 %v4168
    %4469 = vmatpush.msra.mxu0 %v4160
    %4470 = vmatpush.msra.mxu0 %v4152
    %4471 = vmatpush.msra.mxu0 %v4144
    %4472 = vmatpush.msra.mxu0 %v4136
    %4473 = vmatpush.msra.mxu0 %v4128
    %4474 = vmatpush.msra.mxu0 %v4120
    %4475 = vmatpush.msra.mxu0 %v4112
    %4476 = vmatpush.msra.mxu0 %v4104
    %4477 = vmatpush.msra.mxu0 %v4096
    %4478 = vmatpush.msra.mxu0 %v4088
    %4479 = vmatpush.msra.mxu0 %v4080
    %4480 = vmatpush.msra.mxu0 %v4072
    %4481 = vmatmul.f32.gmra.mxu0 %v3813
    %v4482 = vpop.f32.mrf.mxu0
    %v4483 = vadd.f32 %v4463, %v4482
    %4484 = vdwg.mxu0
    %4485 = vmatpush.msra.mxu0 %v4320
    %4486 = vmatpush.msra.mxu0 %v4312
    %4487 = vmatpush.msra.mxu0 %v4304
    %4488 = vmatpush.msra.mxu0 %v4296
    %4489 = vmatpush.msra.mxu0 %v4288
    %4490 = vmatpush.msra.mxu0 %v4280
    %4491 = vmatpush.msra.mxu0 %v4272
    %4492 = vmatpush.msra.mxu0 %v4264
    %4493 = vmatpush.msra.mxu0 %v4256
    %4494 = vmatpush.msra.mxu0 %v4248
    %4495 = vmatpush.msra.mxu0 %v4240
    %4496 = vmatpush.msra.mxu0 %v4232
    %4497 = vmatpush.msra.mxu0 %v4224
    %4498 = vmatpush.msra.mxu0 %v4216
    %4499 = vmatpush.msra.mxu0 %v4208
    %4500 = vmatpush.msra.mxu0 %v4200
    %4501 = vmatmul.f32.gmra.mxu0 %v3814
    %v4502 = vpop.f32.mrf.mxu0
    %v4503 = vadd.f32 %v4483, %v4502
    %4504 = vdwg.mxu0
    %4505 = vmatpush.msra.mxu0 %v3937
    %4506 = vmatpush.msra.mxu0 %v3929
    %4507 = vmatpush.msra.mxu0 %v3921
    %4508 = vmatpush.msra.mxu0 %v3913
    %4509 = vmatpush.msra.mxu0 %v3905
    %4510 = vmatpush.msra.mxu0 %v3897
    %4511 = vmatpush.msra.mxu0 %v3889
    %4512 = vmatpush.msra.mxu0 %v3881
    %4513 = vmatpush.msra.mxu0 %v3873
    %4514 = vmatpush.msra.mxu0 %v3865
    %4515 = vmatpush.msra.mxu0 %v3857
    %4516 = vmatpush.msra.mxu0 %v3849
    %4517 = vmatpush.msra.mxu0 %v3841
    %4518 = vmatpush.msra.mxu0 %v3833
    %4519 = vmatpush.msra.mxu0 %v3825
    %4520 = vmatpush.msra.mxu0 %v3817
    %4521 = vmatmul.f32.gmra.mxu0 %v3811
    %v4522 = vpop.f32.mrf.mxu0
    %v4523 = vadd.f32 %v4331, %v4522
    %4524 = vdwg.mxu0
    %4525 = vmatpush.msra.mxu0 %v4065
    %4526 = vmatpush.msra.mxu0 %v4057
    %4527 = vmatpush.msra.mxu0 %v4049
    %4528 = vmatpush.msra.mxu0 %v4041
    %4529 = vmatpush.msra.mxu0 %v4033
    %4530 = vmatpush.msra.mxu0 %v4025
    %4531 = vmatpush.msra.mxu0 %v4017
    %4532 = vmatpush.msra.mxu0 %v4009
    %4533 = vmatpush.msra.mxu0 %v4001
    %4534 = vmatpush.msra.mxu0 %v3993
    %4535 = vmatpush.msra.mxu0 %v3985
    %4536 = vmatpush.msra.mxu0 %v3977
    %4537 = vmatpush.msra.mxu0 %v3969
    %4538 = vmatpush.msra.mxu0 %v3961
    %4539 = vmatpush.msra.mxu0 %v3953
    %4540 = vmatpush.msra.mxu0 %v3945
    %4541 = vmatmul.f32.gmra.mxu0 %v3812
    %v4542 = vpop.f32.mrf.mxu0
    %v4543 = vadd.f32 %v4523, %v4542
    %4544 = vdwg.mxu0
    %4545 = vmatpush.msra.mxu0 %v4193
    %4546 = vmatpush.msra.mxu0 %v4185
    %4547 = vmatpush.msra.mxu0 %v4177
    %4548 = vmatpush.msra.mxu0 %v4169
    %4549 = vmatpush.msra.mxu0 %v4161
    %4550 = vmatpush.msra.mxu0 %v4153
    %4551 = vmatpush.msra.mxu0 %v4145
    %4552 = vmatpush.msra.mxu0 %v4137
    %4553 = vmatpush.msra.mxu0 %v4129
    %4554 = vmatpush.msra.mxu0 %v4121
    %4555 = vmatpush.msra.mxu0 %v4113
    %4556 = vmatpush.msra.mxu0 %v4105
    %4557 = vmatpush.msra.mxu0 %v4097
    %4558 = vmatpush.msra.mxu0 %v4089
    %4559 = vmatpush.msra.mxu0 %v4081
    %4560 = vmatpush.msra.mxu0 %v4073
    %4561 = vmatmul.f32.gmra.mxu0 %v3813
    %v4562 = vpop.f32.mrf.mxu0
    %v4563 = vadd.f32 %v4543, %v4562
    %4564 = vdwg.mxu0
    %4565 = vmatpush.msra.mxu0 %v4321
    %4566 = vmatpush.msra.mxu0 %v4313
    %4567 = vmatpush.msra.mxu0 %v4305
    %4568 = vmatpush.msra.mxu0 %v4297
    %4569 = vmatpush.msra.mxu0 %v4289
    %4570 = vmatpush.msra.mxu0 %v4281
    %4571 = vmatpush.msra.mxu0 %v4273
    %4572 = vmatpush.msra.mxu0 %v4265
    %4573 = vmatpush.msra.mxu0 %v4257
    %4574 = vmatpush.msra.mxu0 %v4249
    %4575 = vmatpush.msra.mxu0 %v4241
    %4576 = vmatpush.msra.mxu0 %v4233
    %4577 = vmatpush.msra.mxu0 %v4225
    %4578 = vmatpush.msra.mxu0 %v4217
    %4579 = vmatpush.msra.mxu0 %v4209
    %4580 = vmatpush.msra.mxu0 %v4201
    %4581 = vmatmul.f32.gmra.mxu0 %v3814
    %v4582 = vpop.f32.mrf.mxu0
    %v4583 = vadd.f32 %v4563, %v4582
    %4584 = vdwg.mxu0
    %4585 = vmatpush.msra.mxu0 %v3938
    %4586 = vmatpush.msra.mxu0 %v3930
    %4587 = vmatpush.msra.mxu0 %v3922
    %4588 = vmatpush.msra.mxu0 %v3914
    %4589 = vmatpush.msra.mxu0 %v3906
    %4590 = vmatpush.msra.mxu0 %v3898
    %4591 = vmatpush.msra.mxu0 %v3890
    %4592 = vmatpush.msra.mxu0 %v3882
    %4593 = vmatpush.msra.mxu0 %v3874
    %4594 = vmatpush.msra.mxu0 %v3866
    %4595 = vmatpush.msra.mxu0 %v3858
    %4596 = vmatpush.msra.mxu0 %v3850
    %4597 = vmatpush.msra.mxu0 %v3842
    %4598 = vmatpush.msra.mxu0 %v3834
    %4599 = vmatpush.msra.mxu0 %v3826
    %4600 = vmatpush.msra.mxu0 %v3818
    %4601 = vmatmul.f32.gmra.mxu0 %v3811
    %v4602 = vpop.f32.mrf.mxu0
    %v4603 = vadd.f32 %v4332, %v4602
    %4604 = vdwg.mxu0
    %4605 = vmatpush.msra.mxu0 %v4066
    %4606 = vmatpush.msra.mxu0 %v4058
    %4607 = vmatpush.msra.mxu0 %v4050
    %4608 = vmatpush.msra.mxu0 %v4042
    %4609 = vmatpush.msra.mxu0 %v4034
    %4610 = vmatpush.msra.mxu0 %v4026
    %4611 = vmatpush.msra.mxu0 %v4018
    %4612 = vmatpush.msra.mxu0 %v4010
    %4613 = vmatpush.msra.mxu0 %v4002
    %4614 = vmatpush.msra.mxu0 %v3994
    %4615 = vmatpush.msra.mxu0 %v3986
    %4616 = vmatpush.msra.mxu0 %v3978
    %4617 = vmatpush.msra.mxu0 %v3970
    %4618 = vmatpush.msra.mxu0 %v3962
    %4619 = vmatpush.msra.mxu0 %v3954
    %4620 = vmatpush.msra.mxu0 %v3946
    %4621 = vmatmul.f32.gmra.mxu0 %v3812
    %v4622 = vpop.f32.mrf.mxu0
    %v4623 = vadd.f32 %v4603, %v4622
    %4624 = vdwg.mxu0
    %4625 = vmatpush.msra.mxu0 %v4194
    %4626 = vmatpush.msra.mxu0 %v4186
    %4627 = vmatpush.msra.mxu0 %v4178
    %4628 = vmatpush.msra.mxu0 %v4170
    %4629 = vmatpush.msra.mxu0 %v4162
    %4630 = vmatpush.msra.mxu0 %v4154
    %4631 = vmatpush.msra.mxu0 %v4146
    %4632 = vmatpush.msra.mxu0 %v4138
    %4633 = vmatpush.msra.mxu0 %v4130
    %4634 = vmatpush.msra.mxu0 %v4122
    %4635 = vmatpush.msra.mxu0 %v4114
    %4636 = vmatpush.msra.mxu0 %v4106
    %4637 = vmatpush.msra.mxu0 %v4098
    %4638 = vmatpush.msra.mxu0 %v4090
    %4639 = vmatpush.msra.mxu0 %v4082
    %4640 = vmatpush.msra.mxu0 %v4074
    %4641 = vmatmul.f32.gmra.mxu0 %v3813
    %v4642 = vpop.f32.mrf.mxu0
    %v4643 = vadd.f32 %v4623, %v4642
    %4644 = vdwg.mxu0
    %4645 = vmatpush.msra.mxu0 %v4322
    %4646 = vmatpush.msra.mxu0 %v4314
    %4647 = vmatpush.msra.mxu0 %v4306
    %4648 = vmatpush.msra.mxu0 %v4298
    %4649 = vmatpush.msra.mxu0 %v4290
    %4650 = vmatpush.msra.mxu0 %v4282
    %4651 = vmatpush.msra.mxu0 %v4274
    %4652 = vmatpush.msra.mxu0 %v4266
    %4653 = vmatpush.msra.mxu0 %v4258
    %4654 = vmatpush.msra.mxu0 %v4250
    %4655 = vmatpush.msra.mxu0 %v4242
    %4656 = vmatpush.msra.mxu0 %v4234
    %4657 = vmatpush.msra.mxu0 %v4226
    %4658 = vmatpush.msra.mxu0 %v4218
    %4659 = vmatpush.msra.mxu0 %v4210
    %4660 = vmatpush.msra.mxu0 %v4202
    %4661 = vmatmul.f32.gmra.mxu0 %v3814
    %v4662 = vpop.f32.mrf.mxu0
    %v4663 = vadd.f32 %v4643, %v4662
    %4664 = vdwg.mxu0
    %4665 = vmatpush.msra.mxu0 %v3939
    %4666 = vmatpush.msra.mxu0 %v3931
    %4667 = vmatpush.msra.mxu0 %v3923
    %4668 = vmatpush.msra.mxu0 %v3915
    %4669 = vmatpush.msra.mxu0 %v3907
    %4670 = vmatpush.msra.mxu0 %v3899
    %4671 = vmatpush.msra.mxu0 %v3891
    %4672 = vmatpush.msra.mxu0 %v3883
    %4673 = vmatpush.msra.mxu0 %v3875
    %4674 = vmatpush.msra.mxu0 %v3867
    %4675 = vmatpush.msra.mxu0 %v3859
    %4676 = vmatpush.msra.mxu0 %v3851
    %4677 = vmatpush.msra.mxu0 %v3843
    %4678 = vmatpush.msra.mxu0 %v3835
    %4679 = vmatpush.msra.mxu0 %v3827
    %4680 = vmatpush.msra.mxu0 %v3819
    %4681 = vmatmul.f32.gmra.mxu0 %v3811
    %v4682 = vpop.f32.mrf.mxu0
    %v4683 = vadd.f32 %v4333, %v4682
    %4684 = vdwg.mxu0
    %4685 = vmatpush.msra.mxu0 %v4067
    %4686 = vmatpush.msra.mxu0 %v4059
    %4687 = vmatpush.msra.mxu0 %v4051
    %4688 = vmatpush.msra.mxu0 %v4043
    %4689 = vmatpush.msra.mxu0 %v4035
    %4690 = vmatpush.msra.mxu0 %v4027
    %4691 = vmatpush.msra.mxu0 %v4019
    %4692 = vmatpush.msra.mxu0 %v4011
    %4693 = vmatpush.msra.mxu0 %v4003
    %4694 = vmatpush.msra.mxu0 %v3995
    %4695 = vmatpush.msra.mxu0 %v3987
    %4696 = vmatpush.msra.mxu0 %v3979
    %4697 = vmatpush.msra.mxu0 %v3971
    %4698 = vmatpush.msra.mxu0 %v3963
    %4699 = vmatpush.msra.mxu0 %v3955
    %4700 = vmatpush.msra.mxu0 %v3947
    %4701 = vmatmul.f32.gmra.mxu0 %v3812
    %v4702 = vpop.f32.mrf.mxu0
    %v4703 = vadd.f32 %v4683, %v4702
    %4704 = vdwg.mxu0
    %4705 = vmatpush.msra.mxu0 %v4195
    %4706 = vmatpush.msra.mxu0 %v4187
    %4707 = vmatpush.msra.mxu0 %v4179
    %4708 = vmatpush.msra.mxu0 %v4171
    %4709 = vmatpush.msra.mxu0 %v4163
    %4710 = vmatpush.msra.mxu0 %v4155
    %4711 = vmatpush.msra.mxu0 %v4147
    %4712 = vmatpush.msra.mxu0 %v4139
    %4713 = vmatpush.msra.mxu0 %v4131
    %4714 = vmatpush.msra.mxu0 %v4123
    %4715 = vmatpush.msra.mxu0 %v4115
    %4716 = vmatpush.msra.mxu0 %v4107
    %4717 = vmatpush.msra.mxu0 %v4099
    %4718 = vmatpush.msra.mxu0 %v4091
    %4719 = vmatpush.msra.mxu0 %v4083
    %4720 = vmatpush.msra.mxu0 %v4075
    %4721 = vmatmul.f32.gmra.mxu0 %v3813
    %v4722 = vpop.f32.mrf.mxu0
    %v4723 = vadd.f32 %v4703, %v4722
    %4724 = vdwg.mxu0
    %4725 = vmatpush.msra.mxu0 %v4323
    %4726 = vmatpush.msra.mxu0 %v4315
    %4727 = vmatpush.msra.mxu0 %v4307
    %4728 = vmatpush.msra.mxu0 %v4299
    %4729 = vmatpush.msra.mxu0 %v4291
    %4730 = vmatpush.msra.mxu0 %v4283
    %4731 = vmatpush.msra.mxu0 %v4275
    %4732 = vmatpush.msra.mxu0 %v4267
    %4733 = vmatpush.msra.mxu0 %v4259
    %4734 = vmatpush.msra.mxu0 %v4251
    %4735 = vmatpush.msra.mxu0 %v4243
    %4736 = vmatpush.msra.mxu0 %v4235
    %4737 = vmatpush.msra.mxu0 %v4227
    %4738 = vmatpush.msra.mxu0 %v4219
    %4739 = vmatpush.msra.mxu0 %v4211
    %4740 = vmatpush.msra.mxu0 %v4203
    %4741 = vmatmul.f32.gmra.mxu0 %v3814
    %v4742 = vpop.f32.mrf.mxu0
    %v4743 = vadd.f32 %v4723, %v4742
    %4744 = vdwg.mxu0
    %4745 = vmatpush.msra.mxu0 %v3940
    %4746 = vmatpush.msra.mxu0 %v3932
    %4747 = vmatpush.msra.mxu0 %v3924
    %4748 = vmatpush.msra.mxu0 %v3916
    %4749 = vmatpush.msra.mxu0 %v3908
    %4750 = vmatpush.msra.mxu0 %v3900
    %4751 = vmatpush.msra.mxu0 %v3892
    %4752 = vmatpush.msra.mxu0 %v3884
    %4753 = vmatpush.msra.mxu0 %v3876
    %4754 = vmatpush.msra.mxu0 %v3868
    %4755 = vmatpush.msra.mxu0 %v3860
    %4756 = vmatpush.msra.mxu0 %v3852
    %4757 = vmatpush.msra.mxu0 %v3844
    %4758 = vmatpush.msra.mxu0 %v3836
    %4759 = vmatpush.msra.mxu0 %v3828
    %4760 = vmatpush.msra.mxu0 %v3820
    %4761 = vmatmul.f32.gmra.mxu0 %v3811
    %v4762 = vpop.f32.mrf.mxu0
    %v4763 = vadd.f32 %v4334, %v4762
    %4764 = vdwg.mxu0
    %4765 = vmatpush.msra.mxu0 %v4068
    %4766 = vmatpush.msra.mxu0 %v4060
    %4767 = vmatpush.msra.mxu0 %v4052
    %4768 = vmatpush.msra.mxu0 %v4044
    %4769 = vmatpush.msra.mxu0 %v4036
    %4770 = vmatpush.msra.mxu0 %v4028
    %4771 = vmatpush.msra.mxu0 %v4020
    %4772 = vmatpush.msra.mxu0 %v4012
    %4773 = vmatpush.msra.mxu0 %v4004
    %4774 = vmatpush.msra.mxu0 %v3996
    %4775 = vmatpush.msra.mxu0 %v3988
    %4776 = vmatpush.msra.mxu0 %v3980
    %4777 = vmatpush.msra.mxu0 %v3972
    %4778 = vmatpush.msra.mxu0 %v3964
    %4779 = vmatpush.msra.mxu0 %v3956
    %4780 = vmatpush.msra.mxu0 %v3948
    %4781 = vmatmul.f32.gmra.mxu0 %v3812
    %v4782 = vpop.f32.mrf.mxu0
    %v4783 = vadd.f32 %v4763, %v4782
    %4784 = vdwg.mxu0
    %4785 = vmatpush.msra.mxu0 %v4196
    %4786 = vmatpush.msra.mxu0 %v4188
    %4787 = vmatpush.msra.mxu0 %v4180
    %4788 = vmatpush.msra.mxu0 %v4172
    %4789 = vmatpush.msra.mxu0 %v4164
    %4790 = vmatpush.msra.mxu0 %v4156
    %4791 = vmatpush.msra.mxu0 %v4148
    %4792 = vmatpush.msra.mxu0 %v4140
    %4793 = vmatpush.msra.mxu0 %v4132
    %4794 = vmatpush.msra.mxu0 %v4124
    %4795 = vmatpush.msra.mxu0 %v4116
    %4796 = vmatpush.msra.mxu0 %v4108
    %4797 = vmatpush.msra.mxu0 %v4100
    %4798 = vmatpush.msra.mxu0 %v4092
    %4799 = vmatpush.msra.mxu0 %v4084
    %4800 = vmatpush.msra.mxu0 %v4076
    %4801 = vmatmul.f32.gmra.mxu0 %v3813
    %v4802 = vpop.f32.mrf.mxu0
    %v4803 = vadd.f32 %v4783, %v4802
    %4804 = vdwg.mxu0
    %4805 = vmatpush.msra.mxu0 %v4324
    %4806 = vmatpush.msra.mxu0 %v4316
    %4807 = vmatpush.msra.mxu0 %v4308
    %4808 = vmatpush.msra.mxu0 %v4300
    %4809 = vmatpush.msra.mxu0 %v4292
    %4810 = vmatpush.msra.mxu0 %v4284
    %4811 = vmatpush.msra.mxu0 %v4276
    %4812 = vmatpush.msra.mxu0 %v4268
    %4813 = vmatpush.msra.mxu0 %v4260
    %4814 = vmatpush.msra.mxu0 %v4252
    %4815 = vmatpush.msra.mxu0 %v4244
    %4816 = vmatpush.msra.mxu0 %v4236
    %4817 = vmatpush.msra.mxu0 %v4228
    %4818 = vmatpush.msra.mxu0 %v4220
    %4819 = vmatpush.msra.mxu0 %v4212
    %4820 = vmatpush.msra.mxu0 %v4204
    %4821 = vmatmul.f32.gmra.mxu0 %v3814
    %v4822 = vpop.f32.mrf.mxu0
    %v4823 = vadd.f32 %v4803, %v4822
    %4824 = vdwg.mxu0
    %4825 = vmatpush.msra.mxu0 %v3941
    %4826 = vmatpush.msra.mxu0 %v3933
    %4827 = vmatpush.msra.mxu0 %v3925
    %4828 = vmatpush.msra.mxu0 %v3917
    %4829 = vmatpush.msra.mxu0 %v3909
    %4830 = vmatpush.msra.mxu0 %v3901
    %4831 = vmatpush.msra.mxu0 %v3893
    %4832 = vmatpush.msra.mxu0 %v3885
    %4833 = vmatpush.msra.mxu0 %v3877
    %4834 = vmatpush.msra.mxu0 %v3869
    %4835 = vmatpush.msra.mxu0 %v3861
    %4836 = vmatpush.msra.mxu0 %v3853
    %4837 = vmatpush.msra.mxu0 %v3845
    %4838 = vmatpush.msra.mxu0 %v3837
    %4839 = vmatpush.msra.mxu0 %v3829
    %4840 = vmatpush.msra.mxu0 %v3821
    %4841 = vmatmul.f32.gmra.mxu0 %v3811
    %v4842 = vpop.f32.mrf.mxu0
    %v4843 = vadd.f32 %v4335, %v4842
    %4844 = vdwg.mxu0
    %4845 = vmatpush.msra.mxu0 %v4069
    %4846 = vmatpush.msra.mxu0 %v4061
    %4847 = vmatpush.msra.mxu0 %v4053
    %4848 = vmatpush.msra.mxu0 %v4045
    %4849 = vmatpush.msra.mxu0 %v4037
    %4850 = vmatpush.msra.mxu0 %v4029
    %4851 = vmatpush.msra.mxu0 %v4021
    %4852 = vmatpush.msra.mxu0 %v4013
    %4853 = vmatpush.msra.mxu0 %v4005
    %4854 = vmatpush.msra.mxu0 %v3997
    %4855 = vmatpush.msra.mxu0 %v3989
    %4856 = vmatpush.msra.mxu0 %v3981
    %4857 = vmatpush.msra.mxu0 %v3973
    %4858 = vmatpush.msra.mxu0 %v3965
    %4859 = vmatpush.msra.mxu0 %v3957
    %4860 = vmatpush.msra.mxu0 %v3949
    %4861 = vmatmul.f32.gmra.mxu0 %v3812
    %v4862 = vpop.f32.mrf.mxu0
    %v4863 = vadd.f32 %v4843, %v4862
    %4864 = vdwg.mxu0
    %4865 = vmatpush.msra.mxu0 %v4197
    %4866 = vmatpush.msra.mxu0 %v4189
    %4867 = vmatpush.msra.mxu0 %v4181
    %4868 = vmatpush.msra.mxu0 %v4173
    %4869 = vmatpush.msra.mxu0 %v4165
    %4870 = vmatpush.msra.mxu0 %v4157
    %4871 = vmatpush.msra.mxu0 %v4149
    %4872 = vmatpush.msra.mxu0 %v4141
    %4873 = vmatpush.msra.mxu0 %v4133
    %4874 = vmatpush.msra.mxu0 %v4125
    %4875 = vmatpush.msra.mxu0 %v4117
    %4876 = vmatpush.msra.mxu0 %v4109
    %4877 = vmatpush.msra.mxu0 %v4101
    %4878 = vmatpush.msra.mxu0 %v4093
    %4879 = vmatpush.msra.mxu0 %v4085
    %4880 = vmatpush.msra.mxu0 %v4077
    %4881 = vmatmul.f32.gmra.mxu0 %v3813
    %v4882 = vpop.f32.mrf.mxu0
    %v4883 = vadd.f32 %v4863, %v4882
    %4884 = vdwg.mxu0
    %4885 = vmatpush.msra.mxu0 %v4325
    %4886 = vmatpush.msra.mxu0 %v4317
    %4887 = vmatpush.msra.mxu0 %v4309
    %4888 = vmatpush.msra.mxu0 %v4301
    %4889 = vmatpush.msra.mxu0 %v4293
    %4890 = vmatpush.msra.mxu0 %v4285
    %4891 = vmatpush.msra.mxu0 %v4277
    %4892 = vmatpush.msra.mxu0 %v4269
    %4893 = vmatpush.msra.mxu0 %v4261
    %4894 = vmatpush.msra.mxu0 %v4253
    %4895 = vmatpush.msra.mxu0 %v4245
    %4896 = vmatpush.msra.mxu0 %v4237
    %4897 = vmatpush.msra.mxu0 %v4229
    %4898 = vmatpush.msra.mxu0 %v4221
    %4899 = vmatpush.msra.mxu0 %v4213
    %4900 = vmatpush.msra.mxu0 %v4205
    %4901 = vmatmul.f32.gmra.mxu0 %v3814
    %v4902 = vpop.f32.mrf.mxu0
    %v4903 = vadd.f32 %v4883, %v4902
    %4904 = vdwg.mxu0
    %4905 = vmatpush.msra.mxu0 %v3942
    %4906 = vmatpush.msra.mxu0 %v3934
    %4907 = vmatpush.msra.mxu0 %v3926
    %4908 = vmatpush.msra.mxu0 %v3918
    %4909 = vmatpush.msra.mxu0 %v3910
    %4910 = vmatpush.msra.mxu0 %v3902
    %4911 = vmatpush.msra.mxu0 %v3894
    %4912 = vmatpush.msra.mxu0 %v3886
    %4913 = vmatpush.msra.mxu0 %v3878
    %4914 = vmatpush.msra.mxu0 %v3870
    %4915 = vmatpush.msra.mxu0 %v3862
    %4916 = vmatpush.msra.mxu0 %v3854
    %4917 = vmatpush.msra.mxu0 %v3846
    %4918 = vmatpush.msra.mxu0 %v3838
    %4919 = vmatpush.msra.mxu0 %v3830
    %4920 = vmatpush.msra.mxu0 %v3822
    %4921 = vmatmul.f32.gmra.mxu0 %v3811
    %v4922 = vpop.f32.mrf.mxu0
    %v4923 = vadd.f32 %v4336, %v4922
    %4924 = vdwg.mxu0
    %4925 = vmatpush.msra.mxu0 %v4070
    %4926 = vmatpush.msra.mxu0 %v4062
    %4927 = vmatpush.msra.mxu0 %v4054
    %4928 = vmatpush.msra.mxu0 %v4046
    %4929 = vmatpush.msra.mxu0 %v4038
    %4930 = vmatpush.msra.mxu0 %v4030
    %4931 = vmatpush.msra.mxu0 %v4022
    %4932 = vmatpush.msra.mxu0 %v4014
    %4933 = vmatpush.msra.mxu0 %v4006
    %4934 = vmatpush.msra.mxu0 %v3998
    %4935 = vmatpush.msra.mxu0 %v3990
    %4936 = vmatpush.msra.mxu0 %v3982
    %4937 = vmatpush.msra.mxu0 %v3974
    %4938 = vmatpush.msra.mxu0 %v3966
    %4939 = vmatpush.msra.mxu0 %v3958
    %4940 = vmatpush.msra.mxu0 %v3950
    %4941 = vmatmul.f32.gmra.mxu0 %v3812
    %v4942 = vpop.f32.mrf.mxu0
    %v4943 = vadd.f32 %v4923, %v4942
    %4944 = vdwg.mxu0
    %4945 = vmatpush.msra.mxu0 %v4198
    %4946 = vmatpush.msra.mxu0 %v4190
    %4947 = vmatpush.msra.mxu0 %v4182
    %4948 = vmatpush.msra.mxu0 %v4174
    %4949 = vmatpush.msra.mxu0 %v4166
    %4950 = vmatpush.msra.mxu0 %v4158
    %4951 = vmatpush.msra.mxu0 %v4150
    %4952 = vmatpush.msra.mxu0 %v4142
    %4953 = vmatpush.msra.mxu0 %v4134
    %4954 = vmatpush.msra.mxu0 %v4126
    %4955 = vmatpush.msra.mxu0 %v4118
    %4956 = vmatpush.msra.mxu0 %v4110
    %4957 = vmatpush.msra.mxu0 %v4102
    %4958 = vmatpush.msra.mxu0 %v4094
    %4959 = vmatpush.msra.mxu0 %v4086
    %4960 = vmatpush.msra.mxu0 %v4078
    %4961 = vmatmul.f32.gmra.mxu0 %v3813
    %v4962 = vpop.f32.mrf.mxu0
    %v4963 = vadd.f32 %v4943, %v4962
    %4964 = vdwg.mxu0
    %4965 = vmatpush.msra.mxu0 %v4326
    %4966 = vmatpush.msra.mxu0 %v4318
    %4967 = vmatpush.msra.mxu0 %v4310
    %4968 = vmatpush.msra.mxu0 %v4302
    %4969 = vmatpush.msra.mxu0 %v4294
    %4970 = vmatpush.msra.mxu0 %v4286
    %4971 = vmatpush.msra.mxu0 %v4278
    %4972 = vmatpush.msra.mxu0 %v4270
    %4973 = vmatpush.msra.mxu0 %v4262
    %4974 = vmatpush.msra.mxu0 %v4254
    %4975 = vmatpush.msra.mxu0 %v4246
    %4976 = vmatpush.msra.mxu0 %v4238
    %4977 = vmatpush.msra.mxu0 %v4230
    %4978 = vmatpush.msra.mxu0 %v4222
    %4979 = vmatpush.msra.mxu0 %v4214
    %4980 = vmatpush.msra.mxu0 %v4206
    %4981 = vmatmul.f32.gmra.mxu0 %v3814
    %v4982 = vpop.f32.mrf.mxu0
    %v4983 = vadd.f32 %v4963, %v4982
    %4984 = vdwg.mxu0
    %v4985 = vtanh.pop %v4423
    %v4986 = vtanh.pop %v4503
    %v4987 = vtanh.pop %v4583
    %v4988 = vtanh.pop %v4663
    %v4989 = vtanh.pop %v4743
    %v4990 = vtanh.pop %v4823
    %v4991 = vtanh.pop %v4903
    %v4992 = vtanh.pop %v4983
    %v5001 = vrot.slane %v4986, 6
    %v5002 = vrot.slane %v4987, 4
    %v5003 = vrot.slane %v4988, 2
    %v5004 = vrot.slane %v4990, 6
    %v5005 = vrot.slane %v4991, 4
    %v5006 = vrot.slane %v4992, 2
    %v5007 = vsel %vm1546, %v4985, %v5001
    %vm5008 = vcmask 1045508
    %v5009 = vsel %vm5008, %v5002, %v5003
    %vm5010 = vcmask 1043456
    %v5011 = vsel %vm5010, %v5007, %v5009
    %v5012 = vsel %vm1546, %v4989, %v5004
    %v5013 = vsel %vm5008, %v5005, %v5006
    %v5014 = vsel %vm5010, %v5012, %v5013
    %5017 = vst [vmem:[%s26] sm:$0xff] %v5011
    %5018 = vst [vmem:[%s26 + $0x8] sm:$0xff] %v5014
    // Predicated region
    $region186: #{forward.1} parent=1 // pred_check
      _
    $region187: #{forward.1} parent=1 // pred_check_branch
      %5020 = sbr.rel (0) target = $region189
    $region188: #{forward.1} parent=1 // pred_region
      _
    $region189: #{forward.1} parent=1 // pred_fallthru
      _
    // Predicated region
    $region190: #{forward.1} parent=1 // pred_check
      _
    $region191: #{forward.1} parent=1 // pred_check_branch
      %5022 = sbr.rel (0) target = $region193
    $region192: #{forward.1} parent=1 // pred_region
      %5024 = vsyncadd [#allocation4], 0
      %s5026 = sshll.u32 [#allocation34], 4
      %s5027 = int_to_ptr.vmem [resolvable:$true] %s5026
      %s5028 = sshll.u32 %s27, 4
      %s5029 = int_to_ptr.hbm [resolvable:$true] %s5028
      %5031 = dma.vmem_to_hbm [thread:$0]  %s5027, 32, %s5029, [#allocation4]
    $region193: #{forward.1} parent=1 // pred_fallthru
      _
    // Predicated region
    $region194: #{forward.1} parent=1 // pred_check
      _
    $region195: #{forward.1} parent=1 // pred_check_branch
      %5033 = sbr.rel (0) target = $region197
    $region196: #{forward.1} parent=1 // pred_region
      %5035 = vsyncadd [#allocation36], 0
      %s5037 = sshll.u32 [#allocation35], 4
      %s5038 = int_to_ptr.vmem [resolvable:$true] %s5037
      %s5039 = sshll.u32 %s28, 4
      %s5040 = int_to_ptr.hbm [resolvable:$true] %s5039
      %5042 = dma.vmem_to_hbm [thread:$0]  %s5038, 32, %s5040, [#allocation36]
    $region197: #{forward.1} parent=1 // pred_fallthru
      _
    // Predicated region
    $region198: #{forward.1} parent=1 // pred_check
      _
    $region199: #{forward.1} parent=1 // pred_check_branch
      %5044 = sbr.rel (0) target = $region201
    $region200: #{forward.1} parent=1 // pred_region
      _
    $region201: #{forward.1} parent=1 // pred_fallthru
      _
    // Predicated region
    $region202: #{forward.1} parent=1 // pred_check
      _
    $region203: #{forward.1} parent=1 // pred_check_branch
      %5046 = sbr.rel (0) target = $region205
    $region204: #{forward.1} parent=1 // pred_region
      %5048 = dma.done [#allocation4], 32
    $region205: #{forward.1} parent=1 // pred_fallthru
      _
    // Predicated region
    $region206: #{forward.1} parent=1 // pred_check
      _
    $region207: #{forward.1} parent=1 // pred_check_branch
      %5050 = sbr.rel (0) target = $region209
    $region208: #{forward.1} parent=1 // pred_region
      %5052 = dma.done [#allocation36], 32
    $region209: #{forward.1} parent=1 // pred_fallthru
      _
    %5053 = vsyncpa [#allocation3], 1
    %5054 = vsyncpa [#allocation6], 1
    %5055 = vsyncpa [#allocation9], 1
    %5056 = vsyncpa [#allocation12], 1
    %5057 = vsyncpa [#allocation15], 1
    %5058 = vsyncpa [#allocation18], 1
    %5059 = vsyncpa [#allocation21], 1
    %5060 = vsyncpa [#allocation24], 1
    %5061 = vsyncpa [#allocation27], 1
    %5062 = vsyncpa [#allocation30], 1
    %5063 = vsyncpa [#allocation33], 1
    %5064 = vsyncpa [#allocation4], 1
    %5065 = vsyncpa [#allocation36], 1

</llo_original>
